<compile_context>
chip_gen: v7x
topology: tpu7x:2x2x1
jax: 0.10.0
libtpu: 0.0.40
codegen_flags: <defaults>
</compile_context>

<pallas_src>
import functools

import jax
import jax.numpy as jnp
from jax.experimental import pallas as pl
from jax.experimental.pallas import tpu as pltpu

_LANE = 128


def _round_up(x, m):
    return (x + m - 1) // m * m


def _pick_row_tile(ho, wo, max_m=512):
    """Largest divisor of `ho` with TH * wo <= max_m (bounds the f32 accumulator and the
    double-buffered output block to a few hundred KB -> safe on v7x's 64 MiB VMEM)."""
    cap = max(1, max_m // max(wo, 1))
    best = 1
    for d in range(1, ho + 1):
        if ho % d == 0 and d <= cap:
            best = d
    return best


def _vmem_capacity_bytes():
    try:
        return int(pltpu.get_tpu_info().vmem_capacity_bytes)
    except Exception:
        return 64 * 1024 * 1024            # conservative default: v7x per-core VMEM


def _vmem_limit_bytes(block_bytes):
    cap = _vmem_capacity_bytes()
    return int(min(cap - 8 * 1024 * 1024, max(4 * block_bytes, 32 * 1024 * 1024)))


def _space_to_phases(x, s):
    """(N, Hp, Wp, C) -> (N, s*s, ceil(Hp/s), ceil(Wp/s), C).

    Phase t = ph*s + pw holds x[:, hq*s + ph, wq*s + pw, :], so a stride-s conv tap becomes
    a dense (unit-stride) slice inside the kernel instead of a strided sublane gather."""
    n, hp, wp, c = x.shape
    hq = -(-hp // s)
    wq = -(-wp // s)
    x = jnp.pad(x, ((0, 0), (0, hq * s - hp), (0, wq * s - wp), (0, 0)))
    x = x.reshape(n, hq, s, wq, s, c).transpose(0, 2, 4, 1, 3, 5)
    return x.reshape(n, s * s, hq, wq, c)


# ---------------------------------------------------------------------------
# Kernels   (grid = (N, Cout_tiles, H_tiles) -> hi is program_id(2))
# ---------------------------------------------------------------------------

def _dense_conv_kernel(x_ref, w_ref, scale_ref, bias_ref, o_ref, *,
                       KH, KW, stride, TH, Wo):
    # x_ref:     (1, s*s, Hq, Wq, Cin)  bf16 phase-split zero-padded input (one batch elem)
    # w_ref:     (KH, KW, Cin, TC)      bf16
    # scale_ref: (1, TC) f32,  bias_ref: (1, TC) f32   (folded BatchNorm)
    # o_ref:     (1, TH, Wo, TC)        f32
    hi = pl.program_id(2)
    s = stride
    cin = x_ref.shape[-1]
    tc = o_ref.shape[-1]

    acc = jnp.zeros((TH * Wo, tc), jnp.float32)
    for kh in range(KH):
        ph, qh = kh % s, kh // s
        for kw in range(KW):
            pw, qw = kw % s, kw // s
            patch = x_ref[0, ph * s + pw,
                          pl.ds(hi * TH + qh, TH), pl.ds(qw, Wo), :]      # (TH, Wo, Cin)
            # TODO(synk): for generic kxk convs with small Cin, concatenating all KH*KW
            # taps into one (TH*Wo, KH*KW*Cin) im2col patch would further raise the MXU
            # contraction dim; MobileNet's dense convs are 1x1 so K == Cin already here.
            acc = acc + jnp.dot(patch.reshape(TH * Wo, cin), w_ref[kh, kw],
                                preferred_element_type=jnp.float32)

    y = acc * scale_ref[...] + bias_ref[...]          # fused BN (inference) ...
    y = jnp.clip(y, 0.0, 6.0)                         # ... + ReLU6
    o_ref[0] = y.reshape(TH, Wo, tc).astype(o_ref.dtype)


def _depthwise_conv_kernel(x_ref, w_ref, scale_ref, bias_ref, o_ref, *,
                           KH, KW, stride, TH, Wo):
    # Depthwise conv: VPU multiply-accumulate (MXU K=1 matmuls would be wasted).
    # x_ref:     (1, s*s, Hq, Wq, TC)  bf16 (channel tile)
    # w_ref:     (KH*KW, 1, TC)        bf16
    # scale_ref: (1, TC) f32,  bias_ref: (1, TC) f32
    # o_ref:     (1, TH, Wo, TC)       f32
    hi = pl.program_id(2)
    s = stride
    tc = o_ref.shape[-1]

    acc = jnp.zeros((TH, Wo, tc), jnp.float32)
    for kh in range(KH):
        ph, qh = kh % s, kh // s
        for kw in range(KW):
            pw, qw = kw % s, kw // s
            patch = x_ref[0, ph * s + pw,
                          pl.ds(hi * TH + qh, TH), pl.ds(qw, Wo), :]      # (TH, Wo, TC)
            wt = w_ref[kh * KW + kw]                                      # (1, TC)
            acc = acc + patch.astype(jnp.float32) * wt.astype(jnp.float32)

    y = acc * scale_ref[...] + bias_ref[...]
    o_ref[0] = jnp.clip(y, 0.0, 6.0).astype(o_ref.dtype)


# ---------------------------------------------------------------------------
# pallas_call wrappers
# ---------------------------------------------------------------------------

def _run_dense(x_ph, w_hwio_p, scale_p, bias_p, *, KH, KW, stride, Ho, Wo, TH, TC):
    N, PH, Hq, Wq, Cin = x_ph.shape
    Cout_p = w_hwio_p.shape[-1]
    # Grid ordered (N, ci, hi): the weight / scale / bias blocks are constant across the
    # innermost hi axis -> they stay VMEM-resident instead of being re-DMA'd per row tile.
    grid = (N, Cout_p // TC, Ho // TH)
    block_bytes = (2 * PH * Hq * Wq * Cin * 2          # double-buffered bf16 input block
                   + 2 * KH * KW * Cin * TC * 2        # bf16 weight block
                   + 2 * TH * Wo * TC * 4              # f32 output block
                   + 4 * TC * 4)                       # scale / bias
    kernel = functools.partial(_dense_conv_kernel, KH=KH, KW=KW, stride=stride,
                               TH=TH, Wo=Wo)
    return pl.pallas_call(
        kernel,
        out_shape=jax.ShapeDtypeStruct((N, Ho, Wo, Cout_p), jnp.float32),
        grid_spec=pltpu.PrefetchScalarGridSpec(
            num_scalar_prefetch=0,
            grid=grid,
            in_specs=[
                pl.BlockSpec((1, PH, Hq, Wq, Cin), lambda n, ci, hi: (n, 0, 0, 0, 0)),
                pl.BlockSpec((KH, KW, Cin, TC), lambda n, ci, hi: (0, 0, 0, ci)),
                pl.BlockSpec((1, TC), lambda n, ci, hi: (0, ci)),
                pl.BlockSpec((1, TC), lambda n, ci, hi: (0, ci)),
            ],
            out_specs=pl.BlockSpec((1, TH, Wo, TC), lambda n, ci, hi: (n, hi, 0, ci)),
        ),
        compiler_params=pltpu.CompilerParams(
            dimension_semantics=("parallel", "parallel", "parallel"),
            vmem_limit_bytes=_vmem_limit_bytes(block_bytes)),
    )(x_ph, w_hwio_p, scale_p, bias_p)


def _run_depthwise(x_ph, w_dw, scale_p, bias_p, *, KH, KW, stride, Ho, Wo, TH, TC):
    N, PH, Hq, Wq, Cp = x_ph.shape
    # Grid ordered (N, ci, hi): the channel-tiled input block only changes when ci does,
    # so it is fetched once per channel tile per image rather than once per (hi, ci).
    grid = (N, Cp // TC, Ho // TH)
    block_bytes = (2 * PH * Hq * Wq * TC * 2
                   + 2 * KH * KW * TC * 2
                   + 2 * TH * Wo * TC * 4
                   + 4 * TC * 4)
    kernel = functools.partial(_depthwise_conv_kernel, KH=KH, KW=KW, stride=stride,
                               TH=TH, Wo=Wo)
    return pl.pallas_call(
        kernel,
        out_shape=jax.ShapeDtypeStruct((N, Ho, Wo, Cp), jnp.float32),
        grid_spec=pltpu.PrefetchScalarGridSpec(
            num_scalar_prefetch=0,
            grid=grid,
            in_specs=[
                pl.BlockSpec((1, PH, Hq, Wq, TC), lambda n, ci, hi: (n, 0, 0, 0, ci)),
                pl.BlockSpec((KH * KW, 1, TC), lambda n, ci, hi: (0, 0, ci)),
                pl.BlockSpec((1, TC), lambda n, ci, hi: (0, ci)),
                pl.BlockSpec((1, TC), lambda n, ci, hi: (0, ci)),
            ],
            out_specs=pl.BlockSpec((1, TH, Wo, TC), lambda n, ci, hi: (n, hi, 0, ci)),
        ),
        compiler_params=pltpu.CompilerParams(
            dimension_semantics=("parallel", "parallel", "parallel"),
            vmem_limit_bytes=_vmem_limit_bytes(block_bytes)),
    )(x_ph, w_dw, scale_p, bias_p)


# ---------------------------------------------------------------------------
# Public forward (matches Conv2dNormActivation.forward)
# ---------------------------------------------------------------------------

def conv2d_norm_activation(x_nchw, weight, gamma, beta, running_mean, running_var,
                           *, stride, padding, groups=1, eps=1e-5):
    """x_nchw: (N, Cin, H, W).  weight: (Cout, Cin//groups, KH, KW)  (PyTorch layout)."""
    N, Cin, H, W = x_nchw.shape
    Cout, cin_g, KH, KW = weight.shape
    Ho = (H + 2 * padding - KH) // stride + 1
    Wo = (W + 2 * padding - KW) // stride + 1

    # BatchNorm (inference): fold running stats into per-channel scale/bias, kept in f32.
    scale = gamma.astype(jnp.float32) / jnp.sqrt(running_var.astype(jnp.float32) + eps)
    bias = beta.astype(jnp.float32) - running_mean.astype(jnp.float32) * scale

    # NCHW -> NHWC (channels on the lane axis), bf16 compute precision for the MXU/VPU.
    x_nhwc = jnp.transpose(x_nchw, (0, 2, 3, 1)).astype(jnp.bfloat16)

    TH = _pick_row_tile(Ho, Wo)
    depthwise = (groups == Cin) and (Cout == Cin) and (cin_g == 1)

    if depthwise:
        Cp = _round_up(Cout, _LANE)
        TC = 2 * _LANE if Cp % (2 * _LANE) == 0 else _LANE
        x_pad = jnp.pad(x_nhwc, ((0, 0), (padding, padding), (padding, padding),
                                 (0, Cp - Cin)))
        x_ph = _space_to_phases(x_pad, stride)
        w_dw = jnp.transpose(weight[:, 0, :, :], (1, 2, 0)).reshape(KH * KW, 1, Cout)
        w_dw = jnp.pad(w_dw, ((0, 0), (0, 0), (0, Cp - Cout))).astype(jnp.bfloat16)
        scale_p = jnp.pad(scale, (0, Cp - Cout)).reshape(1, Cp)
        bias_p = jnp.pad(bias, (0, Cp - Cout)).reshape(1, Cp)
        out_p = _run_depthwise(x_ph, w_dw, scale_p, bias_p, KH=KH, KW=KW,
                               stride=stride, Ho=Ho, Wo=Wo, TH=TH, TC=TC)
    else:
        Cout_p = _round_up(Cout, _LANE)
        TC = 2 * _LANE if Cout_p % (2 * _LANE) == 0 else _LANE
        x_pad = jnp.pad(x_nhwc, ((0, 0), (padding, padding), (padding, padding), (0, 0)))
        x_ph = _space_to_phases(x_pad, stride)
        if groups == 1:
            w_hwio = jnp.transpose(weight, (2, 3, 1, 0))           # (KH, KW, Cin, Cout)
        else:
            # TODO(synk): generic grouped convs use a block-diagonal dense weight
            # (correct but MXU-wasteful); a per-group grid axis would be better.
            cout_g = Cout // groups
            w_hwio = jnp.zeros((KH, KW, Cin, Cout), weight.dtype)
            for g in range(groups):
                blk = jnp.transpose(weight[g * cout_g:(g + 1) * cout_g], (2, 3, 1, 0))
                w_hwio = w_hwio.at[:, :, g * cin_g:(g + 1) * cin_g,
                                   g * cout_g:(g + 1) * cout_g].set(blk)
        w_hwio = jnp.pad(w_hwio, ((0, 0), (0, 0), (0, 0),
                                  (0, Cout_p - Cout))).astype(jnp.bfloat16)
        scale_p = jnp.pad(scale, (0, Cout_p - Cout)).reshape(1, Cout_p)
        bias_p = jnp.pad(bias, (0, Cout_p - Cout)).reshape(1, Cout_p)
        out_p = _run_dense(x_ph, w_hwio, scale_p, bias_p, KH=KH, KW=KW,
                           stride=stride, Ho=Ho, Wo=Wo, TH=TH, TC=TC)

    # strip channel padding, return in PyTorch NCHW layout.
    return jnp.transpose(out_p[..., :Cout], (0, 3, 1, 2))


def _reference(x_nchw, weight, gamma, beta, running_mean, running_var,
               *, stride, padding, groups, eps=1e-5):
    y = jax.lax.conv_general_dilated(
        x_nchw.astype(jnp.float32), weight.astype(jnp.float32),
        window_strides=(stride, stride),
        padding=((padding, padding), (padding, padding)),
        dimension_numbers=("NCHW", "OIHW", "NCHW"),
        feature_group_count=groups)
    scale = gamma / jnp.sqrt(running_var + eps)
    bias = beta - running_mean * scale
    y = y * scale[None, :, None, None] + bias[None, :, None, None]
    return jnp.clip(y, 0.0, 6.0)


if __name__ == "__main__":
    key = jax.random.PRNGKey(0)

    def make_params(k, cin, cout, ksize, groups):
        kw, kg, kb, km, kv = jax.random.split(k, 5)
        weight = jax.random.normal(kw, (cout, cin // groups, ksize, ksize),
                                   jnp.float32) * 0.1
        gamma = 1.0 + 0.1 * jax.random.normal(kg, (cout,), jnp.float32)
        beta = 0.1 * jax.random.normal(kb, (cout,), jnp.float32)
        mean = 0.1 * jax.random.normal(km, (cout,), jnp.float32)
        var = jnp.abs(1.0 + 0.1 * jax.random.normal(kv, (cout,), jnp.float32))
        return weight, gamma, beta, mean, var

    configs = [
        # (name,          N, Cin, Cout, H,  W,  k, stride, pad, groups)
        ("dense_s1",      2, 4,   8,    16, 16, 3, 1,      1,   1),   # spec config
        ("dense_s2",      2, 4,   8,    16, 16, 3, 2,      1,   1),   # strided (phase-split)
        ("depthwise_s1",  2, 8,   8,    16, 16, 3, 1,      1,   8),   # depthwise (VPU path)
        ("depthwise_s2",  2, 8,   8,    16, 16, 3, 2,      1,   8),   # strided depthwise
        ("pointwise",     2, 8,   16,   16, 16, 1, 1,      0,   1),   # MobileNet 1x1 conv
    ]

    for i, (name, N, cin, cout, H, W, k, s, p, g) in enumerate(configs):
        kcfg = jax.random.fold_in(key, i)
        kx, kp = jax.random.split(kcfg)
        x = jax.random.normal(kx, (N, cin, H, W), jnp.float32)
        weight, gamma, beta, mean, var = make_params(kp, cin, cout, k, g)

        fn = jax.jit(functools.partial(conv2d_norm_activation,
                                       stride=s, padding=p, groups=g))
        out = jax.block_until_ready(fn(x, weight, gamma, beta, mean, var))
        ref = _reference(x, weight, gamma, beta, mean, var,
                         stride=s, padding=p, groups=g)
        assert out.shape == ref.shape, (name, out.shape, ref.shape)
        assert jnp.allclose(out, ref, rtol=5e-2, atol=5e-2), name

    print("KERNEL_OK")
</pallas_src>

<mosaic_0001>
module attributes {stable_mosaic.version = 11 : i64} {
  func.func @_dense_conv_kernel(%arg0: i32, %arg1: i32, %arg2: i32, %arg3: memref<1x1x18x18x4xbf16, #tpu.memory_space<vmem>>, %arg4: memref<3x3x4x128xbf16, #tpu.memory_space<vmem>>, %arg5: memref<1x128xf32, #tpu.memory_space<vmem>>, %arg6: memref<1x128xf32, #tpu.memory_space<vmem>>, %arg7: memref<1x16x16x128xf32, #tpu.memory_space<vmem>>) attributes {dimension_semantics = [#tpu.dimension_semantics<parallel>, #tpu.dimension_semantics<parallel>, #tpu.dimension_semantics<parallel>], iteration_bounds = array<i64: 2, 1, 1>, scalar_prefetch = 0 : i64, scratch_operands = 0 : i64, tpu.core_type = #tpu.core_type<tc>, window_params = [{transform_indices = @transform_0, window_bounds = array<i64: 1, 1, 18, 18, 4>}, {transform_indices = @transform_1, window_bounds = array<i64: 3, 3, 4, 128>}, {transform_indices = @transform_2, window_bounds = array<i64: 1, 128>}, {transform_indices = @transform_3, window_bounds = array<i64: 1, 128>}, {transform_indices = @transform_4, window_bounds = array<i64: 1, 16, 16, 128>}]} {
    %cst = arith.constant 0.000000e+00 : f32
    %0 = vector.broadcast %cst : f32 to vector<256x128xf32>
    %c16_i32 = arith.constant 16 : i32
    %1 = arith.muli %arg2, %c16_i32 : i32
    %c0_i32 = arith.constant 0 : i32
    %2 = arith.addi %1, %c0_i32 : i32
    %c0 = arith.constant 0 : index
    %c0_0 = arith.constant 0 : index
    %3 = arith.index_cast %2 : i32 to index
    %c0_1 = arith.constant 0 : index
    %c0_2 = arith.constant 0 : index
    %4 = vector.load %arg3[%c0, %c0_0, %3, %c0_1, %c0_2] : memref<1x1x18x18x4xbf16, #tpu.memory_space<vmem>>, vector<1x1x16x16x4xbf16>
    %5 = vector.shape_cast %4 : vector<1x1x16x16x4xbf16> to vector<16x16x4xbf16>
    %6 = vector.shape_cast %5 : vector<16x16x4xbf16> to vector<256x4xbf16>
    %c0_3 = arith.constant 0 : index
    %c0_4 = arith.constant 0 : index
    %c0_5 = arith.constant 0 : index
    %c0_6 = arith.constant 0 : index
    %7 = vector.load %arg4[%c0_3, %c0_4, %c0_5, %c0_6] : memref<3x3x4x128xbf16, #tpu.memory_space<vmem>>, vector<1x1x4x128xbf16>
    %8 = vector.shape_cast %7 : vector<1x1x4x128xbf16> to vector<4x128xbf16>
    %cst_7 = arith.constant dense<0.000000e+00> : vector<256x128xf32>
    %9 = tpu.matmul %6, %8, %cst_7 {dimension_numbers = #tpu.dot_dimension_numbers<[1], [0], [0], [1], [0, 0, 1, 1], [], []>} : vector<256x4xbf16>, vector<4x128xbf16>, vector<256x128xf32> -> vector<256x128xf32>
    %10 = arith.addf %0, %9 : vector<256x128xf32>
    %c16_i32_8 = arith.constant 16 : i32
    %11 = arith.muli %arg2, %c16_i32_8 : i32
    %c0_i32_9 = arith.constant 0 : i32
    %12 = arith.addi %11, %c0_i32_9 : i32
    %c0_10 = arith.constant 0 : index
    %c0_11 = arith.constant 0 : index
    %13 = arith.index_cast %12 : i32 to index
    %c1 = arith.constant 1 : index
    %c0_12 = arith.constant 0 : index
    %14 = vector.load %arg3[%c0_10, %c0_11, %13, %c1, %c0_12] : memref<1x1x18x18x4xbf16, #tpu.memory_space<vmem>>, vector<1x1x16x16x4xbf16>
    %15 = vector.shape_cast %14 : vector<1x1x16x16x4xbf16> to vector<16x16x4xbf16>
    %16 = vector.shape_cast %15 : vector<16x16x4xbf16> to vector<256x4xbf16>
    %c0_13 = arith.constant 0 : index
    %c1_14 = arith.constant 1 : index
    %c0_15 = arith.constant 0 : index
    %c0_16 = arith.constant 0 : index
    %17 = vector.load %arg4[%c0_13, %c1_14, %c0_15, %c0_16] : memref<3x3x4x128xbf16, #tpu.memory_space<vmem>>, vector<1x1x4x128xbf16>
    %18 = vector.shape_cast %17 : vector<1x1x4x128xbf16> to vector<4x128xbf16>
    %cst_17 = arith.constant dense<0.000000e+00> : vector<256x128xf32>
    %19 = tpu.matmul %16, %18, %cst_17 {dimension_numbers = #tpu.dot_dimension_numbers<[1], [0], [0], [1], [0, 0, 1, 1], [], []>} : vector<256x4xbf16>, vector<4x128xbf16>, vector<256x128xf32> -> vector<256x128xf32>
    %20 = arith.addf %10, %19 : vector<256x128xf32>
    %c16_i32_18 = arith.constant 16 : i32
    %21 = arith.muli %arg2, %c16_i32_18 : i32
    %c0_i32_19 = arith.constant 0 : i32
    %22 = arith.addi %21, %c0_i32_19 : i32
    %c0_20 = arith.constant 0 : index
    %c0_21 = arith.constant 0 : index
    %23 = arith.index_cast %22 : i32 to index
    %c2 = arith.constant 2 : index
    %c0_22 = arith.constant 0 : index
    %24 = vector.load %arg3[%c0_20, %c0_21, %23, %c2, %c0_22] : memref<1x1x18x18x4xbf16, #tpu.memory_space<vmem>>, vector<1x1x16x16x4xbf16>
    %25 = vector.shape_cast %24 : vector<1x1x16x16x4xbf16> to vector<16x16x4xbf16>
    %26 = vector.shape_cast %25 : vector<16x16x4xbf16> to vector<256x4xbf16>
    %c0_23 = arith.constant 0 : index
    %c2_24 = arith.constant 2 : index
    %c0_25 = arith.constant 0 : index
    %c0_26 = arith.constant 0 : index
    %27 = vector.load %arg4[%c0_23, %c2_24, %c0_25, %c0_26] : memref<3x3x4x128xbf16, #tpu.memory_space<vmem>>, vector<1x1x4x128xbf16>
    %28 = vector.shape_cast %27 : vector<1x1x4x128xbf16> to vector<4x128xbf16>
    %cst_27 = arith.constant dense<0.000000e+00> : vector<256x128xf32>
    %29 = tpu.matmul %26, %28, %cst_27 {dimension_numbers = #tpu.dot_dimension_numbers<[1], [0], [0], [1], [0, 0, 1, 1], [], []>} : vector<256x4xbf16>, vector<4x128xbf16>, vector<256x128xf32> -> vector<256x128xf32>
    %30 = arith.addf %20, %29 : vector<256x128xf32>
    %c16_i32_28 = arith.constant 16 : i32
    %31 = arith.muli %arg2, %c16_i32_28 : i32
    %c1_i32 = arith.constant 1 : i32
    %32 = arith.addi %31, %c1_i32 : i32
    %c0_29 = arith.constant 0 : index
    %c0_30 = arith.constant 0 : index
    %33 = arith.index_cast %32 : i32 to index
    %c0_31 = arith.constant 0 : index
    %c0_32 = arith.constant 0 : index
    %34 = vector.load %arg3[%c0_29, %c0_30, %33, %c0_31, %c0_32] : memref<1x1x18x18x4xbf16, #tpu.memory_space<vmem>>, vector<1x1x16x16x4xbf16>
    %35 = vector.shape_cast %34 : vector<1x1x16x16x4xbf16> to vector<16x16x4xbf16>
    %36 = vector.shape_cast %35 : vector<16x16x4xbf16> to vector<256x4xbf16>
    %c1_33 = arith.constant 1 : index
    %c0_34 = arith.constant 0 : index
    %c0_35 = arith.constant 0 : index
    %c0_36 = arith.constant 0 : index
    %37 = vector.load %arg4[%c1_33, %c0_34, %c0_35, %c0_36] : memref<3x3x4x128xbf16, #tpu.memory_space<vmem>>, vector<1x1x4x128xbf16>
    %38 = vector.shape_cast %37 : vector<1x1x4x128xbf16> to vector<4x128xbf16>
    %cst_37 = arith.constant dense<0.000000e+00> : vector<256x128xf32>
    %39 = tpu.matmul %36, %38, %cst_37 {dimension_numbers = #tpu.dot_dimension_numbers<[1], [0], [0], [1], [0, 0, 1, 1], [], []>} : vector<256x4xbf16>, vector<4x128xbf16>, vector<256x128xf32> -> vector<256x128xf32>
    %40 = arith.addf %30, %39 : vector<256x128xf32>
    %c16_i32_38 = arith.constant 16 : i32
    %41 = arith.muli %arg2, %c16_i32_38 : i32
    %c1_i32_39 = arith.constant 1 : i32
    %42 = arith.addi %41, %c1_i32_39 : i32
    %c0_40 = arith.constant 0 : index
    %c0_41 = arith.constant 0 : index
    %43 = arith.index_cast %42 : i32 to index
    %c1_42 = arith.constant 1 : index
    %c0_43 = arith.constant 0 : index
    %44 = vector.load %arg3[%c0_40, %c0_41, %43, %c1_42, %c0_43] : memref<1x1x18x18x4xbf16, #tpu.memory_space<vmem>>, vector<1x1x16x16x4xbf16>
    %45 = vector.shape_cast %44 : vector<1x1x16x16x4xbf16> to vector<16x16x4xbf16>
    %46 = vector.shape_cast %45 : vector<16x16x4xbf16> to vector<256x4xbf16>
    %c1_44 = arith.constant 1 : index
    %c1_45 = arith.constant 1 : index
    %c0_46 = arith.constant 0 : index
    %c0_47 = arith.constant 0 : index
    %47 = vector.load %arg4[%c1_44, %c1_45, %c0_46, %c0_47] : memref<3x3x4x128xbf16, #tpu.memory_space<vmem>>, vector<1x1x4x128xbf16>
    %48 = vector.shape_cast %47 : vector<1x1x4x128xbf16> to vector<4x128xbf16>
    %cst_48 = arith.constant dense<0.000000e+00> : vector<256x128xf32>
    %49 = tpu.matmul %46, %48, %cst_48 {dimension_numbers = #tpu.dot_dimension_numbers<[1], [0], [0], [1], [0, 0, 1, 1], [], []>} : vector<256x4xbf16>, vector<4x128xbf16>, vector<256x128xf32> -> vector<256x128xf32>
    %50 = arith.addf %40, %49 : vector<256x128xf32>
    %c16_i32_49 = arith.constant 16 : i32
    %51 = arith.muli %arg2, %c16_i32_49 : i32
    %c1_i32_50 = arith.constant 1 : i32
    %52 = arith.addi %51, %c1_i32_50 : i32
    %c0_51 = arith.constant 0 : index
    %c0_52 = arith.constant 0 : index
    %53 = arith.index_cast %52 : i32 to index
    %c2_53 = arith.constant 2 : index
    %c0_54 = arith.constant 0 : index
    %54 = vector.load %arg3[%c0_51, %c0_52, %53, %c2_53, %c0_54] : memref<1x1x18x18x4xbf16, #tpu.memory_space<vmem>>, vector<1x1x16x16x4xbf16>
    %55 = vector.shape_cast %54 : vector<1x1x16x16x4xbf16> to vector<16x16x4xbf16>
    %56 = vector.shape_cast %55 : vector<16x16x4xbf16> to vector<256x4xbf16>
    %c1_55 = arith.constant 1 : index
    %c2_56 = arith.constant 2 : index
    %c0_57 = arith.constant 0 : index
    %c0_58 = arith.constant 0 : index
    %57 = vector.load %arg4[%c1_55, %c2_56, %c0_57, %c0_58] : memref<3x3x4x128xbf16, #tpu.memory_space<vmem>>, vector<1x1x4x128xbf16>
    %58 = vector.shape_cast %57 : vector<1x1x4x128xbf16> to vector<4x128xbf16>
    %cst_59 = arith.constant dense<0.000000e+00> : vector<256x128xf32>
    %59 = tpu.matmul %56, %58, %cst_59 {dimension_numbers = #tpu.dot_dimension_numbers<[1], [0], [0], [1], [0, 0, 1, 1], [], []>} : vector<256x4xbf16>, vector<4x128xbf16>, vector<256x128xf32> -> vector<256x128xf32>
    %60 = arith.addf %50, %59 : vector<256x128xf32>
    %c16_i32_60 = arith.constant 16 : i32
    %61 = arith.muli %arg2, %c16_i32_60 : i32
    %c2_i32 = arith.constant 2 : i32
    %62 = arith.addi %61, %c2_i32 : i32
    %c0_61 = arith.constant 0 : index
    %c0_62 = arith.constant 0 : index
    %63 = arith.index_cast %62 : i32 to index
    %c0_63 = arith.constant 0 : index
    %c0_64 = arith.constant 0 : index
    %64 = vector.load %arg3[%c0_61, %c0_62, %63, %c0_63, %c0_64] : memref<1x1x18x18x4xbf16, #tpu.memory_space<vmem>>, vector<1x1x16x16x4xbf16>
    %65 = vector.shape_cast %64 : vector<1x1x16x16x4xbf16> to vector<16x16x4xbf16>
    %66 = vector.shape_cast %65 : vector<16x16x4xbf16> to vector<256x4xbf16>
    %c2_65 = arith.constant 2 : index
    %c0_66 = arith.constant 0 : index
    %c0_67 = arith.constant 0 : index
    %c0_68 = arith.constant 0 : index
    %67 = vector.load %arg4[%c2_65, %c0_66, %c0_67, %c0_68] : memref<3x3x4x128xbf16, #tpu.memory_space<vmem>>, vector<1x1x4x128xbf16>
    %68 = vector.shape_cast %67 : vector<1x1x4x128xbf16> to vector<4x128xbf16>
    %cst_69 = arith.constant dense<0.000000e+00> : vector<256x128xf32>
    %69 = tpu.matmul %66, %68, %cst_69 {dimension_numbers = #tpu.dot_dimension_numbers<[1], [0], [0], [1], [0, 0, 1, 1], [], []>} : vector<256x4xbf16>, vector<4x128xbf16>, vector<256x128xf32> -> vector<256x128xf32>
    %70 = arith.addf %60, %69 : vector<256x128xf32>
    %c16_i32_70 = arith.constant 16 : i32
    %71 = arith.muli %arg2, %c16_i32_70 : i32
    %c2_i32_71 = arith.constant 2 : i32
    %72 = arith.addi %71, %c2_i32_71 : i32
    %c0_72 = arith.constant 0 : index
    %c0_73 = arith.constant 0 : index
    %73 = arith.index_cast %72 : i32 to index
    %c1_74 = arith.constant 1 : index
    %c0_75 = arith.constant 0 : index
    %74 = vector.load %arg3[%c0_72, %c0_73, %73, %c1_74, %c0_75] : memref<1x1x18x18x4xbf16, #tpu.memory_space<vmem>>, vector<1x1x16x16x4xbf16>
    %75 = vector.shape_cast %74 : vector<1x1x16x16x4xbf16> to vector<16x16x4xbf16>
    %76 = vector.shape_cast %75 : vector<16x16x4xbf16> to vector<256x4xbf16>
    %c2_76 = arith.constant 2 : index
    %c1_77 = arith.constant 1 : index
    %c0_78 = arith.constant 0 : index
    %c0_79 = arith.constant 0 : index
    %77 = vector.load %arg4[%c2_76, %c1_77, %c0_78, %c0_79] : memref<3x3x4x128xbf16, #tpu.memory_space<vmem>>, vector<1x1x4x128xbf16>
    %78 = vector.shape_cast %77 : vector<1x1x4x128xbf16> to vector<4x128xbf16>
    %cst_80 = arith.constant dense<0.000000e+00> : vector<256x128xf32>
    %79 = tpu.matmul %76, %78, %cst_80 {dimension_numbers = #tpu.dot_dimension_numbers<[1], [0], [0], [1], [0, 0, 1, 1], [], []>} : vector<256x4xbf16>, vector<4x128xbf16>, vector<256x128xf32> -> vector<256x128xf32>
    %80 = arith.addf %70, %79 : vector<256x128xf32>
    %c16_i32_81 = arith.constant 16 : i32
    %81 = arith.muli %arg2, %c16_i32_81 : i32
    %c2_i32_82 = arith.constant 2 : i32
    %82 = arith.addi %81, %c2_i32_82 : i32
    %c0_83 = arith.constant 0 : index
    %c0_84 = arith.constant 0 : index
    %83 = arith.index_cast %82 : i32 to index
    %c2_85 = arith.constant 2 : index
    %c0_86 = arith.constant 0 : index
    %84 = vector.load %arg3[%c0_83, %c0_84, %83, %c2_85, %c0_86] : memref<1x1x18x18x4xbf16, #tpu.memory_space<vmem>>, vector<1x1x16x16x4xbf16>
    %85 = vector.shape_cast %84 : vector<1x1x16x16x4xbf16> to vector<16x16x4xbf16>
    %86 = vector.shape_cast %85 : vector<16x16x4xbf16> to vector<256x4xbf16>
    %c2_87 = arith.constant 2 : index
    %c2_88 = arith.constant 2 : index
    %c0_89 = arith.constant 0 : index
    %c0_90 = arith.constant 0 : index
    %87 = vector.load %arg4[%c2_87, %c2_88, %c0_89, %c0_90] : memref<3x3x4x128xbf16, #tpu.memory_space<vmem>>, vector<1x1x4x128xbf16>
    %88 = vector.shape_cast %87 : vector<1x1x4x128xbf16> to vector<4x128xbf16>
    %cst_91 = arith.constant dense<0.000000e+00> : vector<256x128xf32>
    %89 = tpu.matmul %86, %88, %cst_91 {dimension_numbers = #tpu.dot_dimension_numbers<[1], [0], [0], [1], [0, 0, 1, 1], [], []>} : vector<256x4xbf16>, vector<4x128xbf16>, vector<256x128xf32> -> vector<256x128xf32>
    %90 = arith.addf %80, %89 : vector<256x128xf32>
    %c0_92 = arith.constant 0 : index
    %c0_93 = arith.constant 0 : index
    %91 = vector.load %arg5[%c0_92, %c0_93] : memref<1x128xf32, #tpu.memory_space<vmem>>, vector<1x128xf32>
    %92 = vector.broadcast %91 : vector<1x128xf32> to vector<256x128xf32>
    %93 = arith.mulf %90, %92 : vector<256x128xf32>
    %c0_94 = arith.constant 0 : index
    %c0_95 = arith.constant 0 : index
    %94 = vector.load %arg6[%c0_94, %c0_95] : memref<1x128xf32, #tpu.memory_space<vmem>>, vector<1x128xf32>
    %95 = vector.broadcast %94 : vector<1x128xf32> to vector<256x128xf32>
    %96 = arith.addf %93, %95 : vector<256x128xf32>
    %cst_96 = arith.constant 0.000000e+00 : f32
    %cst_97 = arith.constant 6.000000e+00 : f32
    %97 = vector.broadcast %cst_96 : f32 to vector<256x128xf32>
    %98 = arith.maximumf %97, %96 : vector<256x128xf32>
    %99 = vector.broadcast %cst_97 : f32 to vector<256x128xf32>
    %100 = arith.minimumf %99, %98 : vector<256x128xf32>
    %101 = vector.shape_cast %100 : vector<256x128xf32> to vector<16x16x128xf32>
    %c0_98 = arith.constant 0 : index
    %c0_99 = arith.constant 0 : index
    %c0_100 = arith.constant 0 : index
    %c0_101 = arith.constant 0 : index
    %102 = vector.load %arg7[%c0_98, %c0_99, %c0_100, %c0_101] : memref<1x16x16x128xf32, #tpu.memory_space<vmem>>, vector<1x16x16x128xf32>
    %103 = vector.shape_cast %102 : vector<1x16x16x128xf32> to vector<16x16x128xf32>
    %104 = vector.shape_cast %101 : vector<16x16x128xf32> to vector<1x16x16x128xf32>
    tpu.vector_store %arg7[%c0_98, %c0_99, %c0_100, %c0_101], %104 {strides = array<i32>} : memref<1x16x16x128xf32, #tpu.memory_space<vmem>>, vector<1x16x16x128xf32>,
    return
  }
  func.func @transform_0(%arg0: i32, %arg1: i32, %arg2: i32) -> (i32, i32, i32, i32, i32) {
    %c0_i32 = arith.constant 0 : i32
    %c0_i32_0 = arith.constant 0 : i32
    %c0_i32_1 = arith.constant 0 : i32
    %c0_i32_2 = arith.constant 0 : i32
    %c0_i32_3 = arith.constant 0 : i32
    return %arg0, %c0_i32, %c0_i32_0, %c0_i32_1, %c0_i32_2 : i32, i32, i32, i32, i32
  }
  func.func @transform_1(%arg0: i32, %arg1: i32, %arg2: i32) -> (i32, i32, i32, i32) {
    %c0_i32 = arith.constant 0 : i32
    %c0_i32_0 = arith.constant 0 : i32
    %c0_i32_1 = arith.constant 0 : i32
    %c0_i32_2 = arith.constant 0 : i32
    return %c0_i32, %c0_i32_0, %c0_i32_1, %arg1 : i32, i32, i32, i32
  }
  func.func @transform_2(%arg0: i32, %arg1: i32, %arg2: i32) -> (i32, i32) {
    %c0_i32 = arith.constant 0 : i32
    %c0_i32_0 = arith.constant 0 : i32
    return %c0_i32, %arg1 : i32, i32
  }
  func.func @transform_3(%arg0: i32, %arg1: i32, %arg2: i32) -> (i32, i32) {
    %c0_i32 = arith.constant 0 : i32
    %c0_i32_0 = arith.constant 0 : i32
    return %c0_i32, %arg1 : i32, i32
  }
  func.func @transform_4(%arg0: i32, %arg1: i32, %arg2: i32) -> (i32, i32, i32, i32) {
    %c0_i32 = arith.constant 0 : i32
    %c0_i32_0 = arith.constant 0 : i32
    return %arg0, %arg2, %c0_i32, %arg1 : i32, i32, i32, i32
  }
}

</mosaic_0001>

<llo_original>
// kernel: conv2d_norm_activation.1
$region0: #{conv2d_norm_activation.1}
  #allocation0 [shape = 'u32[]', space=smem, size = 0x4, offset = 0x4, fixed_abs, tag = 'smem constant byte address 0x4 - core index']
  #allocation1 [shape = 'u32[144,128]{1,0:T(1,128)}', space=vmem, size = 0x12000, scoped, tag = 'internal scratch']
  %s0 = inlined_call_operand.vmem [shape: bf16[2,1,18,18,4], index: 0, kind: input, shape index: {}]
  %s1 = inlined_call_operand.vmem [shape: bf16[3,3,4,128], index: 1, kind: input, shape index: {}]
  %s2 = inlined_call_operand.vmem [shape: f32[1,128], index: 2, kind: input, shape index: {}]
  %s3 = inlined_call_operand.vmem [shape: f32[1,128], index: 3, kind: input, shape index: {}]
  %s4 = inlined_call_operand.vmem [shape: f32[2,16,16,128], index: 4, kind: output, shape index: {}]
  %s5 = sld [smem:[#allocation0]]
  $region49: #{conv2d_norm_activation.1} parent=0
    _
  %s7 = ssub.s32 1, %s5
  %s8 = scalar_select 0, %s7, %s5
  loop: start=0, step=1, limit=4
  $region2: #{conv2d_norm_activation.1} parent=0 // loop_pre_header
    _
  $region3: #{conv2d_norm_activation.1} parent=0 // loop_header
    %s10 = sphi 0, %s14
    %p11 = scmp.ge.s32.totalorder %s10, 4
    %s17 = sphi 0, %s36
    %s18 = sphi 0, %s32
    %s19 = sphi 0, %s28
    %s20 = sphi 0, %s17
    %s21 = sphi 0, %s18
    %s22 = sphi 0, %s19
    %s23 = sphi 0, %s20
    %s24 = sphi 0, %s21
    %s25 = sphi 0, %s22
    %s39 = sphi 0, %s41
    %s42 = sphi 0, %s39
    %s43 = sphi 0, %s42
    %s59 = sphi 0, %s43
    %s65 = sphi 0, %s67
    %s68 = sphi 0, %s65
    %s69 = sphi 0, %s68
    %s85 = sphi 0, %s69
    %s91 = sphi 0, %s93
    %s94 = sphi 0, %s91
    %s95 = sphi 0, %s94
    %s111 = sphi 0, %s95
    %s117 = sphi 0, %s119
    %s120 = sphi 0, %s117
    %s121 = sphi 0, %s120
    %s137 = sphi 0, %s121
    %s147 = sphi 0, %s149
    %s150 = sphi 0, %s147
    %s151 = sphi 0, %s150
    %s167 = sphi 0, %s151
  $region4: #{conv2d_norm_activation.1} parent=0 // loop_header_branch
    %13 = sbr.rel (%p11) target = $region8
  $region5: #{conv2d_norm_activation.1} parent=0 // loop_body
    %s15 = ssub.s32 %s10, 1
    %s16 = ssub.s32 %s10, 2
    %s26 = sadd.s32 1, %s19
    %p27 = scmp.ge.s32.totalorder %s26, 1
    %s28 = scalar_select %p27, 0, %s26
    %s29 = sadd.s32 1, %s18
    %s30 = scalar_select %p27, %s29, %s18
    %p31 = scmp.ge.s32.totalorder %s30, 1
    %s32 = scalar_select %p31, 0, %s30
    %s33 = sadd.s32 1, %s17
    %s34 = scalar_select %p31, %s33, %s17
    %p35 = scmp.ge.s32.totalorder %s34, 2
    %s36 = scalar_select %p35, 0, %s34
    %s37 = ssub.s32 %s17, %s36
    %p38 = scmp.eq.s32.totalorder %s37, 0
    %s40 = sadd.s32 %s39, 1
    %s41 = scalar_select %p38, %s39, %s40
    %p44 = pneg %p38
    %p45 = scmp.eq.s32.totalorder %s10, 1
    %p46 = por %p44, %p45
    %p47 = scmp.ne.s32.totalorder %s39, %s42
    %p48 = scmp.eq.s32.totalorder %s10, 0
    %p49 = por %p47, %p48
    %p50 = scmp.ne.s32.totalorder %s39, %s42
    %p51 = scmp.eq.s32.totalorder %s15, 1
    %p52 = por %p50, %p51
    %p53 = scmp.ne.s32.totalorder %s42, %s43
    %p54 = scmp.eq.s32.totalorder %s15, 0
    %p55 = por %p53, %p54
    %p56 = scmp.ne.s32.totalorder %s42, %s43
    %p57 = scmp.eq.s32.totalorder %s16, 1
    %p58 = por %p56, %p57
    %p60 = scmp.ne.s32.totalorder %s43, %s59
    %p61 = scmp.eq.s32.totalorder %s16, 0
    %p62 = por %p60, %p61
    %s63 = ssub.s32 %s18, %s32
    %p64 = scmp.eq.s32.totalorder %s63, 0
    %s66 = sadd.s32 %s65, 1
    %s67 = scalar_select %p64, %s65, %s66
    %p70 = pneg %p64
    %p71 = scmp.eq.s32.totalorder %s10, 1
    %p72 = por %p70, %p71
    %p73 = scmp.ne.s32.totalorder %s65, %s68
    %p74 = scmp.eq.s32.totalorder %s10, 0
    %p75 = por %p73, %p74
    %p76 = scmp.ne.s32.totalorder %s65, %s68
    %p77 = scmp.eq.s32.totalorder %s15, 1
    %p78 = por %p76, %p77
    %p79 = scmp.ne.s32.totalorder %s68, %s69
    %p80 = scmp.eq.s32.totalorder %s15, 0
    %p81 = por %p79, %p80
    %p82 = scmp.ne.s32.totalorder %s68, %s69
    %p83 = scmp.eq.s32.totalorder %s16, 1
    %p84 = por %p82, %p83
    %p86 = scmp.ne.s32.totalorder %s69, %s85
    %p87 = scmp.eq.s32.totalorder %s16, 0
    %p88 = por %p86, %p87
    %s89 = ssub.s32 %s18, %s32
    %p90 = scmp.eq.s32.totalorder %s89, 0
    %s92 = sadd.s32 %s91, 1
    %s93 = scalar_select %p90, %s91, %s92
    %p96 = pneg %p90
    %p97 = scmp.eq.s32.totalorder %s10, 1
    %p98 = por %p96, %p97
    %p99 = scmp.ne.s32.totalorder %s91, %s94
    %p100 = scmp.eq.s32.totalorder %s10, 0
    %p101 = por %p99, %p100
    %p102 = scmp.ne.s32.totalorder %s91, %s94
    %p103 = scmp.eq.s32.totalorder %s15, 1
    %p104 = por %p102, %p103
    %p105 = scmp.ne.s32.totalorder %s94, %s95
    %p106 = scmp.eq.s32.totalorder %s15, 0
    %p107 = por %p105, %p106
    %p108 = scmp.ne.s32.totalorder %s94, %s95
    %p109 = scmp.eq.s32.totalorder %s16, 1
    %p110 = por %p108, %p109
    %p112 = scmp.ne.s32.totalorder %s95, %s111
    %p113 = scmp.eq.s32.totalorder %s16, 0
    %p114 = por %p112, %p113
    %s115 = ssub.s32 %s18, %s32
    %p116 = scmp.eq.s32.totalorder %s115, 0
    %s118 = sadd.s32 %s117, 1
    %s119 = scalar_select %p116, %s117, %s118
    %p122 = pneg %p116
    %p123 = scmp.eq.s32.totalorder %s10, 1
    %p124 = por %p122, %p123
    %p125 = scmp.ne.s32.totalorder %s117, %s120
    %p126 = scmp.eq.s32.totalorder %s10, 0
    %p127 = por %p125, %p126
    %p128 = scmp.ne.s32.totalorder %s117, %s120
    %p129 = scmp.eq.s32.totalorder %s15, 1
    %p130 = por %p128, %p129
    %p131 = scmp.ne.s32.totalorder %s120, %s121
    %p132 = scmp.eq.s32.totalorder %s15, 0
    %p133 = por %p131, %p132
    %p134 = scmp.ne.s32.totalorder %s120, %s121
    %p135 = scmp.eq.s32.totalorder %s16, 1
    %p136 = por %p134, %p135
    %p138 = scmp.ne.s32.totalorder %s121, %s137
    %p139 = scmp.eq.s32.totalorder %s16, 0
    %p140 = por %p138, %p139
    %s141 = ssub.s32 %s17, %s36
    %s142 = ssub.s32 %s19, %s28
    %s143 = sor.u32 %s141, %s142
    %s144 = ssub.s32 %s18, %s32
    %s145 = sor.u32 %s143, %s144
    %p146 = scmp.eq.s32.totalorder %s145, 0
    %s148 = sadd.s32 %s147, 1
    %s149 = scalar_select %p146, %s147, %s148
    %p152 = pneg %p146
    %p153 = scmp.eq.s32.totalorder %s10, 1
    %p154 = por %p152, %p153
    %p155 = scmp.ne.s32.totalorder %s147, %s150
    %p156 = scmp.eq.s32.totalorder %s10, 0
    %p157 = por %p155, %p156
    %p158 = scmp.ne.s32.totalorder %s147, %s150
    %p159 = scmp.eq.s32.totalorder %s15, 1
    %p160 = por %p158, %p159
    %p161 = scmp.ne.s32.totalorder %s150, %s151
    %p162 = scmp.eq.s32.totalorder %s15, 0
    %p163 = por %p161, %p162
    %p164 = scmp.ne.s32.totalorder %s150, %s151
    %p165 = scmp.eq.s32.totalorder %s16, 1
    %p166 = por %p164, %p165
    %p168 = scmp.ne.s32.totalorder %s151, %s167
    %p169 = scmp.eq.s32.totalorder %s16, 0
    %p170 = por %p168, %p169
    %p171 = scmp.le.s32.totalorder 1, %s10
    %p172 = scmp.lt.s32.totalorder %s10, 3
    %p173 = pnand %p171, %p172
    %p174 = pneg %p173
    // Predicated region
    $region9: #{conv2d_norm_activation.1} parent=5 // pred_check
      _
    $region10: #{conv2d_norm_activation.1} parent=5 // pred_check_branch
      %176 = sbr.rel (%p173) target = $region12
    $region11: #{conv2d_norm_activation.1} parent=5 // pred_region
      %s177 = ssub.s32 %s10, 1
      // Predicated region
      $region13: #{conv2d_norm_activation.1} parent=11 // pred_check
        %p178 = pneg %p81
      $region14: #{conv2d_norm_activation.1} parent=11 // pred_check_branch
        %180 = sbr.rel (%p178) target = $region16
      $region15: #{conv2d_norm_activation.1} parent=11 // pred_region
        %p181 = scmp.lt.s32.totalorder %s21, 0
        %s182 = scalar_select %p181, %s21, 0
        %s183 = smul.addr %s182, 2
        %s184 = scalar_lea.vmem %s1, %s183
      $region16: #{conv2d_norm_activation.1} parent=11 // pred_fallthru
        _
      // Predicated region
      $region17: #{conv2d_norm_activation.1} parent=11 // pred_check
        %p185 = pneg %p107
      $region18: #{conv2d_norm_activation.1} parent=11 // pred_check_branch
        %187 = sbr.rel (%p185) target = $region20
      $region19: #{conv2d_norm_activation.1} parent=11 // pred_region
        %p188 = scmp.lt.s32.totalorder %s21, 0
        %s189 = scalar_select %p188, %s21, 0
        %s190 = scalar_lea.vmem %s2, %s189
      $region20: #{conv2d_norm_activation.1} parent=11 // pred_fallthru
        _
      // Predicated region
      $region21: #{conv2d_norm_activation.1} parent=11 // pred_check
        %p191 = pneg %p133
      $region22: #{conv2d_norm_activation.1} parent=11 // pred_check_branch
        %193 = sbr.rel (%p191) target = $region24
      $region23: #{conv2d_norm_activation.1} parent=11 // pred_region
        %p194 = scmp.lt.s32.totalorder %s21, 0
        %s195 = scalar_select %p194, %s21, 0
        %s196 = scalar_lea.vmem %s3, %s195
      $region24: #{conv2d_norm_activation.1} parent=11 // pred_fallthru
        _
    $region12: #{conv2d_norm_activation.1} parent=5 // pred_fallthru
      _
    %p197 = scmp.lt.s32.totalorder %s10, 2
    // Predicated region
    $region25: #{conv2d_norm_activation.1} parent=5 // pred_check
      %p198 = pneg %p197
    $region26: #{conv2d_norm_activation.1} parent=5 // pred_check_branch
      %200 = sbr.rel (%p198) target = $region28
    $region27: #{conv2d_norm_activation.1} parent=5 // pred_region
      // Predicated region
      $region29: #{conv2d_norm_activation.1} parent=27 // pred_check
        %p201 = pneg %p49
      $region30: #{conv2d_norm_activation.1} parent=27 // pred_check_branch
        %203 = sbr.rel (%p201) target = $region32
      $region31: #{conv2d_norm_activation.1} parent=27 // pred_region
        %p204 = scmp.lt.s32.totalorder %s17, 1
        %s205 = scalar_select %p204, %s17, 1
        %s206 = smul.addr %s205, 54
        %s207 = smul.addr %s206, 4
        %s208 = scalar_lea.vmem %s0, %s207
      $region32: #{conv2d_norm_activation.1} parent=27 // pred_fallthru
        _
    $region28: #{conv2d_norm_activation.1} parent=5 // pred_fallthru
      _
    %p209 = scmp.le.s32.totalorder 1, %s10
    %p210 = scmp.lt.s32.totalorder %s10, 3
    %p211 = pnand %p209, %p210
    %p212 = pneg %p211
    // Predicated region
    $region33: #{conv2d_norm_activation.1} parent=5 // pred_check
      _
    $region34: #{conv2d_norm_activation.1} parent=5 // pred_check_branch
      %214 = sbr.rel (%p211) target = $region36
    $region35: #{conv2d_norm_activation.1} parent=5 // pred_region
      %s215 = ssub.s32 %s10, 1
      %p216 = scmp.lt.s32.totalorder %s20, 1
      %s217 = scalar_select %p216, %s20, 1
      %s218 = smul.addr %s217, 54
      %s219 = smul.addr %s218, 4
      %s220 = scalar_lea.vmem %s0, %s219
      %p221 = pneg %p55
      %p222 = pneg %p52
      %p223 = scmp.lt.s32.totalorder %s21, 0
      %s224 = scalar_select %p223, %s21, 0
      %s225 = smul.addr %s224, 2
      %s226 = scalar_lea.vmem %s1, %s225
      %p227 = pneg %p81
      %p228 = pneg %p78
      %p229 = scmp.lt.s32.totalorder %s21, 0
      %s230 = scalar_select %p229, %s21, 0
      %s231 = scalar_lea.vmem %s2, %s230
      %p232 = pneg %p107
      %p233 = pneg %p104
      %p234 = scmp.lt.s32.totalorder %s21, 0
      %s235 = scalar_select %p234, %s21, 0
      %s236 = scalar_lea.vmem %s3, %s235
      %p237 = pneg %p133
      %p238 = pneg %p130
      %p239 = pneg %p163
      %p240 = pneg %p160
      %s241 = smul.u32 16, %s22
      %p242 = scmp.lt.s32.totalorder %s20, 1
      %s243 = scalar_select %p242, %s20, 1
      %p244 = scmp.lt.s32.totalorder %s241, 15
      %s245 = scalar_select %p244, %s241, 15
      %p246 = scmp.lt.s32.totalorder %s21, 0
      %s247 = scalar_select %p246, %s21, 0
      %s248 = smul.addr %s245, 2
      %s249 = sadd.s32 %s247, %s248
      %s250 = smul.addr %s243, 32
      %s251 = sadd.s32 %s249, %s250
      %s252 = smul.addr %s251, 8
      %s253 = scalar_lea.vmem %s4, %s252
      %p254 = scmp.lt.s32.totalorder %s20, 1
      %s255 = scalar_select %p254, %s20, 1
      %s256 = smul.addr %s255, 54
      %s257 = smul.addr %s256, 4
      %s258 = scalar_lea.vmem %s0, %s257
      %p259 = scmp.lt.s32.totalorder %s21, 0
      %s260 = scalar_select %p259, %s21, 0
      %s261 = smul.addr %s260, 2
      %s262 = scalar_lea.vmem %s1, %s261
      %p263 = scmp.lt.s32.totalorder %s21, 0
      %s264 = scalar_select %p263, %s21, 0
      %s265 = scalar_lea.vmem %s2, %s264
      %p266 = scmp.lt.s32.totalorder %s21, 0
      %s267 = scalar_select %p266, %s21, 0
      %s268 = scalar_lea.vmem %s3, %s267
      %s269 = smul.u32 16, %s22
      %p270 = scmp.lt.s32.totalorder %s20, 1
      %s271 = scalar_select %p270, %s20, 1
      %p272 = scmp.lt.s32.totalorder %s269, 15
      %s273 = scalar_select %p272, %s269, 15
      %p274 = scmp.lt.s32.totalorder %s21, 0
      %s275 = scalar_select %p274, %s21, 0
      %s276 = smul.addr %s273, 2
      %s277 = sadd.s32 %s275, %s276
      %s278 = smul.addr %s271, 32
      %s279 = sadd.s32 %s277, %s278
      %s280 = smul.addr %s279, 8
      %s281 = scalar_lea.vmem %s4, %s280
      %s282 = smul.u32 16, %s22
      %s284 = smul.u32 %s22, 16
      %s285 = smul.u32 %s284, 3
      %s286 = smul.addr %s285, 4
      %s287 = scalar_lea.vmem %s258, %s286
      %v288 = vld [vmem:[%s287] sm:$0xf]
      %v289 = vld [vmem:[%s287 + $0x4] sm:$0xf]
      %v290 = vld [vmem:[%s287 + $0xc] sm:$0xf]
      %v291 = vld [vmem:[%s287 + $0x10] sm:$0xf]
      %v292 = vld [vmem:[%s287 + $0x18] sm:$0xf]
      %v293 = vld [vmem:[%s287 + $0x1c] sm:$0xf]
      %v294 = vld [vmem:[%s287 + $0x24] sm:$0xf]
      %v295 = vld [vmem:[%s287 + $0x28] sm:$0xf]
      %v296 = vld [vmem:[%s287 + $0x30] sm:$0xf]
      %v297 = vld [vmem:[%s287 + $0x34] sm:$0xf]
      %v298 = vld [vmem:[%s287 + $0x3c] sm:$0xf]
      %v299 = vld [vmem:[%s287 + $0x40] sm:$0xf]
      %v300 = vld [vmem:[%s287 + $0x48] sm:$0xf]
      %v301 = vld [vmem:[%s287 + $0x4c] sm:$0xf]
      %v302 = vld [vmem:[%s287 + $0x54] sm:$0xf]
      %v303 = vld [vmem:[%s287 + $0x58] sm:$0xf]
      %v304 = vld [vmem:[%s287 + $0x60] sm:$0xf]
      %v305 = vld [vmem:[%s287 + $0x64] sm:$0xf]
      %v306 = vld [vmem:[%s287 + $0x6c] sm:$0xf]
      %v307 = vld [vmem:[%s287 + $0x70] sm:$0xf]
      %v308 = vld [vmem:[%s287 + $0x78] sm:$0xf]
      %v309 = vld [vmem:[%s287 + $0x7c] sm:$0xf]
      %v310 = vld [vmem:[%s287 + $0x84] sm:$0xf]
      %v311 = vld [vmem:[%s287 + $0x88] sm:$0xf]
      %v312 = vld [vmem:[%s287 + $0x90] sm:$0xf]
      %v313 = vld [vmem:[%s287 + $0x94] sm:$0xf]
      %v314 = vld [vmem:[%s287 + $0x9c] sm:$0xf]
      %v315 = vld [vmem:[%s287 + $0xa0] sm:$0xf]
      %v316 = vld [vmem:[%s287 + $0xa8] sm:$0xf]
      %v317 = vld [vmem:[%s287 + $0xac] sm:$0xf]
      %v318 = vld [vmem:[%s287 + $0xb4] sm:$0xf]
      %v319 = vld [vmem:[%s287 + $0xb8] sm:$0xf]
      %v320 = vld [vmem:[%s262] sm:$0x3]
      %v321 = vld [vmem:[%s287 + $0x8] sm:$0x1]
      %v322 = vld [vmem:[%s287 + $0x14] sm:$0x1]
      %v323 = vld [vmem:[%s287 + $0x20] sm:$0x1]
      %v324 = vld [vmem:[%s287 + $0x2c] sm:$0x1]
      %v325 = vld [vmem:[%s287 + $0x38] sm:$0x1]
      %v326 = vld [vmem:[%s287 + $0x44] sm:$0x1]
      %v327 = vld [vmem:[%s287 + $0x50] sm:$0x1]
      %v328 = vld [vmem:[%s287 + $0x5c] sm:$0x1]
      %v329 = vld [vmem:[%s287 + $0x68] sm:$0x1]
      %v330 = vld [vmem:[%s287 + $0x74] sm:$0x1]
      %v331 = vld [vmem:[%s287 + $0x80] sm:$0x1]
      %v332 = vld [vmem:[%s287 + $0x8c] sm:$0x1]
      %v333 = vld [vmem:[%s287 + $0x98] sm:$0x1]
      %v334 = vld [vmem:[%s287 + $0xa4] sm:$0x1]
      %v335 = vld [vmem:[%s287 + $0xb0] sm:$0x1]
      %v336 = vld [vmem:[%s287 + $0xbc] sm:$0x1]
      %vm337 = vsmask.f32 3328
      %vm338 = vsmask.f32 7440
      %vm339 = vmor %vm337, %vm338
      %v341 = vshrl.u32 %v288, 16
      %v343 = vrot.slane %v341, 4
      %v344 = vshll.u32 %v288, 16
      %v346 = vrot.slane %v344, 5
      %v347 = vor.u32 %v343, %v346
      %v348 = vrot.slane %v347, 4
      %v350 = vshll.u32 %v289, 16
      %v352 = vrot.slane %v350, 5
      %v353 = vsel %vm339, %v348, %v352
      %v354 = vshrl.u32 %v289, 16
      %v356 = vrot.slane %v354, 4
      %v357 = vor.u32 %v356, %v352
      %v358 = vrot.slane %v357, 4
      %v360 = vshll.u32 %v321, 16
      %v362 = vrot.slane %v360, 5
      %v363 = vsel %vm339, %v358, %v362
      %v365 = vshrl.u32 %v290, 16
      %v367 = vrot.slane %v365, 4
      %v368 = vshll.u32 %v290, 16
      %v370 = vrot.slane %v368, 5
      %v371 = vor.u32 %v367, %v370
      %v372 = vrot.slane %v371, 4
      %v374 = vshll.u32 %v291, 16
      %v376 = vrot.slane %v374, 5
      %v377 = vsel %vm339, %v372, %v376
      %v378 = vshrl.u32 %v291, 16
      %v380 = vrot.slane %v378, 4
      %v381 = vor.u32 %v380, %v376
      %v382 = vrot.slane %v381, 4
      %v384 = vshll.u32 %v322, 16
      %v386 = vrot.slane %v384, 5
      %v387 = vsel %vm339, %v382, %v386
      %v389 = vshrl.u32 %v292, 16
      %v391 = vrot.slane %v389, 4
      %v392 = vshll.u32 %v292, 16
      %v394 = vrot.slane %v392, 5
      %v395 = vor.u32 %v391, %v394
      %v396 = vrot.slane %v395, 4
      %v398 = vshll.u32 %v293, 16
      %v400 = vrot.slane %v398, 5
      %v401 = vsel %vm339, %v396, %v400
      %v402 = vshrl.u32 %v293, 16
      %v404 = vrot.slane %v402, 4
      %v405 = vor.u32 %v404, %v400
      %v406 = vrot.slane %v405, 4
      %v408 = vshll.u32 %v323, 16
      %v410 = vrot.slane %v408, 5
      %v411 = vsel %vm339, %v406, %v410
      %v413 = vshrl.u32 %v294, 16
      %v415 = vrot.slane %v413, 4
      %v416 = vshll.u32 %v294, 16
      %v418 = vrot.slane %v416, 5
      %v419 = vor.u32 %v415, %v418
      %v420 = vrot.slane %v419, 4
      %v422 = vshll.u32 %v295, 16
      %v424 = vrot.slane %v422, 5
      %v425 = vsel %vm339, %v420, %v424
      %v426 = vshrl.u32 %v295, 16
      %v428 = vrot.slane %v426, 4
      %v429 = vor.u32 %v428, %v424
      %v430 = vrot.slane %v429, 4
      %v432 = vshll.u32 %v324, 16
      %v434 = vrot.slane %v432, 5
      %v435 = vsel %vm339, %v430, %v434
      %v437 = vshrl.u32 %v296, 16
      %v439 = vrot.slane %v437, 4
      %v440 = vshll.u32 %v296, 16
      %v442 = vrot.slane %v440, 5
      %v443 = vor.u32 %v439, %v442
      %v444 = vrot.slane %v443, 4
      %v446 = vshll.u32 %v297, 16
      %v448 = vrot.slane %v446, 5
      %v449 = vsel %vm339, %v444, %v448
      %v450 = vshrl.u32 %v297, 16
      %v452 = vrot.slane %v450, 4
      %v453 = vor.u32 %v452, %v448
      %v454 = vrot.slane %v453, 4
      %v456 = vshll.u32 %v325, 16
      %v458 = vrot.slane %v456, 5
      %v459 = vsel %vm339, %v454, %v458
      %v461 = vshrl.u32 %v298, 16
      %v463 = vrot.slane %v461, 4
      %v464 = vshll.u32 %v298, 16
      %v466 = vrot.slane %v464, 5
      %v467 = vor.u32 %v463, %v466
      %v468 = vrot.slane %v467, 4
      %v470 = vshll.u32 %v299, 16
      %v472 = vrot.slane %v470, 5
      %v473 = vsel %vm339, %v468, %v472
      %v474 = vshrl.u32 %v299, 16
      %v476 = vrot.slane %v474, 4
      %v477 = vor.u32 %v476, %v472
      %v478 = vrot.slane %v477, 4
      %v480 = vshll.u32 %v326, 16
      %v482 = vrot.slane %v480, 5
      %v483 = vsel %vm339, %v478, %v482
      %v485 = vshrl.u32 %v300, 16
      %v487 = vrot.slane %v485, 4
      %v488 = vshll.u32 %v300, 16
      %v490 = vrot.slane %v488, 5
      %v491 = vor.u32 %v487, %v490
      %v492 = vrot.slane %v491, 4
      %v494 = vshll.u32 %v301, 16
      %v496 = vrot.slane %v494, 5
      %v497 = vsel %vm339, %v492, %v496
      %v498 = vshrl.u32 %v301, 16
      %v500 = vrot.slane %v498, 4
      %v501 = vor.u32 %v500, %v496
      %v502 = vrot.slane %v501, 4
      %v504 = vshll.u32 %v327, 16
      %v506 = vrot.slane %v504, 5
      %v507 = vsel %vm339, %v502, %v506
      %v509 = vshrl.u32 %v302, 16
      %v511 = vrot.slane %v509, 4
      %v512 = vshll.u32 %v302, 16
      %v514 = vrot.slane %v512, 5
      %v515 = vor.u32 %v511, %v514
      %v516 = vrot.slane %v515, 4
      %v518 = vshll.u32 %v303, 16
      %v520 = vrot.slane %v518, 5
      %v521 = vsel %vm339, %v516, %v520
      %v522 = vshrl.u32 %v303, 16
      %v524 = vrot.slane %v522, 4
      %v525 = vor.u32 %v524, %v520
      %v526 = vrot.slane %v525, 4
      %v528 = vshll.u32 %v328, 16
      %v530 = vrot.slane %v528, 5
      %v531 = vsel %vm339, %v526, %v530
      %v533 = vshrl.u32 %v304, 16
      %v535 = vrot.slane %v533, 4
      %v536 = vshll.u32 %v304, 16
      %v538 = vrot.slane %v536, 5
      %v539 = vor.u32 %v535, %v538
      %v540 = vrot.slane %v539, 4
      %v542 = vshll.u32 %v305, 16
      %v544 = vrot.slane %v542, 5
      %v545 = vsel %vm339, %v540, %v544
      %v546 = vshrl.u32 %v305, 16
      %v548 = vrot.slane %v546, 4
      %v549 = vor.u32 %v548, %v544
      %v550 = vrot.slane %v549, 4
      %v552 = vshll.u32 %v329, 16
      %v554 = vrot.slane %v552, 5
      %v555 = vsel %vm339, %v550, %v554
      %v557 = vshrl.u32 %v306, 16
      %v559 = vrot.slane %v557, 4
      %v560 = vshll.u32 %v306, 16
      %v562 = vrot.slane %v560, 5
      %v563 = vor.u32 %v559, %v562
      %v564 = vrot.slane %v563, 4
      %v566 = vshll.u32 %v307, 16
      %v568 = vrot.slane %v566, 5
      %v569 = vsel %vm339, %v564, %v568
      %v570 = vshrl.u32 %v307, 16
      %v572 = vrot.slane %v570, 4
      %v573 = vor.u32 %v572, %v568
      %v574 = vrot.slane %v573, 4
      %v576 = vshll.u32 %v330, 16
      %v578 = vrot.slane %v576, 5
      %v579 = vsel %vm339, %v574, %v578
      %v581 = vshrl.u32 %v308, 16
      %v583 = vrot.slane %v581, 4
      %v584 = vshll.u32 %v308, 16
      %v586 = vrot.slane %v584, 5
      %v587 = vor.u32 %v583, %v586
      %v588 = vrot.slane %v587, 4
      %v590 = vshll.u32 %v309, 16
      %v592 = vrot.slane %v590, 5
      %v593 = vsel %vm339, %v588, %v592
      %v594 = vshrl.u32 %v309, 16
      %v596 = vrot.slane %v594, 4
      %v597 = vor.u32 %v596, %v592
      %v598 = vrot.slane %v597, 4
      %v600 = vshll.u32 %v331, 16
      %v602 = vrot.slane %v600, 5
      %v603 = vsel %vm339, %v598, %v602
      %v605 = vshrl.u32 %v310, 16
      %v607 = vrot.slane %v605, 4
      %v608 = vshll.u32 %v310, 16
      %v610 = vrot.slane %v608, 5
      %v611 = vor.u32 %v607, %v610
      %v612 = vrot.slane %v611, 4
      %v614 = vshll.u32 %v311, 16
      %v616 = vrot.slane %v614, 5
      %v617 = vsel %vm339, %v612, %v616
      %v618 = vshrl.u32 %v311, 16
      %v620 = vrot.slane %v618, 4
      %v621 = vor.u32 %v620, %v616
      %v622 = vrot.slane %v621, 4
      %v624 = vshll.u32 %v332, 16
      %v626 = vrot.slane %v624, 5
      %v627 = vsel %vm339, %v622, %v626
      %v629 = vshrl.u32 %v312, 16
      %v631 = vrot.slane %v629, 4
      %v632 = vshll.u32 %v312, 16
      %v634 = vrot.slane %v632, 5
      %v635 = vor.u32 %v631, %v634
      %v636 = vrot.slane %v635, 4
      %v638 = vshll.u32 %v313, 16
      %v640 = vrot.slane %v638, 5
      %v641 = vsel %vm339, %v636, %v640
      %v642 = vshrl.u32 %v313, 16
      %v644 = vrot.slane %v642, 4
      %v645 = vor.u32 %v644, %v640
      %v646 = vrot.slane %v645, 4
      %v648 = vshll.u32 %v333, 16
      %v650 = vrot.slane %v648, 5
      %v651 = vsel %vm339, %v646, %v650
      %v653 = vshrl.u32 %v314, 16
      %v655 = vrot.slane %v653, 4
      %v656 = vshll.u32 %v314, 16
      %v658 = vrot.slane %v656, 5
      %v659 = vor.u32 %v655, %v658
      %v660 = vrot.slane %v659, 4
      %v662 = vshll.u32 %v315, 16
      %v664 = vrot.slane %v662, 5
      %v665 = vsel %vm339, %v660, %v664
      %v666 = vshrl.u32 %v315, 16
      %v668 = vrot.slane %v666, 4
      %v669 = vor.u32 %v668, %v664
      %v670 = vrot.slane %v669, 4
      %v672 = vshll.u32 %v334, 16
      %v674 = vrot.slane %v672, 5
      %v675 = vsel %vm339, %v670, %v674
      %v677 = vshrl.u32 %v316, 16
      %v679 = vrot.slane %v677, 4
      %v680 = vshll.u32 %v316, 16
      %v682 = vrot.slane %v680, 5
      %v683 = vor.u32 %v679, %v682
      %v684 = vrot.slane %v683, 4
      %v686 = vshll.u32 %v317, 16
      %v688 = vrot.slane %v686, 5
      %v689 = vsel %vm339, %v684, %v688
      %v690 = vshrl.u32 %v317, 16
      %v692 = vrot.slane %v690, 4
      %v693 = vor.u32 %v692, %v688
      %v694 = vrot.slane %v693, 4
      %v696 = vshll.u32 %v335, 16
      %v698 = vrot.slane %v696, 5
      %v699 = vsel %vm339, %v694, %v698
      %v701 = vshrl.u32 %v318, 16
      %v703 = vrot.slane %v701, 4
      %v704 = vshll.u32 %v318, 16
      %v706 = vrot.slane %v704, 5
      %v707 = vor.u32 %v703, %v706
      %v708 = vrot.slane %v707, 4
      %v710 = vshll.u32 %v319, 16
      %v712 = vrot.slane %v710, 5
      %v713 = vsel %vm339, %v708, %v712
      %v714 = vshrl.u32 %v319, 16
      %v716 = vrot.slane %v714, 4
      %v717 = vor.u32 %v716, %v712
      %v718 = vrot.slane %v717, 4
      %v720 = vshll.u32 %v336, 16
      %v722 = vrot.slane %v720, 5
      %v723 = vsel %vm339, %v718, %v722
      %s724 = scalar_lea.vmem %s262, 2
      %v725 = vld [vmem:[%s724] sm:$0x3]
      %v726 = vunpack.c.l.b16 %v353
      %v727 = vunpack.c.l.b16 %v363
      %v728 = vunpack.c.l.b16 %v377
      %v729 = vunpack.c.l.b16 %v387
      %v730 = vunpack.c.l.b16 %v401
      %v731 = vunpack.c.l.b16 %v411
      %v732 = vunpack.c.l.b16 %v425
      %v733 = vunpack.c.l.b16 %v435
      %v734 = vunpack.c.l.b16 %v449
      %v735 = vunpack.c.l.b16 %v459
      %v736 = vunpack.c.l.b16 %v473
      %v737 = vunpack.c.l.b16 %v483
      %v738 = vunpack.c.l.b16 %v497
      %v739 = vunpack.c.l.b16 %v507
      %v740 = vunpack.c.l.b16 %v521
      %v741 = vunpack.c.l.b16 %v531
      %v742 = vunpack.c.l.b16 %v545
      %v743 = vunpack.c.l.b16 %v555
      %v744 = vunpack.c.l.b16 %v569
      %v745 = vunpack.c.l.b16 %v579
      %v746 = vunpack.c.l.b16 %v593
      %v747 = vunpack.c.l.b16 %v603
      %v748 = vunpack.c.l.b16 %v617
      %v749 = vunpack.c.l.b16 %v627
      %v750 = vunpack.c.l.b16 %v641
      %v751 = vunpack.c.l.b16 %v651
      %v752 = vunpack.c.l.b16 %v665
      %v753 = vunpack.c.l.b16 %v675
      %v754 = vunpack.c.l.b16 %v689
      %v755 = vunpack.c.l.b16 %v699
      %v756 = vunpack.c.l.b16 %v713
      %v757 = vunpack.c.l.b16 %v723
      %v758 = vpack.c.b16 %v727, %v726
      %v759 = vpack.c.b16 %v729, %v728
      %v760 = vpack.c.b16 %v731, %v730
      %v761 = vpack.c.b16 %v733, %v732
      %v762 = vpack.c.b16 %v735, %v734
      %v763 = vpack.c.b16 %v737, %v736
      %v764 = vpack.c.b16 %v739, %v738
      %v765 = vpack.c.b16 %v741, %v740
      %v766 = vpack.c.b16 %v743, %v742
      %v767 = vpack.c.b16 %v745, %v744
      %v768 = vpack.c.b16 %v747, %v746
      %v769 = vpack.c.b16 %v749, %v748
      %v770 = vpack.c.b16 %v751, %v750
      %v771 = vpack.c.b16 %v753, %v752
      %v772 = vpack.c.b16 %v755, %v754
      %v773 = vpack.c.b16 %v757, %v756
      %vm774 = vcmask 31744
      %v776 = vsel %vm774, %v758, 0
      %v779 = vsel %vm774, %v759, 0
      %v782 = vsel %vm774, %v760, 0
      %v785 = vsel %vm774, %v761, 0
      %v788 = vsel %vm774, %v762, 0
      %v791 = vsel %vm774, %v763, 0
      %v794 = vsel %vm774, %v764, 0
      %v797 = vsel %vm774, %v765, 0
      %v800 = vsel %vm774, %v766, 0
      %v803 = vsel %vm774, %v767, 0
      %v806 = vsel %vm774, %v768, 0
      %v809 = vsel %vm774, %v769, 0
      %v812 = vsel %vm774, %v770, 0
      %v815 = vsel %vm774, %v771, 0
      %v818 = vsel %vm774, %v772, 0
      %v821 = vsel %vm774, %v773, 0
      %vm823 = vcmask 1041408
      %v825 = vsel %vm823, %v725, 0
      %827 = vmatprep.subr.bf16.mxu0 0
      %828 = vmatpush1.bf16.msra.mxu0 %v825
      %829 = vmatprep.subr.bf16.mxu0 0
      %830 = vmatpush1.bf16.msra.mxu0 0
      %831 = vmatprep.subr.bf16.mxu0 0
      %832 = vmatpush1.bf16.msra.mxu0 0
      %833 = vmatprep.subr.bf16.mxu0 0
      %834 = vmatpush1.bf16.msra.mxu0 0
      %835 = vmatprep.subr.bf16.mxu0 0
      %836 = vmatpush1.bf16.msra.mxu0 0
      %837 = vmatprep.subr.bf16.mxu0 0
      %838 = vmatpush1.bf16.msra.mxu0 0
      %839 = vmatprep.subr.bf16.mxu0 0
      %840 = vmatpush1.bf16.msra.mxu0 0
      %841 = vmatprep.subr.bf16.mxu0 0
      %842 = vmatpush1.bf16.msra.mxu0 0
      %843 = vmatprep.subr.bf16.mxu0 0
      %844 = vmatpush1.bf16.msra.mxu0 0
      %845 = vmatprep.subr.bf16.mxu0 0
      %846 = vmatpush1.bf16.msra.mxu0 0
      %847 = vmatprep.subr.bf16.mxu0 0
      %848 = vmatpush1.bf16.msra.mxu0 0
      %849 = vmatprep.subr.bf16.mxu0 0
      %850 = vmatpush1.bf16.msra.mxu0 0
      %851 = vmatprep.subr.bf16.mxu0 0
      %852 = vmatpush1.bf16.msra.mxu0 0
      %853 = vmatprep.subr.bf16.mxu0 0
      %854 = vmatpush1.bf16.msra.mxu0 0
      %855 = vmatprep.subr.bf16.mxu0 0
      %856 = vmatpush1.bf16.msra.mxu0 0
      %857 = vmatprep.subr.bf16.mxu0 0
      %858 = vmatpush1.bf16.msra.mxu0 0
      %859 = vmatprep.mubr.bf16.mxu0 0
      %860 = vmatmul.mubr.bf16.gmra.mrb[0].mxu0 %v776
      %v861 = vpop.f32.mrb[0].mxu0
      %v862 = vadd.f32 0.0, %v861
      %v863 = vpop.f32.mrb[0].mxu0
      %v864 = vpop.f32.mrb[0].mxu0
      %v865 = vadd.f32 0.0, %v864
      %v866 = vpop.f32.mrb[0].mxu0
      %867 = vmatprep.mubr.bf16.mxu0 0
      %868 = vmatmul.mubr.bf16.gmra.mrb[0].mxu0 %v779
      %v869 = vpop.f32.mrb[0].mxu0
      %v870 = vadd.f32 0.0, %v869
      %v871 = vpop.f32.mrb[0].mxu0
      %v872 = vpop.f32.mrb[0].mxu0
      %v873 = vadd.f32 0.0, %v872
      %v874 = vpop.f32.mrb[0].mxu0
      %875 = vmatprep.mubr.bf16.mxu0 0
      %876 = vmatmul.mubr.bf16.gmra.mrb[0].mxu0 %v782
      %v877 = vpop.f32.mrb[0].mxu0
      %v878 = vadd.f32 0.0, %v877
      %v879 = vpop.f32.mrb[0].mxu0
      %v880 = vpop.f32.mrb[0].mxu0
      %v881 = vadd.f32 0.0, %v880
      %v882 = vpop.f32.mrb[0].mxu0
      %883 = vmatprep.mubr.bf16.mxu0 0
      %884 = vmatmul.mubr.bf16.gmra.mrb[0].mxu0 %v785
      %v885 = vpop.f32.mrb[0].mxu0
      %v886 = vadd.f32 0.0, %v885
      %v887 = vpop.f32.mrb[0].mxu0
      %v888 = vpop.f32.mrb[0].mxu0
      %v889 = vadd.f32 0.0, %v888
      %v890 = vpop.f32.mrb[0].mxu0
      %891 = vmatprep.mubr.bf16.mxu0 0
      %892 = vmatmul.mubr.bf16.gmra.mrb[0].mxu0 %v788
      %v893 = vpop.f32.mrb[0].mxu0
      %v894 = vadd.f32 0.0, %v893
      %v895 = vpop.f32.mrb[0].mxu0
      %v896 = vpop.f32.mrb[0].mxu0
      %v897 = vadd.f32 0.0, %v896
      %v898 = vpop.f32.mrb[0].mxu0
      %899 = vmatprep.mubr.bf16.mxu0 0
      %900 = vmatmul.mubr.bf16.gmra.mrb[0].mxu0 %v791
      %v901 = vpop.f32.mrb[0].mxu0
      %v902 = vadd.f32 0.0, %v901
      %v903 = vpop.f32.mrb[0].mxu0
      %v904 = vpop.f32.mrb[0].mxu0
      %v905 = vadd.f32 0.0, %v904
      %v906 = vpop.f32.mrb[0].mxu0
      %907 = vmatprep.mubr.bf16.mxu0 0
      %908 = vmatmul.mubr.bf16.gmra.mrb[0].mxu0 %v794
      %v909 = vpop.f32.mrb[0].mxu0
      %v910 = vadd.f32 0.0, %v909
      %v911 = vpop.f32.mrb[0].mxu0
      %v912 = vpop.f32.mrb[0].mxu0
      %v913 = vadd.f32 0.0, %v912
      %v914 = vpop.f32.mrb[0].mxu0
      %915 = vmatprep.mubr.bf16.mxu0 0
      %916 = vmatmul.mubr.bf16.gmra.mrb[0].mxu0 %v797
      %v917 = vpop.f32.mrb[0].mxu0
      %v918 = vadd.f32 0.0, %v917
      %v919 = vpop.f32.mrb[0].mxu0
      %v920 = vpop.f32.mrb[0].mxu0
      %v921 = vadd.f32 0.0, %v920
      %v922 = vpop.f32.mrb[0].mxu0
      %923 = vmatprep.mubr.bf16.mxu0 0
      %924 = vmatmul.mubr.bf16.gmra.mrb[0].mxu0 %v800
      %v925 = vpop.f32.mrb[0].mxu0
      %v926 = vadd.f32 0.0, %v925
      %v927 = vpop.f32.mrb[0].mxu0
      %v928 = vpop.f32.mrb[0].mxu0
      %v929 = vadd.f32 0.0, %v928
      %v930 = vpop.f32.mrb[0].mxu0
      %931 = vmatprep.mubr.bf16.mxu0 0
      %932 = vmatmul.mubr.bf16.gmra.mrb[0].mxu0 %v803
      %v933 = vpop.f32.mrb[0].mxu0
      %v934 = vadd.f32 0.0, %v933
      %v935 = vpop.f32.mrb[0].mxu0
      %v936 = vpop.f32.mrb[0].mxu0
      %v937 = vadd.f32 0.0, %v936
      %v938 = vpop.f32.mrb[0].mxu0
      %939 = vmatprep.mubr.bf16.mxu0 0
      %940 = vmatmul.mubr.bf16.gmra.mrb[0].mxu0 %v806
      %v941 = vpop.f32.mrb[0].mxu0
      %v942 = vadd.f32 0.0, %v941
      %v943 = vpop.f32.mrb[0].mxu0
      %v944 = vpop.f32.mrb[0].mxu0
      %v945 = vadd.f32 0.0, %v944
      %v946 = vpop.f32.mrb[0].mxu0
      %947 = vmatprep.mubr.bf16.mxu0 0
      %948 = vmatmul.mubr.bf16.gmra.mrb[0].mxu0 %v809
      %v949 = vpop.f32.mrb[0].mxu0
      %v950 = vadd.f32 0.0, %v949
      %v951 = vpop.f32.mrb[0].mxu0
      %v952 = vpop.f32.mrb[0].mxu0
      %v953 = vadd.f32 0.0, %v952
      %v954 = vpop.f32.mrb[0].mxu0
      %955 = vmatprep.mubr.bf16.mxu0 0
      %956 = vmatmul.mubr.bf16.gmra.mrb[0].mxu0 %v812
      %v957 = vpop.f32.mrb[0].mxu0
      %v958 = vadd.f32 0.0, %v957
      %v959 = vpop.f32.mrb[0].mxu0
      %v960 = vpop.f32.mrb[0].mxu0
      %v961 = vadd.f32 0.0, %v960
      %v962 = vpop.f32.mrb[0].mxu0
      %963 = vmatprep.mubr.bf16.mxu0 0
      %964 = vmatmul.mubr.bf16.gmra.mrb[0].mxu0 %v815
      %v965 = vpop.f32.mrb[0].mxu0
      %v966 = vadd.f32 0.0, %v965
      %v967 = vpop.f32.mrb[0].mxu0
      %v968 = vpop.f32.mrb[0].mxu0
      %v969 = vadd.f32 0.0, %v968
      %v970 = vpop.f32.mrb[0].mxu0
      %971 = vmatprep.mubr.bf16.mxu0 0
      %972 = vmatmul.mubr.bf16.gmra.mrb[0].mxu0 %v818
      %v973 = vpop.f32.mrb[0].mxu0
      %v974 = vadd.f32 0.0, %v973
      %v975 = vpop.f32.mrb[0].mxu0
      %v976 = vpop.f32.mrb[0].mxu0
      %v977 = vadd.f32 0.0, %v976
      %v978 = vpop.f32.mrb[0].mxu0
      %979 = vmatprep.mubr.bf16.mxu0 0
      %980 = vmatmul.mubr.bf16.gmra.mrb[0].mxu0 %v821
      %v981 = vpop.f32.mrb[0].mxu0
      %v982 = vadd.f32 0.0, %v981
      %v983 = vpop.f32.mrb[0].mxu0
      %v984 = vpop.f32.mrb[0].mxu0
      %v985 = vadd.f32 0.0, %v984
      %v986 = vpop.f32.mrb[0].mxu0
      %987 = vdwg.mxu0
      %v1020 = vunpack.c.l.b16 %v288
      %v1021 = vunpack.c.l.b16 %v289
      %v1022 = vunpack.c.l.b16 %v290
      %v1023 = vunpack.c.l.b16 %v291
      %v1024 = vunpack.c.l.b16 %v292
      %v1025 = vunpack.c.l.b16 %v293
      %v1026 = vunpack.c.l.b16 %v294
      %v1027 = vunpack.c.l.b16 %v295
      %v1028 = vunpack.c.l.b16 %v296
      %v1029 = vunpack.c.l.b16 %v297
      %v1030 = vunpack.c.l.b16 %v298
      %v1031 = vunpack.c.l.b16 %v299
      %v1032 = vunpack.c.l.b16 %v300
      %v1033 = vunpack.c.l.b16 %v301
      %v1034 = vunpack.c.l.b16 %v302
      %v1035 = vunpack.c.l.b16 %v303
      %v1036 = vunpack.c.l.b16 %v304
      %v1037 = vunpack.c.l.b16 %v305
      %v1038 = vunpack.c.l.b16 %v306
      %v1039 = vunpack.c.l.b16 %v307
      %v1040 = vunpack.c.l.b16 %v308
      %v1041 = vunpack.c.l.b16 %v309
      %v1042 = vunpack.c.l.b16 %v310
      %v1043 = vunpack.c.l.b16 %v311
      %v1044 = vunpack.c.l.b16 %v312
      %v1045 = vunpack.c.l.b16 %v313
      %v1046 = vunpack.c.l.b16 %v314
      %v1047 = vunpack.c.l.b16 %v315
      %v1048 = vunpack.c.l.b16 %v316
      %v1049 = vunpack.c.l.b16 %v317
      %v1050 = vunpack.c.l.b16 %v318
      %v1051 = vunpack.c.l.b16 %v319
      %v1052 = vpack.c.b16 %v1021, %v1020
      %v1053 = vpack.c.b16 %v1023, %v1022
      %v1054 = vpack.c.b16 %v1025, %v1024
      %v1055 = vpack.c.b16 %v1027, %v1026
      %v1056 = vpack.c.b16 %v1029, %v1028
      %v1057 = vpack.c.b16 %v1031, %v1030
      %v1058 = vpack.c.b16 %v1033, %v1032
      %v1059 = vpack.c.b16 %v1035, %v1034
      %v1060 = vpack.c.b16 %v1037, %v1036
      %v1061 = vpack.c.b16 %v1039, %v1038
      %v1062 = vpack.c.b16 %v1041, %v1040
      %v1063 = vpack.c.b16 %v1043, %v1042
      %v1064 = vpack.c.b16 %v1045, %v1044
      %v1065 = vpack.c.b16 %v1047, %v1046
      %v1066 = vpack.c.b16 %v1049, %v1048
      %v1067 = vpack.c.b16 %v1051, %v1050
      %v1069 = vsel %vm774, %v1052, 0
      %v1072 = vsel %vm774, %v1053, 0
      %v1075 = vsel %vm774, %v1054, 0
      %v1078 = vsel %vm774, %v1055, 0
      %v1081 = vsel %vm774, %v1056, 0
      %v1084 = vsel %vm774, %v1057, 0
      %v1087 = vsel %vm774, %v1058, 0
      %v1090 = vsel %vm774, %v1059, 0
      %v1093 = vsel %vm774, %v1060, 0
      %v1096 = vsel %vm774, %v1061, 0
      %v1099 = vsel %vm774, %v1062, 0
      %v1102 = vsel %vm774, %v1063, 0
      %v1105 = vsel %vm774, %v1064, 0
      %v1108 = vsel %vm774, %v1065, 0
      %v1111 = vsel %vm774, %v1066, 0
      %v1114 = vsel %vm774, %v1067, 0
      %v1117 = vsel %vm823, %v320, 0
      %1119 = vmatprep.subr.bf16.mxu0 0
      %1120 = vmatpush1.bf16.msra.mxu0 %v1117
      %1121 = vmatprep.subr.bf16.mxu0 0
      %1122 = vmatpush1.bf16.msra.mxu0 0
      %1123 = vmatprep.subr.bf16.mxu0 0
      %1124 = vmatpush1.bf16.msra.mxu0 0
      %1125 = vmatprep.subr.bf16.mxu0 0
      %1126 = vmatpush1.bf16.msra.mxu0 0
      %1127 = vmatprep.subr.bf16.mxu0 0
      %1128 = vmatpush1.bf16.msra.mxu0 0
      %1129 = vmatprep.subr.bf16.mxu0 0
      %1130 = vmatpush1.bf16.msra.mxu0 0
      %1131 = vmatprep.subr.bf16.mxu0 0
      %1132 = vmatpush1.bf16.msra.mxu0 0
      %1133 = vmatprep.subr.bf16.mxu0 0
      %1134 = vmatpush1.bf16.msra.mxu0 0
      %1135 = vmatprep.subr.bf16.mxu0 0
      %1136 = vmatpush1.bf16.msra.mxu0 0
      %1137 = vmatprep.subr.bf16.mxu0 0
      %1138 = vmatpush1.bf16.msra.mxu0 0
      %1139 = vmatprep.subr.bf16.mxu0 0
      %1140 = vmatpush1.bf16.msra.mxu0 0
      %1141 = vmatprep.subr.bf16.mxu0 0
      %1142 = vmatpush1.bf16.msra.mxu0 0
      %1143 = vmatprep.subr.bf16.mxu0 0
      %1144 = vmatpush1.bf16.msra.mxu0 0
      %1145 = vmatprep.subr.bf16.mxu0 0
      %1146 = vmatpush1.bf16.msra.mxu0 0
      %1147 = vmatprep.subr.bf16.mxu0 0
      %1148 = vmatpush1.bf16.msra.mxu0 0
      %1149 = vmatprep.subr.bf16.mxu0 0
      %1150 = vmatpush1.bf16.msra.mxu0 0
      %1151 = vmatprep.mubr.bf16.mxu0 0
      %1152 = vmatmul.mubr.bf16.gmra.mrb[0].mxu0 %v1069
      %v1153 = vpop.f32.mrb[0].mxu0
      %v1154 = vadd.f32 %v862, %v1153
      %v1155 = vpop.f32.mrb[0].mxu0
      %v1156 = vpop.f32.mrb[0].mxu0
      %v1157 = vadd.f32 %v865, %v1156
      %v1158 = vpop.f32.mrb[0].mxu0
      %1159 = vmatprep.mubr.bf16.mxu0 0
      %1160 = vmatmul.mubr.bf16.gmra.mrb[0].mxu0 %v1072
      %v1161 = vpop.f32.mrb[0].mxu0
      %v1162 = vadd.f32 %v870, %v1161
      %v1163 = vpop.f32.mrb[0].mxu0
      %v1164 = vpop.f32.mrb[0].mxu0
      %v1165 = vadd.f32 %v873, %v1164
      %v1166 = vpop.f32.mrb[0].mxu0
      %1167 = vmatprep.mubr.bf16.mxu0 0
      %1168 = vmatmul.mubr.bf16.gmra.mrb[0].mxu0 %v1075
      %v1169 = vpop.f32.mrb[0].mxu0
      %v1170 = vadd.f32 %v878, %v1169
      %v1171 = vpop.f32.mrb[0].mxu0
      %v1172 = vpop.f32.mrb[0].mxu0
      %v1173 = vadd.f32 %v881, %v1172
      %v1174 = vpop.f32.mrb[0].mxu0
      %1175 = vmatprep.mubr.bf16.mxu0 0
      %1176 = vmatmul.mubr.bf16.gmra.mrb[0].mxu0 %v1078
      %v1177 = vpop.f32.mrb[0].mxu0
      %v1178 = vadd.f32 %v886, %v1177
      %v1179 = vpop.f32.mrb[0].mxu0
      %v1180 = vpop.f32.mrb[0].mxu0
      %v1181 = vadd.f32 %v889, %v1180
      %v1182 = vpop.f32.mrb[0].mxu0
      %1183 = vmatprep.mubr.bf16.mxu0 0
      %1184 = vmatmul.mubr.bf16.gmra.mrb[0].mxu0 %v1081
      %v1185 = vpop.f32.mrb[0].mxu0
      %v1186 = vadd.f32 %v894, %v1185
      %v1187 = vpop.f32.mrb[0].mxu0
      %v1188 = vpop.f32.mrb[0].mxu0
      %v1189 = vadd.f32 %v897, %v1188
      %v1190 = vpop.f32.mrb[0].mxu0
      %1191 = vmatprep.mubr.bf16.mxu0 0
      %1192 = vmatmul.mubr.bf16.gmra.mrb[0].mxu0 %v1084
      %v1193 = vpop.f32.mrb[0].mxu0
      %v1194 = vadd.f32 %v902, %v1193
      %v1195 = vpop.f32.mrb[0].mxu0
      %v1196 = vpop.f32.mrb[0].mxu0
      %v1197 = vadd.f32 %v905, %v1196
      %v1198 = vpop.f32.mrb[0].mxu0
      %1199 = vmatprep.mubr.bf16.mxu0 0
      %1200 = vmatmul.mubr.bf16.gmra.mrb[0].mxu0 %v1087
      %v1201 = vpop.f32.mrb[0].mxu0
      %v1202 = vadd.f32 %v910, %v1201
      %v1203 = vpop.f32.mrb[0].mxu0
      %v1204 = vpop.f32.mrb[0].mxu0
      %v1205 = vadd.f32 %v913, %v1204
      %v1206 = vpop.f32.mrb[0].mxu0
      %1207 = vmatprep.mubr.bf16.mxu0 0
      %1208 = vmatmul.mubr.bf16.gmra.mrb[0].mxu0 %v1090
      %v1209 = vpop.f32.mrb[0].mxu0
      %v1210 = vadd.f32 %v918, %v1209
      %v1211 = vpop.f32.mrb[0].mxu0
      %v1212 = vpop.f32.mrb[0].mxu0
      %v1213 = vadd.f32 %v921, %v1212
      %v1214 = vpop.f32.mrb[0].mxu0
      %1215 = vmatprep.mubr.bf16.mxu0 0
      %1216 = vmatmul.mubr.bf16.gmra.mrb[0].mxu0 %v1093
      %v1217 = vpop.f32.mrb[0].mxu0
      %v1218 = vadd.f32 %v926, %v1217
      %v1219 = vpop.f32.mrb[0].mxu0
      %v1220 = vpop.f32.mrb[0].mxu0
      %v1221 = vadd.f32 %v929, %v1220
      %v1222 = vpop.f32.mrb[0].mxu0
      %1223 = vmatprep.mubr.bf16.mxu0 0
      %1224 = vmatmul.mubr.bf16.gmra.mrb[0].mxu0 %v1096
      %v1225 = vpop.f32.mrb[0].mxu0
      %v1226 = vadd.f32 %v934, %v1225
      %v1227 = vpop.f32.mrb[0].mxu0
      %v1228 = vpop.f32.mrb[0].mxu0
      %v1229 = vadd.f32 %v937, %v1228
      %v1230 = vpop.f32.mrb[0].mxu0
      %1231 = vmatprep.mubr.bf16.mxu0 0
      %1232 = vmatmul.mubr.bf16.gmra.mrb[0].mxu0 %v1099
      %v1233 = vpop.f32.mrb[0].mxu0
      %v1234 = vadd.f32 %v942, %v1233
      %v1235 = vpop.f32.mrb[0].mxu0
      %v1236 = vpop.f32.mrb[0].mxu0
      %v1237 = vadd.f32 %v945, %v1236
      %v1238 = vpop.f32.mrb[0].mxu0
      %1239 = vmatprep.mubr.bf16.mxu0 0
      %1240 = vmatmul.mubr.bf16.gmra.mrb[0].mxu0 %v1102
      %v1241 = vpop.f32.mrb[0].mxu0
      %v1242 = vadd.f32 %v950, %v1241
      %v1243 = vpop.f32.mrb[0].mxu0
      %v1244 = vpop.f32.mrb[0].mxu0
      %v1245 = vadd.f32 %v953, %v1244
      %v1246 = vpop.f32.mrb[0].mxu0
      %1247 = vmatprep.mubr.bf16.mxu0 0
      %1248 = vmatmul.mubr.bf16.gmra.mrb[0].mxu0 %v1105
      %v1249 = vpop.f32.mrb[0].mxu0
      %v1250 = vadd.f32 %v958, %v1249
      %v1251 = vpop.f32.mrb[0].mxu0
      %v1252 = vpop.f32.mrb[0].mxu0
      %v1253 = vadd.f32 %v961, %v1252
      %v1254 = vpop.f32.mrb[0].mxu0
      %1255 = vmatprep.mubr.bf16.mxu0 0
      %1256 = vmatmul.mubr.bf16.gmra.mrb[0].mxu0 %v1108
      %v1257 = vpop.f32.mrb[0].mxu0
      %v1258 = vadd.f32 %v966, %v1257
      %v1259 = vpop.f32.mrb[0].mxu0
      %v1260 = vpop.f32.mrb[0].mxu0
      %v1261 = vadd.f32 %v969, %v1260
      %v1262 = vpop.f32.mrb[0].mxu0
      %1263 = vmatprep.mubr.bf16.mxu0 0
      %1264 = vmatmul.mubr.bf16.gmra.mrb[0].mxu0 %v1111
      %v1265 = vpop.f32.mrb[0].mxu0
      %v1266 = vadd.f32 %v974, %v1265
      %v1267 = vpop.f32.mrb[0].mxu0
      %v1268 = vpop.f32.mrb[0].mxu0
      %v1269 = vadd.f32 %v977, %v1268
      %v1270 = vpop.f32.mrb[0].mxu0
      %1271 = vmatprep.mubr.bf16.mxu0 0
      %1272 = vmatmul.mubr.bf16.gmra.mrb[0].mxu0 %v1114
      %v1273 = vpop.f32.mrb[0].mxu0
      %v1274 = vadd.f32 %v982, %v1273
      %v1275 = vpop.f32.mrb[0].mxu0
      %v1276 = vpop.f32.mrb[0].mxu0
      %v1277 = vadd.f32 %v985, %v1276
      %v1278 = vpop.f32.mrb[0].mxu0
      %1279 = vdwg.mxu0
      %v1280 = vld [vmem:[%s287] sm:$0xe]
      %v1281 = vld [vmem:[%s287 + $0xc] sm:$0xe]
      %v1282 = vld [vmem:[%s287 + $0x18] sm:$0xe]
      %v1283 = vld [vmem:[%s287 + $0x24] sm:$0xe]
      %v1284 = vld [vmem:[%s287 + $0x30] sm:$0xe]
      %v1285 = vld [vmem:[%s287 + $0x3c] sm:$0xe]
      %v1286 = vld [vmem:[%s287 + $0x48] sm:$0xe]
      %v1287 = vld [vmem:[%s287 + $0x54] sm:$0xe]
      %v1288 = vld [vmem:[%s287 + $0x60] sm:$0xe]
      %v1289 = vld [vmem:[%s287 + $0x6c] sm:$0xe]
      %v1290 = vld [vmem:[%s287 + $0x78] sm:$0xe]
      %v1291 = vld [vmem:[%s287 + $0x84] sm:$0xe]
      %v1292 = vld [vmem:[%s287 + $0x90] sm:$0xe]
      %v1293 = vld [vmem:[%s287 + $0x9c] sm:$0xe]
      %v1294 = vld [vmem:[%s287 + $0xa8] sm:$0xe]
      %v1295 = vld [vmem:[%s287 + $0xb4] sm:$0xe]
      %vm1328 = vcmask 1042432
      %vm1329 = vcmask 1046532
      %vm1330 = vmor %vm1328, %vm1329
      %v1331 = vrot.slane %v1280, 5
      %v1332 = vrot.slane %v1331, 4
      %v1333 = vrot.slane %v289, 5
      %v1334 = vsel %vm1330, %v1332, %v1333
      %v1335 = vrot.slane %v1333, 4
      %v1336 = vrot.slane %v321, 5
      %v1337 = vsel %vm1330, %v1335, %v1336
      %v1338 = vrot.slane %v1281, 5
      %v1339 = vrot.slane %v1338, 4
      %v1340 = vrot.slane %v291, 5
      %v1341 = vsel %vm1330, %v1339, %v1340
      %v1342 = vrot.slane %v1340, 4
      %v1343 = vrot.slane %v322, 5
      %v1344 = vsel %vm1330, %v1342, %v1343
      %v1345 = vrot.slane %v1282, 5
      %v1346 = vrot.slane %v1345, 4
      %v1347 = vrot.slane %v293, 5
      %v1348 = vsel %vm1330, %v1346, %v1347
      %v1349 = vrot.slane %v1347, 4
      %v1350 = vrot.slane %v323, 5
      %v1351 = vsel %vm1330, %v1349, %v1350
      %v1352 = vrot.slane %v1283, 5
      %v1353 = vrot.slane %v1352, 4
      %v1354 = vrot.slane %v295, 5
      %v1355 = vsel %vm1330, %v1353, %v1354
      %v1356 = vrot.slane %v1354, 4
      %v1357 = vrot.slane %v324, 5
      %v1358 = vsel %vm1330, %v1356, %v1357
      %v1359 = vrot.slane %v1284, 5
      %v1360 = vrot.slane %v1359, 4
      %v1361 = vrot.slane %v297, 5
      %v1362 = vsel %vm1330, %v1360, %v1361
      %v1363 = vrot.slane %v1361, 4
      %v1364 = vrot.slane %v325, 5
      %v1365 = vsel %vm1330, %v1363, %v1364
      %v1366 = vrot.slane %v1285, 5
      %v1367 = vrot.slane %v1366, 4
      %v1368 = vrot.slane %v299, 5
      %v1369 = vsel %vm1330, %v1367, %v1368
      %v1370 = vrot.slane %v1368, 4
      %v1371 = vrot.slane %v326, 5
      %v1372 = vsel %vm1330, %v1370, %v1371
      %v1373 = vrot.slane %v1286, 5
      %v1374 = vrot.slane %v1373, 4
      %v1375 = vrot.slane %v301, 5
      %v1376 = vsel %vm1330, %v1374, %v1375
      %v1377 = vrot.slane %v1375, 4
      %v1378 = vrot.slane %v327, 5
      %v1379 = vsel %vm1330, %v1377, %v1378
      %v1380 = vrot.slane %v1287, 5
      %v1381 = vrot.slane %v1380, 4
      %v1382 = vrot.slane %v303, 5
      %v1383 = vsel %vm1330, %v1381, %v1382
      %v1384 = vrot.slane %v1382, 4
      %v1385 = vrot.slane %v328, 5
      %v1386 = vsel %vm1330, %v1384, %v1385
      %v1387 = vrot.slane %v1288, 5
      %v1388 = vrot.slane %v1387, 4
      %v1389 = vrot.slane %v305, 5
      %v1390 = vsel %vm1330, %v1388, %v1389
      %v1391 = vrot.slane %v1389, 4
      %v1392 = vrot.slane %v329, 5
      %v1393 = vsel %vm1330, %v1391, %v1392
      %v1394 = vrot.slane %v1289, 5
      %v1395 = vrot.slane %v1394, 4
      %v1396 = vrot.slane %v307, 5
      %v1397 = vsel %vm1330, %v1395, %v1396
      %v1398 = vrot.slane %v1396, 4
      %v1399 = vrot.slane %v330, 5
      %v1400 = vsel %vm1330, %v1398, %v1399
      %v1401 = vrot.slane %v1290, 5
      %v1402 = vrot.slane %v1401, 4
      %v1403 = vrot.slane %v309, 5
      %v1404 = vsel %vm1330, %v1402, %v1403
      %v1405 = vrot.slane %v1403, 4
      %v1406 = vrot.slane %v331, 5
      %v1407 = vsel %vm1330, %v1405, %v1406
      %v1408 = vrot.slane %v1291, 5
      %v1409 = vrot.slane %v1408, 4
      %v1410 = vrot.slane %v311, 5
      %v1411 = vsel %vm1330, %v1409, %v1410
      %v1412 = vrot.slane %v1410, 4
      %v1413 = vrot.slane %v332, 5
      %v1414 = vsel %vm1330, %v1412, %v1413
      %v1415 = vrot.slane %v1292, 5
      %v1416 = vrot.slane %v1415, 4
      %v1417 = vrot.slane %v313, 5
      %v1418 = vsel %vm1330, %v1416, %v1417
      %v1419 = vrot.slane %v1417, 4
      %v1420 = vrot.slane %v333, 5
      %v1421 = vsel %vm1330, %v1419, %v1420
      %v1422 = vrot.slane %v1293, 5
      %v1423 = vrot.slane %v1422, 4
      %v1424 = vrot.slane %v315, 5
      %v1425 = vsel %vm1330, %v1423, %v1424
      %v1426 = vrot.slane %v1424, 4
      %v1427 = vrot.slane %v334, 5
      %v1428 = vsel %vm1330, %v1426, %v1427
      %v1429 = vrot.slane %v1294, 5
      %v1430 = vrot.slane %v1429, 4
      %v1431 = vrot.slane %v317, 5
      %v1432 = vsel %vm1330, %v1430, %v1431
      %v1433 = vrot.slane %v1431, 4
      %v1434 = vrot.slane %v335, 5
      %v1435 = vsel %vm1330, %v1433, %v1434
      %v1436 = vrot.slane %v1295, 5
      %v1437 = vrot.slane %v1436, 4
      %v1438 = vrot.slane %v319, 5
      %v1439 = vsel %vm1330, %v1437, %v1438
      %v1440 = vrot.slane %v1438, 4
      %v1441 = vrot.slane %v336, 5
      %v1442 = vsel %vm1330, %v1440, %v1441
      %s1443 = scalar_lea.vmem %s262, 4
      %v1444 = vld [vmem:[%s1443] sm:$0x3]
      %v1445 = vunpack.c.l.b16 %v1334
      %v1446 = vunpack.c.l.b16 %v1337
      %v1447 = vunpack.c.l.b16 %v1341
      %v1448 = vunpack.c.l.b16 %v1344
      %v1449 = vunpack.c.l.b16 %v1348
      %v1450 = vunpack.c.l.b16 %v1351
      %v1451 = vunpack.c.l.b16 %v1355
      %v1452 = vunpack.c.l.b16 %v1358
      %v1453 = vunpack.c.l.b16 %v1362
      %v1454 = vunpack.c.l.b16 %v1365
      %v1455 = vunpack.c.l.b16 %v1369
      %v1456 = vunpack.c.l.b16 %v1372
      %v1457 = vunpack.c.l.b16 %v1376
      %v1458 = vunpack.c.l.b16 %v1379
      %v1459 = vunpack.c.l.b16 %v1383
      %v1460 = vunpack.c.l.b16 %v1386
      %v1461 = vunpack.c.l.b16 %v1390
      %v1462 = vunpack.c.l.b16 %v1393
      %v1463 = vunpack.c.l.b16 %v1397
      %v1464 = vunpack.c.l.b16 %v1400
      %v1465 = vunpack.c.l.b16 %v1404
      %v1466 = vunpack.c.l.b16 %v1407
      %v1467 = vunpack.c.l.b16 %v1411
      %v1468 = vunpack.c.l.b16 %v1414
      %v1469 = vunpack.c.l.b16 %v1418
      %v1470 = vunpack.c.l.b16 %v1421
      %v1471 = vunpack.c.l.b16 %v1425
      %v1472 = vunpack.c.l.b16 %v1428
      %v1473 = vunpack.c.l.b16 %v1432
      %v1474 = vunpack.c.l.b16 %v1435
      %v1475 = vunpack.c.l.b16 %v1439
      %v1476 = vunpack.c.l.b16 %v1442
      %v1477 = vpack.c.b16 %v1446, %v1445
      %v1478 = vpack.c.b16 %v1448, %v1447
      %v1479 = vpack.c.b16 %v1450, %v1449
      %v1480 = vpack.c.b16 %v1452, %v1451
      %v1481 = vpack.c.b16 %v1454, %v1453
      %v1482 = vpack.c.b16 %v1456, %v1455
      %v1483 = vpack.c.b16 %v1458, %v1457
      %v1484 = vpack.c.b16 %v1460, %v1459
      %v1485 = vpack.c.b16 %v1462, %v1461
      %v1486 = vpack.c.b16 %v1464, %v1463
      %v1487 = vpack.c.b16 %v1466, %v1465
      %v1488 = vpack.c.b16 %v1468, %v1467
      %v1489 = vpack.c.b16 %v1470, %v1469
      %v1490 = vpack.c.b16 %v1472, %v1471
      %v1491 = vpack.c.b16 %v1474, %v1473
      %v1492 = vpack.c.b16 %v1476, %v1475
      %v1494 = vsel %vm774, %v1477, 0
      %v1497 = vsel %vm774, %v1478, 0
      %v1500 = vsel %vm774, %v1479, 0
      %v1503 = vsel %vm774, %v1480, 0
      %v1506 = vsel %vm774, %v1481, 0
      %v1509 = vsel %vm774, %v1482, 0
      %v1512 = vsel %vm774, %v1483, 0
      %v1515 = vsel %vm774, %v1484, 0
      %v1518 = vsel %vm774, %v1485, 0
      %v1521 = vsel %vm774, %v1486, 0
      %v1524 = vsel %vm774, %v1487, 0
      %v1527 = vsel %vm774, %v1488, 0
      %v1530 = vsel %vm774, %v1489, 0
      %v1533 = vsel %vm774, %v1490, 0
      %v1536 = vsel %vm774, %v1491, 0
      %v1539 = vsel %vm774, %v1492, 0
      %v1542 = vsel %vm823, %v1444, 0
      %1544 = vmatprep.subr.bf16.mxu0 0
      %1545 = vmatpush1.bf16.msra.mxu0 %v1542
      %1546 = vmatprep.subr.bf16.mxu0 0
      %1547 = vmatpush1.bf16.msra.mxu0 0
      %1548 = vmatprep.subr.bf16.mxu0 0
      %1549 = vmatpush1.bf16.msra.mxu0 0
      %1550 = vmatprep.subr.bf16.mxu0 0
      %1551 = vmatpush1.bf16.msra.mxu0 0
      %1552 = vmatprep.subr.bf16.mxu0 0
      %1553 = vmatpush1.bf16.msra.mxu0 0
      %1554 = vmatprep.subr.bf16.mxu0 0
      %1555 = vmatpush1.bf16.msra.mxu0 0
      %1556 = vmatprep.subr.bf16.mxu0 0
      %1557 = vmatpush1.bf16.msra.mxu0 0
      %1558 = vmatprep.subr.bf16.mxu0 0
      %1559 = vmatpush1.bf16.msra.mxu0 0
      %1560 = vmatprep.subr.bf16.mxu0 0
      %1561 = vmatpush1.bf16.msra.mxu0 0
      %1562 = vmatprep.subr.bf16.mxu0 0
      %1563 = vmatpush1.bf16.msra.mxu0 0
      %1564 = vmatprep.subr.bf16.mxu0 0
      %1565 = vmatpush1.bf16.msra.mxu0 0
      %1566 = vmatprep.subr.bf16.mxu0 0
      %1567 = vmatpush1.bf16.msra.mxu0 0
      %1568 = vmatprep.subr.bf16.mxu0 0
      %1569 = vmatpush1.bf16.msra.mxu0 0
      %1570 = vmatprep.subr.bf16.mxu0 0
      %1571 = vmatpush1.bf16.msra.mxu0 0
      %1572 = vmatprep.subr.bf16.mxu0 0
      %1573 = vmatpush1.bf16.msra.mxu0 0
      %1574 = vmatprep.subr.bf16.mxu0 0
      %1575 = vmatpush1.bf16.msra.mxu0 0
      %1576 = vmatprep.mubr.bf16.mxu0 0
      %1577 = vmatmul.mubr.bf16.gmra.mrb[0].mxu0 %v1494
      %v1578 = vpop.f32.mrb[0].mxu0
      %v1579 = vadd.f32 0.0, %v1578
      %v1580 = vpop.f32.mrb[0].mxu0
      %v1581 = vpop.f32.mrb[0].mxu0
      %v1582 = vadd.f32 0.0, %v1581
      %v1583 = vpop.f32.mrb[0].mxu0
      %1584 = vmatprep.mubr.bf16.mxu0 0
      %1585 = vmatmul.mubr.bf16.gmra.mrb[0].mxu0 %v1497
      %v1586 = vpop.f32.mrb[0].mxu0
      %v1587 = vadd.f32 0.0, %v1586
      %v1588 = vpop.f32.mrb[0].mxu0
      %v1589 = vpop.f32.mrb[0].mxu0
      %v1590 = vadd.f32 0.0, %v1589
      %v1591 = vpop.f32.mrb[0].mxu0
      %1592 = vmatprep.mubr.bf16.mxu0 0
      %1593 = vmatmul.mubr.bf16.gmra.mrb[0].mxu0 %v1500
      %v1594 = vpop.f32.mrb[0].mxu0
      %v1595 = vadd.f32 0.0, %v1594
      %v1596 = vpop.f32.mrb[0].mxu0
      %v1597 = vpop.f32.mrb[0].mxu0
      %v1598 = vadd.f32 0.0, %v1597
      %v1599 = vpop.f32.mrb[0].mxu0
      %1600 = vmatprep.mubr.bf16.mxu0 0
      %1601 = vmatmul.mubr.bf16.gmra.mrb[0].mxu0 %v1503
      %v1602 = vpop.f32.mrb[0].mxu0
      %v1603 = vadd.f32 0.0, %v1602
      %v1604 = vpop.f32.mrb[0].mxu0
      %v1605 = vpop.f32.mrb[0].mxu0
      %v1606 = vadd.f32 0.0, %v1605
      %v1607 = vpop.f32.mrb[0].mxu0
      %1608 = vmatprep.mubr.bf16.mxu0 0
      %1609 = vmatmul.mubr.bf16.gmra.mrb[0].mxu0 %v1506
      %v1610 = vpop.f32.mrb[0].mxu0
      %v1611 = vadd.f32 0.0, %v1610
      %v1612 = vpop.f32.mrb[0].mxu0
      %v1613 = vpop.f32.mrb[0].mxu0
      %v1614 = vadd.f32 0.0, %v1613
      %v1615 = vpop.f32.mrb[0].mxu0
      %1616 = vmatprep.mubr.bf16.mxu0 0
      %1617 = vmatmul.mubr.bf16.gmra.mrb[0].mxu0 %v1509
      %v1618 = vpop.f32.mrb[0].mxu0
      %v1619 = vadd.f32 0.0, %v1618
      %v1620 = vpop.f32.mrb[0].mxu0
      %v1621 = vpop.f32.mrb[0].mxu0
      %v1622 = vadd.f32 0.0, %v1621
      %v1623 = vpop.f32.mrb[0].mxu0
      %1624 = vmatprep.mubr.bf16.mxu0 0
      %1625 = vmatmul.mubr.bf16.gmra.mrb[0].mxu0 %v1512
      %v1626 = vpop.f32.mrb[0].mxu0
      %v1627 = vadd.f32 0.0, %v1626
      %v1628 = vpop.f32.mrb[0].mxu0
      %v1629 = vpop.f32.mrb[0].mxu0
      %v1630 = vadd.f32 0.0, %v1629
      %v1631 = vpop.f32.mrb[0].mxu0
      %1632 = vmatprep.mubr.bf16.mxu0 0
      %1633 = vmatmul.mubr.bf16.gmra.mrb[0].mxu0 %v1515
      %v1634 = vpop.f32.mrb[0].mxu0
      %v1635 = vadd.f32 0.0, %v1634
      %v1636 = vpop.f32.mrb[0].mxu0
      %v1637 = vpop.f32.mrb[0].mxu0
      %v1638 = vadd.f32 0.0, %v1637
      %v1639 = vpop.f32.mrb[0].mxu0
      %1640 = vmatprep.mubr.bf16.mxu0 0
      %1641 = vmatmul.mubr.bf16.gmra.mrb[0].mxu0 %v1518
      %v1642 = vpop.f32.mrb[0].mxu0
      %v1643 = vadd.f32 0.0, %v1642
      %v1644 = vpop.f32.mrb[0].mxu0
      %v1645 = vpop.f32.mrb[0].mxu0
      %v1646 = vadd.f32 0.0, %v1645
      %v1647 = vpop.f32.mrb[0].mxu0
      %1648 = vmatprep.mubr.bf16.mxu0 0
      %1649 = vmatmul.mubr.bf16.gmra.mrb[0].mxu0 %v1521
      %v1650 = vpop.f32.mrb[0].mxu0
      %v1651 = vadd.f32 0.0, %v1650
      %v1652 = vpop.f32.mrb[0].mxu0
      %v1653 = vpop.f32.mrb[0].mxu0
      %v1654 = vadd.f32 0.0, %v1653
      %v1655 = vpop.f32.mrb[0].mxu0
      %1656 = vmatprep.mubr.bf16.mxu0 0
      %1657 = vmatmul.mubr.bf16.gmra.mrb[0].mxu0 %v1524
      %v1658 = vpop.f32.mrb[0].mxu0
      %v1659 = vadd.f32 0.0, %v1658
      %v1660 = vpop.f32.mrb[0].mxu0
      %v1661 = vpop.f32.mrb[0].mxu0
      %v1662 = vadd.f32 0.0, %v1661
      %v1663 = vpop.f32.mrb[0].mxu0
      %1664 = vmatprep.mubr.bf16.mxu0 0
      %1665 = vmatmul.mubr.bf16.gmra.mrb[0].mxu0 %v1527
      %v1666 = vpop.f32.mrb[0].mxu0
      %v1667 = vadd.f32 0.0, %v1666
      %v1668 = vpop.f32.mrb[0].mxu0
      %v1669 = vpop.f32.mrb[0].mxu0
      %v1670 = vadd.f32 0.0, %v1669
      %v1671 = vpop.f32.mrb[0].mxu0
      %1672 = vmatprep.mubr.bf16.mxu0 0
      %1673 = vmatmul.mubr.bf16.gmra.mrb[0].mxu0 %v1530
      %v1674 = vpop.f32.mrb[0].mxu0
      %v1675 = vadd.f32 0.0, %v1674
      %v1676 = vpop.f32.mrb[0].mxu0
      %v1677 = vpop.f32.mrb[0].mxu0
      %v1678 = vadd.f32 0.0, %v1677
      %v1679 = vpop.f32.mrb[0].mxu0
      %1680 = vmatprep.mubr.bf16.mxu0 0
      %1681 = vmatmul.mubr.bf16.gmra.mrb[0].mxu0 %v1533
      %v1682 = vpop.f32.mrb[0].mxu0
      %v1683 = vadd.f32 0.0, %v1682
      %v1684 = vpop.f32.mrb[0].mxu0
      %v1685 = vpop.f32.mrb[0].mxu0
      %v1686 = vadd.f32 0.0, %v1685
      %v1687 = vpop.f32.mrb[0].mxu0
      %1688 = vmatprep.mubr.bf16.mxu0 0
      %1689 = vmatmul.mubr.bf16.gmra.mrb[0].mxu0 %v1536
      %v1690 = vpop.f32.mrb[0].mxu0
      %v1691 = vadd.f32 0.0, %v1690
      %v1692 = vpop.f32.mrb[0].mxu0
      %v1693 = vpop.f32.mrb[0].mxu0
      %v1694 = vadd.f32 0.0, %v1693
      %v1695 = vpop.f32.mrb[0].mxu0
      %1696 = vmatprep.mubr.bf16.mxu0 0
      %1697 = vmatmul.mubr.bf16.gmra.mrb[0].mxu0 %v1539
      %v1698 = vpop.f32.mrb[0].mxu0
      %v1699 = vadd.f32 0.0, %v1698
      %v1700 = vpop.f32.mrb[0].mxu0
      %v1701 = vpop.f32.mrb[0].mxu0
      %v1702 = vadd.f32 0.0, %v1701
      %v1703 = vpop.f32.mrb[0].mxu0
      %1704 = vdwg.mxu0
      %v1705 = vadd.f32 %v1154, %v1579
      %v1706 = vadd.f32 %v1157, %v1582
      %v1707 = vadd.f32 %v1162, %v1587
      %v1708 = vadd.f32 %v1165, %v1590
      %v1709 = vadd.f32 %v1170, %v1595
      %v1710 = vadd.f32 %v1173, %v1598
      %v1711 = vadd.f32 %v1178, %v1603
      %v1712 = vadd.f32 %v1181, %v1606
      %v1713 = vadd.f32 %v1186, %v1611
      %v1714 = vadd.f32 %v1189, %v1614
      %v1715 = vadd.f32 %v1194, %v1619
      %v1716 = vadd.f32 %v1197, %v1622
      %v1717 = vadd.f32 %v1202, %v1627
      %v1718 = vadd.f32 %v1205, %v1630
      %v1719 = vadd.f32 %v1210, %v1635
      %v1720 = vadd.f32 %v1213, %v1638
      %v1721 = vadd.f32 %v1218, %v1643
      %v1722 = vadd.f32 %v1221, %v1646
      %v1723 = vadd.f32 %v1226, %v1651
      %v1724 = vadd.f32 %v1229, %v1654
      %v1725 = vadd.f32 %v1234, %v1659
      %v1726 = vadd.f32 %v1237, %v1662
      %v1727 = vadd.f32 %v1242, %v1667
      %v1728 = vadd.f32 %v1245, %v1670
      %v1729 = vadd.f32 %v1250, %v1675
      %v1730 = vadd.f32 %v1253, %v1678
      %v1731 = vadd.f32 %v1258, %v1683
      %v1732 = vadd.f32 %v1261, %v1686
      %v1733 = vadd.f32 %v1266, %v1691
      %v1734 = vadd.f32 %v1269, %v1694
      %v1735 = vadd.f32 %v1274, %v1699
      %v1736 = vadd.f32 %v1277, %v1702
      %s1737 = sadd.s32 %s284, 1
      %s1738 = smul.u32 %s1737, 3
      %s1739 = smul.addr %s1738, 4
      %s1740 = scalar_lea.vmem %s258, %s1739
      %v1741 = vld [vmem:[%s1740] sm:$0xf]
      %v1742 = vld [vmem:[%s1740 + $0x4] sm:$0xf]
      %v1743 = vld [vmem:[%s1740 + $0xc] sm:$0xf]
      %v1744 = vld [vmem:[%s1740 + $0x10] sm:$0xf]
      %v1745 = vld [vmem:[%s1740 + $0x18] sm:$0xf]
      %v1746 = vld [vmem:[%s1740 + $0x1c] sm:$0xf]
      %v1747 = vld [vmem:[%s1740 + $0x24] sm:$0xf]
      %v1748 = vld [vmem:[%s1740 + $0x28] sm:$0xf]
      %v1749 = vld [vmem:[%s1740 + $0x30] sm:$0xf]
      %v1750 = vld [vmem:[%s1740 + $0x34] sm:$0xf]
      %v1751 = vld [vmem:[%s1740 + $0x3c] sm:$0xf]
      %v1752 = vld [vmem:[%s1740 + $0x40] sm:$0xf]
      %v1753 = vld [vmem:[%s1740 + $0x48] sm:$0xf]
      %v1754 = vld [vmem:[%s1740 + $0x4c] sm:$0xf]
      %v1755 = vld [vmem:[%s1740 + $0x54] sm:$0xf]
      %v1756 = vld [vmem:[%s1740 + $0x58] sm:$0xf]
      %v1757 = vld [vmem:[%s1740 + $0x60] sm:$0xf]
      %v1758 = vld [vmem:[%s1740 + $0x64] sm:$0xf]
      %v1759 = vld [vmem:[%s1740 + $0x6c] sm:$0xf]
      %v1760 = vld [vmem:[%s1740 + $0x70] sm:$0xf]
      %v1761 = vld [vmem:[%s1740 + $0x78] sm:$0xf]
      %v1762 = vld [vmem:[%s1740 + $0x7c] sm:$0xf]
      %v1763 = vld [vmem:[%s1740 + $0x84] sm:$0xf]
      %v1764 = vld [vmem:[%s1740 + $0x88] sm:$0xf]
      %v1765 = vld [vmem:[%s1740 + $0x90] sm:$0xf]
      %v1766 = vld [vmem:[%s1740 + $0x94] sm:$0xf]
      %v1767 = vld [vmem:[%s1740 + $0x9c] sm:$0xf]
      %v1768 = vld [vmem:[%s1740 + $0xa0] sm:$0xf]
      %v1769 = vld [vmem:[%s1740 + $0xa8] sm:$0xf]
      %v1770 = vld [vmem:[%s1740 + $0xac] sm:$0xf]
      %v1771 = vld [vmem:[%s1740 + $0xb4] sm:$0xf]
      %v1772 = vld [vmem:[%s1740 + $0xb8] sm:$0xf]
      %s1773 = scalar_lea.vmem %s262, 6
      %v1774 = vld [vmem:[%s1773] sm:$0x3]
      %v1807 = vunpack.c.l.b16 %v1741
      %v1808 = vunpack.c.l.b16 %v1742
      %v1809 = vunpack.c.l.b16 %v1743
      %v1810 = vunpack.c.l.b16 %v1744
      %v1811 = vunpack.c.l.b16 %v1745
      %v1812 = vunpack.c.l.b16 %v1746
      %v1813 = vunpack.c.l.b16 %v1747
      %v1814 = vunpack.c.l.b16 %v1748
      %v1815 = vunpack.c.l.b16 %v1749
      %v1816 = vunpack.c.l.b16 %v1750
      %v1817 = vunpack.c.l.b16 %v1751
      %v1818 = vunpack.c.l.b16 %v1752
      %v1819 = vunpack.c.l.b16 %v1753
      %v1820 = vunpack.c.l.b16 %v1754
      %v1821 = vunpack.c.l.b16 %v1755
      %v1822 = vunpack.c.l.b16 %v1756
      %v1823 = vunpack.c.l.b16 %v1757
      %v1824 = vunpack.c.l.b16 %v1758
      %v1825 = vunpack.c.l.b16 %v1759
      %v1826 = vunpack.c.l.b16 %v1760
      %v1827 = vunpack.c.l.b16 %v1761
      %v1828 = vunpack.c.l.b16 %v1762
      %v1829 = vunpack.c.l.b16 %v1763
      %v1830 = vunpack.c.l.b16 %v1764
      %v1831 = vunpack.c.l.b16 %v1765
      %v1832 = vunpack.c.l.b16 %v1766
      %v1833 = vunpack.c.l.b16 %v1767
      %v1834 = vunpack.c.l.b16 %v1768
      %v1835 = vunpack.c.l.b16 %v1769
      %v1836 = vunpack.c.l.b16 %v1770
      %v1837 = vunpack.c.l.b16 %v1771
      %v1838 = vunpack.c.l.b16 %v1772
      %v1839 = vpack.c.b16 %v1808, %v1807
      %v1840 = vpack.c.b16 %v1810, %v1809
      %v1841 = vpack.c.b16 %v1812, %v1811
      %v1842 = vpack.c.b16 %v1814, %v1813
      %v1843 = vpack.c.b16 %v1816, %v1815
      %v1844 = vpack.c.b16 %v1818, %v1817
      %v1845 = vpack.c.b16 %v1820, %v1819
      %v1846 = vpack.c.b16 %v1822, %v1821
      %v1847 = vpack.c.b16 %v1824, %v1823
      %v1848 = vpack.c.b16 %v1826, %v1825
      %v1849 = vpack.c.b16 %v1828, %v1827
      %v1850 = vpack.c.b16 %v1830, %v1829
      %v1851 = vpack.c.b16 %v1832, %v1831
      %v1852 = vpack.c.b16 %v1834, %v1833
      %v1853 = vpack.c.b16 %v1836, %v1835
      %v1854 = vpack.c.b16 %v1838, %v1837
      %v1856 = vsel %vm774, %v1839, 0
      %v1859 = vsel %vm774, %v1840, 0
      %v1862 = vsel %vm774, %v1841, 0
      %v1865 = vsel %vm774, %v1842, 0
      %v1868 = vsel %vm774, %v1843, 0
      %v1871 = vsel %vm774, %v1844, 0
      %v1874 = vsel %vm774, %v1845, 0
      %v1877 = vsel %vm774, %v1846, 0
      %v1880 = vsel %vm774, %v1847, 0
      %v1883 = vsel %vm774, %v1848, 0
      %v1886 = vsel %vm774, %v1849, 0
      %v1889 = vsel %vm774, %v1850, 0
      %v1892 = vsel %vm774, %v1851, 0
      %v1895 = vsel %vm774, %v1852, 0
      %v1898 = vsel %vm774, %v1853, 0
      %v1901 = vsel %vm774, %v1854, 0
      %v1904 = vsel %vm823, %v1774, 0
      %1906 = vmatprep.subr.bf16.mxu0 0
      %1907 = vmatpush1.bf16.msra.mxu0 %v1904
      %1908 = vmatprep.subr.bf16.mxu0 0
      %1909 = vmatpush1.bf16.msra.mxu0 0
      %1910 = vmatprep.subr.bf16.mxu0 0
      %1911 = vmatpush1.bf16.msra.mxu0 0
      %1912 = vmatprep.subr.bf16.mxu0 0
      %1913 = vmatpush1.bf16.msra.mxu0 0
      %1914 = vmatprep.subr.bf16.mxu0 0
      %1915 = vmatpush1.bf16.msra.mxu0 0
      %1916 = vmatprep.subr.bf16.mxu0 0
      %1917 = vmatpush1.bf16.msra.mxu0 0
      %1918 = vmatprep.subr.bf16.mxu0 0
      %1919 = vmatpush1.bf16.msra.mxu0 0
      %1920 = vmatprep.subr.bf16.mxu0 0
      %1921 = vmatpush1.bf16.msra.mxu0 0
      %1922 = vmatprep.subr.bf16.mxu0 0
      %1923 = vmatpush1.bf16.msra.mxu0 0
      %1924 = vmatprep.subr.bf16.mxu0 0
      %1925 = vmatpush1.bf16.msra.mxu0 0
      %1926 = vmatprep.subr.bf16.mxu0 0
      %1927 = vmatpush1.bf16.msra.mxu0 0
      %1928 = vmatprep.subr.bf16.mxu0 0
      %1929 = vmatpush1.bf16.msra.mxu0 0
      %1930 = vmatprep.subr.bf16.mxu0 0
      %1931 = vmatpush1.bf16.msra.mxu0 0
      %1932 = vmatprep.subr.bf16.mxu0 0
      %1933 = vmatpush1.bf16.msra.mxu0 0
      %1934 = vmatprep.subr.bf16.mxu0 0
      %1935 = vmatpush1.bf16.msra.mxu0 0
      %1936 = vmatprep.subr.bf16.mxu0 0
      %1937 = vmatpush1.bf16.msra.mxu0 0
      %1938 = vmatprep.mubr.bf16.mxu0 0
      %1939 = vmatmul.mubr.bf16.gmra.mrb[0].mxu0 %v1856
      %v1940 = vpop.f32.mrb[0].mxu0
      %v1941 = vadd.f32 0.0, %v1940
      %v1942 = vpop.f32.mrb[0].mxu0
      %v1943 = vpop.f32.mrb[0].mxu0
      %v1944 = vadd.f32 0.0, %v1943
      %v1945 = vpop.f32.mrb[0].mxu0
      %1946 = vmatprep.mubr.bf16.mxu0 0
      %1947 = vmatmul.mubr.bf16.gmra.mrb[0].mxu0 %v1859
      %v1948 = vpop.f32.mrb[0].mxu0
      %v1949 = vadd.f32 0.0, %v1948
      %v1950 = vpop.f32.mrb[0].mxu0
      %v1951 = vpop.f32.mrb[0].mxu0
      %v1952 = vadd.f32 0.0, %v1951
      %v1953 = vpop.f32.mrb[0].mxu0
      %1954 = vmatprep.mubr.bf16.mxu0 0
      %1955 = vmatmul.mubr.bf16.gmra.mrb[0].mxu0 %v1862
      %v1956 = vpop.f32.mrb[0].mxu0
      %v1957 = vadd.f32 0.0, %v1956
      %v1958 = vpop.f32.mrb[0].mxu0
      %v1959 = vpop.f32.mrb[0].mxu0
      %v1960 = vadd.f32 0.0, %v1959
      %v1961 = vpop.f32.mrb[0].mxu0
      %1962 = vmatprep.mubr.bf16.mxu0 0
      %1963 = vmatmul.mubr.bf16.gmra.mrb[0].mxu0 %v1865
      %v1964 = vpop.f32.mrb[0].mxu0
      %v1965 = vadd.f32 0.0, %v1964
      %v1966 = vpop.f32.mrb[0].mxu0
      %v1967 = vpop.f32.mrb[0].mxu0
      %v1968 = vadd.f32 0.0, %v1967
      %v1969 = vpop.f32.mrb[0].mxu0
      %1970 = vmatprep.mubr.bf16.mxu0 0
      %1971 = vmatmul.mubr.bf16.gmra.mrb[0].mxu0 %v1868
      %v1972 = vpop.f32.mrb[0].mxu0
      %v1973 = vadd.f32 0.0, %v1972
      %v1974 = vpop.f32.mrb[0].mxu0
      %v1975 = vpop.f32.mrb[0].mxu0
      %v1976 = vadd.f32 0.0, %v1975
      %v1977 = vpop.f32.mrb[0].mxu0
      %1978 = vmatprep.mubr.bf16.mxu0 0
      %1979 = vmatmul.mubr.bf16.gmra.mrb[0].mxu0 %v1871
      %v1980 = vpop.f32.mrb[0].mxu0
      %v1981 = vadd.f32 0.0, %v1980
      %v1982 = vpop.f32.mrb[0].mxu0
      %v1983 = vpop.f32.mrb[0].mxu0
      %v1984 = vadd.f32 0.0, %v1983
      %v1985 = vpop.f32.mrb[0].mxu0
      %1986 = vmatprep.mubr.bf16.mxu0 0
      %1987 = vmatmul.mubr.bf16.gmra.mrb[0].mxu0 %v1874
      %v1988 = vpop.f32.mrb[0].mxu0
      %v1989 = vadd.f32 0.0, %v1988
      %v1990 = vpop.f32.mrb[0].mxu0
      %v1991 = vpop.f32.mrb[0].mxu0
      %v1992 = vadd.f32 0.0, %v1991
      %v1993 = vpop.f32.mrb[0].mxu0
      %1994 = vmatprep.mubr.bf16.mxu0 0
      %1995 = vmatmul.mubr.bf16.gmra.mrb[0].mxu0 %v1877
      %v1996 = vpop.f32.mrb[0].mxu0
      %v1997 = vadd.f32 0.0, %v1996
      %v1998 = vpop.f32.mrb[0].mxu0
      %v1999 = vpop.f32.mrb[0].mxu0
      %v2000 = vadd.f32 0.0, %v1999
      %v2001 = vpop.f32.mrb[0].mxu0
      %2002 = vmatprep.mubr.bf16.mxu0 0
      %2003 = vmatmul.mubr.bf16.gmra.mrb[0].mxu0 %v1880
      %v2004 = vpop.f32.mrb[0].mxu0
      %v2005 = vadd.f32 0.0, %v2004
      %v2006 = vpop.f32.mrb[0].mxu0
      %v2007 = vpop.f32.mrb[0].mxu0
      %v2008 = vadd.f32 0.0, %v2007
      %v2009 = vpop.f32.mrb[0].mxu0
      %2010 = vmatprep.mubr.bf16.mxu0 0
      %2011 = vmatmul.mubr.bf16.gmra.mrb[0].mxu0 %v1883
      %v2012 = vpop.f32.mrb[0].mxu0
      %v2013 = vadd.f32 0.0, %v2012
      %v2014 = vpop.f32.mrb[0].mxu0
      %v2015 = vpop.f32.mrb[0].mxu0
      %v2016 = vadd.f32 0.0, %v2015
      %v2017 = vpop.f32.mrb[0].mxu0
      %2018 = vmatprep.mubr.bf16.mxu0 0
      %2019 = vmatmul.mubr.bf16.gmra.mrb[0].mxu0 %v1886
      %v2020 = vpop.f32.mrb[0].mxu0
      %v2021 = vadd.f32 0.0, %v2020
      %v2022 = vpop.f32.mrb[0].mxu0
      %v2023 = vpop.f32.mrb[0].mxu0
      %v2024 = vadd.f32 0.0, %v2023
      %v2025 = vpop.f32.mrb[0].mxu0
      %2026 = vmatprep.mubr.bf16.mxu0 0
      %2027 = vmatmul.mubr.bf16.gmra.mrb[0].mxu0 %v1889
      %v2028 = vpop.f32.mrb[0].mxu0
      %v2029 = vadd.f32 0.0, %v2028
      %v2030 = vpop.f32.mrb[0].mxu0
      %v2031 = vpop.f32.mrb[0].mxu0
      %v2032 = vadd.f32 0.0, %v2031
      %v2033 = vpop.f32.mrb[0].mxu0
      %2034 = vmatprep.mubr.bf16.mxu0 0
      %2035 = vmatmul.mubr.bf16.gmra.mrb[0].mxu0 %v1892
      %v2036 = vpop.f32.mrb[0].mxu0
      %v2037 = vadd.f32 0.0, %v2036
      %v2038 = vpop.f32.mrb[0].mxu0
      %v2039 = vpop.f32.mrb[0].mxu0
      %v2040 = vadd.f32 0.0, %v2039
      %v2041 = vpop.f32.mrb[0].mxu0
      %2042 = vmatprep.mubr.bf16.mxu0 0
      %2043 = vmatmul.mubr.bf16.gmra.mrb[0].mxu0 %v1895
      %v2044 = vpop.f32.mrb[0].mxu0
      %v2045 = vadd.f32 0.0, %v2044
      %v2046 = vpop.f32.mrb[0].mxu0
      %v2047 = vpop.f32.mrb[0].mxu0
      %v2048 = vadd.f32 0.0, %v2047
      %v2049 = vpop.f32.mrb[0].mxu0
      %2050 = vmatprep.mubr.bf16.mxu0 0
      %2051 = vmatmul.mubr.bf16.gmra.mrb[0].mxu0 %v1898
      %v2052 = vpop.f32.mrb[0].mxu0
      %v2053 = vadd.f32 0.0, %v2052
      %v2054 = vpop.f32.mrb[0].mxu0
      %v2055 = vpop.f32.mrb[0].mxu0
      %v2056 = vadd.f32 0.0, %v2055
      %v2057 = vpop.f32.mrb[0].mxu0
      %2058 = vmatprep.mubr.bf16.mxu0 0
      %2059 = vmatmul.mubr.bf16.gmra.mrb[0].mxu0 %v1901
      %v2060 = vpop.f32.mrb[0].mxu0
      %v2061 = vadd.f32 0.0, %v2060
      %v2062 = vpop.f32.mrb[0].mxu0
      %v2063 = vpop.f32.mrb[0].mxu0
      %v2064 = vadd.f32 0.0, %v2063
      %v2065 = vpop.f32.mrb[0].mxu0
      %2066 = vdwg.mxu0
      %v2067 = vadd.f32 %v1705, %v1941
      %v2068 = vadd.f32 %v1706, %v1944
      %v2069 = vadd.f32 %v1707, %v1949
      %v2070 = vadd.f32 %v1708, %v1952
      %v2071 = vadd.f32 %v1709, %v1957
      %v2072 = vadd.f32 %v1710, %v1960
      %v2073 = vadd.f32 %v1711, %v1965
      %v2074 = vadd.f32 %v1712, %v1968
      %v2075 = vadd.f32 %v1713, %v1973
      %v2076 = vadd.f32 %v1714, %v1976
      %v2077 = vadd.f32 %v1715, %v1981
      %v2078 = vadd.f32 %v1716, %v1984
      %v2079 = vadd.f32 %v1717, %v1989
      %v2080 = vadd.f32 %v1718, %v1992
      %v2081 = vadd.f32 %v1719, %v1997
      %v2082 = vadd.f32 %v1720, %v2000
      %v2083 = vadd.f32 %v1721, %v2005
      %v2084 = vadd.f32 %v1722, %v2008
      %v2085 = vadd.f32 %v1723, %v2013
      %v2086 = vadd.f32 %v1724, %v2016
      %v2087 = vadd.f32 %v1725, %v2021
      %v2088 = vadd.f32 %v1726, %v2024
      %v2089 = vadd.f32 %v1727, %v2029
      %v2090 = vadd.f32 %v1728, %v2032
      %v2091 = vadd.f32 %v1729, %v2037
      %v2092 = vadd.f32 %v1730, %v2040
      %v2093 = vadd.f32 %v1731, %v2045
      %v2094 = vadd.f32 %v1732, %v2048
      %v2095 = vadd.f32 %v1733, %v2053
      %v2096 = vadd.f32 %v1734, %v2056
      %v2097 = vadd.f32 %v1735, %v2061
      %v2098 = vadd.f32 %v1736, %v2064
      %v2099 = vld [vmem:[%s1740] sm:$0xf]
      %v2100 = vld [vmem:[%s1740 + $0x4] sm:$0xf]
      %v2101 = vld [vmem:[%s1740 + $0x8] sm:$0x1]
      %v2102 = vld [vmem:[%s1740 + $0xc] sm:$0xf]
      %v2103 = vld [vmem:[%s1740 + $0x10] sm:$0xf]
      %v2104 = vld [vmem:[%s1740 + $0x14] sm:$0x1]
      %v2105 = vld [vmem:[%s1740 + $0x18] sm:$0xf]
      %v2106 = vld [vmem:[%s1740 + $0x1c] sm:$0xf]
      %v2107 = vld [vmem:[%s1740 + $0x20] sm:$0x1]
      %v2108 = vld [vmem:[%s1740 + $0x24] sm:$0xf]
      %v2109 = vld [vmem:[%s1740 + $0x28] sm:$0xf]
      %v2110 = vld [vmem:[%s1740 + $0x2c] sm:$0x1]
      %v2111 = vld [vmem:[%s1740 + $0x30] sm:$0xf]
      %v2112 = vld [vmem:[%s1740 + $0x34] sm:$0xf]
      %v2113 = vld [vmem:[%s1740 + $0x38] sm:$0x1]
      %v2114 = vld [vmem:[%s1740 + $0x3c] sm:$0xf]
      %v2115 = vld [vmem:[%s1740 + $0x40] sm:$0xf]
      %v2116 = vld [vmem:[%s1740 + $0x44] sm:$0x1]
      %v2117 = vld [vmem:[%s1740 + $0x48] sm:$0xf]
      %v2118 = vld [vmem:[%s1740 + $0x4c] sm:$0xf]
      %v2119 = vld [vmem:[%s1740 + $0x50] sm:$0x1]
      %v2120 = vld [vmem:[%s1740 + $0x54] sm:$0xf]
      %v2121 = vld [vmem:[%s1740 + $0x58] sm:$0xf]
      %v2122 = vld [vmem:[%s1740 + $0x5c] sm:$0x1]
      %v2123 = vld [vmem:[%s1740 + $0x60] sm:$0xf]
      %v2124 = vld [vmem:[%s1740 + $0x64] sm:$0xf]
      %v2125 = vld [vmem:[%s1740 + $0x68] sm:$0x1]
      %v2126 = vld [vmem:[%s1740 + $0x6c] sm:$0xf]
      %v2127 = vld [vmem:[%s1740 + $0x70] sm:$0xf]
      %v2128 = vld [vmem:[%s1740 + $0x74] sm:$0x1]
      %v2129 = vld [vmem:[%s1740 + $0x78] sm:$0xf]
      %v2130 = vld [vmem:[%s1740 + $0x7c] sm:$0xf]
      %v2131 = vld [vmem:[%s1740 + $0x80] sm:$0x1]
      %v2132 = vld [vmem:[%s1740 + $0x84] sm:$0xf]
      %v2133 = vld [vmem:[%s1740 + $0x88] sm:$0xf]
      %v2134 = vld [vmem:[%s1740 + $0x8c] sm:$0x1]
      %v2135 = vld [vmem:[%s1740 + $0x90] sm:$0xf]
      %v2136 = vld [vmem:[%s1740 + $0x94] sm:$0xf]
      %v2137 = vld [vmem:[%s1740 + $0x98] sm:$0x1]
      %v2138 = vld [vmem:[%s1740 + $0x9c] sm:$0xf]
      %v2139 = vld [vmem:[%s1740 + $0xa0] sm:$0xf]
      %v2140 = vld [vmem:[%s1740 + $0xa4] sm:$0x1]
      %v2141 = vld [vmem:[%s1740 + $0xa8] sm:$0xf]
      %v2142 = vld [vmem:[%s1740 + $0xac] sm:$0xf]
      %v2143 = vld [vmem:[%s1740 + $0xb0] sm:$0x1]
      %v2144 = vld [vmem:[%s1740 + $0xb4] sm:$0xf]
      %v2145 = vld [vmem:[%s1740 + $0xb8] sm:$0xf]
      %v2146 = vld [vmem:[%s1740 + $0xbc] sm:$0x1]
      %v2148 = vshrl.u32 %v2099, 16
      %v2150 = vrot.slane %v2148, 4
      %v2151 = vshll.u32 %v2099, 16
      %v2153 = vrot.slane %v2151, 5
      %v2154 = vor.u32 %v2150, %v2153
      %v2155 = vrot.slane %v2154, 4
      %v2157 = vshll.u32 %v2100, 16
      %v2159 = vrot.slane %v2157, 5
      %v2160 = vsel %vm339, %v2155, %v2159
      %v2161 = vshrl.u32 %v2100, 16
      %v2163 = vrot.slane %v2161, 4
      %v2164 = vor.u32 %v2163, %v2159
      %v2165 = vrot.slane %v2164, 4
      %v2167 = vshll.u32 %v2101, 16
      %v2169 = vrot.slane %v2167, 5
      %v2170 = vsel %vm339, %v2165, %v2169
      %v2172 = vshrl.u32 %v2102, 16
      %v2174 = vrot.slane %v2172, 4
      %v2175 = vshll.u32 %v2102, 16
      %v2177 = vrot.slane %v2175, 5
      %v2178 = vor.u32 %v2174, %v2177
      %v2179 = vrot.slane %v2178, 4
      %v2181 = vshll.u32 %v2103, 16
      %v2183 = vrot.slane %v2181, 5
      %v2184 = vsel %vm339, %v2179, %v2183
      %v2185 = vshrl.u32 %v2103, 16
      %v2187 = vrot.slane %v2185, 4
      %v2188 = vor.u32 %v2187, %v2183
      %v2189 = vrot.slane %v2188, 4
      %v2191 = vshll.u32 %v2104, 16
      %v2193 = vrot.slane %v2191, 5
      %v2194 = vsel %vm339, %v2189, %v2193
      %v2196 = vshrl.u32 %v2105, 16
      %v2198 = vrot.slane %v2196, 4
      %v2199 = vshll.u32 %v2105, 16
      %v2201 = vrot.slane %v2199, 5
      %v2202 = vor.u32 %v2198, %v2201
      %v2203 = vrot.slane %v2202, 4
      %v2205 = vshll.u32 %v2106, 16
      %v2207 = vrot.slane %v2205, 5
      %v2208 = vsel %vm339, %v2203, %v2207
      %v2209 = vshrl.u32 %v2106, 16
      %v2211 = vrot.slane %v2209, 4
      %v2212 = vor.u32 %v2211, %v2207
      %v2213 = vrot.slane %v2212, 4
      %v2215 = vshll.u32 %v2107, 16
      %v2217 = vrot.slane %v2215, 5
      %v2218 = vsel %vm339, %v2213, %v2217
      %v2220 = vshrl.u32 %v2108, 16
      %v2222 = vrot.slane %v2220, 4
      %v2223 = vshll.u32 %v2108, 16
      %v2225 = vrot.slane %v2223, 5
      %v2226 = vor.u32 %v2222, %v2225
      %v2227 = vrot.slane %v2226, 4
      %v2229 = vshll.u32 %v2109, 16
      %v2231 = vrot.slane %v2229, 5
      %v2232 = vsel %vm339, %v2227, %v2231
      %v2233 = vshrl.u32 %v2109, 16
      %v2235 = vrot.slane %v2233, 4
      %v2236 = vor.u32 %v2235, %v2231
      %v2237 = vrot.slane %v2236, 4
      %v2239 = vshll.u32 %v2110, 16
      %v2241 = vrot.slane %v2239, 5
      %v2242 = vsel %vm339, %v2237, %v2241
      %v2244 = vshrl.u32 %v2111, 16
      %v2246 = vrot.slane %v2244, 4
      %v2247 = vshll.u32 %v2111, 16
      %v2249 = vrot.slane %v2247, 5
      %v2250 = vor.u32 %v2246, %v2249
      %v2251 = vrot.slane %v2250, 4
      %v2253 = vshll.u32 %v2112, 16
      %v2255 = vrot.slane %v2253, 5
      %v2256 = vsel %vm339, %v2251, %v2255
      %v2257 = vshrl.u32 %v2112, 16
      %v2259 = vrot.slane %v2257, 4
      %v2260 = vor.u32 %v2259, %v2255
      %v2261 = vrot.slane %v2260, 4
      %v2263 = vshll.u32 %v2113, 16
      %v2265 = vrot.slane %v2263, 5
      %v2266 = vsel %vm339, %v2261, %v2265
      %v2268 = vshrl.u32 %v2114, 16
      %v2270 = vrot.slane %v2268, 4
      %v2271 = vshll.u32 %v2114, 16
      %v2273 = vrot.slane %v2271, 5
      %v2274 = vor.u32 %v2270, %v2273
      %v2275 = vrot.slane %v2274, 4
      %v2277 = vshll.u32 %v2115, 16
      %v2279 = vrot.slane %v2277, 5
      %v2280 = vsel %vm339, %v2275, %v2279
      %v2281 = vshrl.u32 %v2115, 16
      %v2283 = vrot.slane %v2281, 4
      %v2284 = vor.u32 %v2283, %v2279
      %v2285 = vrot.slane %v2284, 4
      %v2287 = vshll.u32 %v2116, 16
      %v2289 = vrot.slane %v2287, 5
      %v2290 = vsel %vm339, %v2285, %v2289
      %v2292 = vshrl.u32 %v2117, 16
      %v2294 = vrot.slane %v2292, 4
      %v2295 = vshll.u32 %v2117, 16
      %v2297 = vrot.slane %v2295, 5
      %v2298 = vor.u32 %v2294, %v2297
      %v2299 = vrot.slane %v2298, 4
      %v2301 = vshll.u32 %v2118, 16
      %v2303 = vrot.slane %v2301, 5
      %v2304 = vsel %vm339, %v2299, %v2303
      %v2305 = vshrl.u32 %v2118, 16
      %v2307 = vrot.slane %v2305, 4
      %v2308 = vor.u32 %v2307, %v2303
      %v2309 = vrot.slane %v2308, 4
      %v2311 = vshll.u32 %v2119, 16
      %v2313 = vrot.slane %v2311, 5
      %v2314 = vsel %vm339, %v2309, %v2313
      %v2316 = vshrl.u32 %v2120, 16
      %v2318 = vrot.slane %v2316, 4
      %v2319 = vshll.u32 %v2120, 16
      %v2321 = vrot.slane %v2319, 5
      %v2322 = vor.u32 %v2318, %v2321
      %v2323 = vrot.slane %v2322, 4
      %v2325 = vshll.u32 %v2121, 16
      %v2327 = vrot.slane %v2325, 5
      %v2328 = vsel %vm339, %v2323, %v2327
      %v2329 = vshrl.u32 %v2121, 16
      %v2331 = vrot.slane %v2329, 4
      %v2332 = vor.u32 %v2331, %v2327
      %v2333 = vrot.slane %v2332, 4
      %v2335 = vshll.u32 %v2122, 16
      %v2337 = vrot.slane %v2335, 5
      %v2338 = vsel %vm339, %v2333, %v2337
      %v2340 = vshrl.u32 %v2123, 16
      %v2342 = vrot.slane %v2340, 4
      %v2343 = vshll.u32 %v2123, 16
      %v2345 = vrot.slane %v2343, 5
      %v2346 = vor.u32 %v2342, %v2345
      %v2347 = vrot.slane %v2346, 4
      %v2349 = vshll.u32 %v2124, 16
      %v2351 = vrot.slane %v2349, 5
      %v2352 = vsel %vm339, %v2347, %v2351
      %v2353 = vshrl.u32 %v2124, 16
      %v2355 = vrot.slane %v2353, 4
      %v2356 = vor.u32 %v2355, %v2351
      %v2357 = vrot.slane %v2356, 4
      %v2359 = vshll.u32 %v2125, 16
      %v2361 = vrot.slane %v2359, 5
      %v2362 = vsel %vm339, %v2357, %v2361
      %v2364 = vshrl.u32 %v2126, 16
      %v2366 = vrot.slane %v2364, 4
      %v2367 = vshll.u32 %v2126, 16
      %v2369 = vrot.slane %v2367, 5
      %v2370 = vor.u32 %v2366, %v2369
      %v2371 = vrot.slane %v2370, 4
      %v2373 = vshll.u32 %v2127, 16
      %v2375 = vrot.slane %v2373, 5
      %v2376 = vsel %vm339, %v2371, %v2375
      %v2377 = vshrl.u32 %v2127, 16
      %v2379 = vrot.slane %v2377, 4
      %v2380 = vor.u32 %v2379, %v2375
      %v2381 = vrot.slane %v2380, 4
      %v2383 = vshll.u32 %v2128, 16
      %v2385 = vrot.slane %v2383, 5
      %v2386 = vsel %vm339, %v2381, %v2385
      %v2388 = vshrl.u32 %v2129, 16
      %v2390 = vrot.slane %v2388, 4
      %v2391 = vshll.u32 %v2129, 16
      %v2393 = vrot.slane %v2391, 5
      %v2394 = vor.u32 %v2390, %v2393
      %v2395 = vrot.slane %v2394, 4
      %v2397 = vshll.u32 %v2130, 16
      %v2399 = vrot.slane %v2397, 5
      %v2400 = vsel %vm339, %v2395, %v2399
      %v2401 = vshrl.u32 %v2130, 16
      %v2403 = vrot.slane %v2401, 4
      %v2404 = vor.u32 %v2403, %v2399
      %v2405 = vrot.slane %v2404, 4
      %v2407 = vshll.u32 %v2131, 16
      %v2409 = vrot.slane %v2407, 5
      %v2410 = vsel %vm339, %v2405, %v2409
      %v2412 = vshrl.u32 %v2132, 16
      %v2414 = vrot.slane %v2412, 4
      %v2415 = vshll.u32 %v2132, 16
      %v2417 = vrot.slane %v2415, 5
      %v2418 = vor.u32 %v2414, %v2417
      %v2419 = vrot.slane %v2418, 4
      %v2421 = vshll.u32 %v2133, 16
      %v2423 = vrot.slane %v2421, 5
      %v2424 = vsel %vm339, %v2419, %v2423
      %v2425 = vshrl.u32 %v2133, 16
      %v2427 = vrot.slane %v2425, 4
      %v2428 = vor.u32 %v2427, %v2423
      %v2429 = vrot.slane %v2428, 4
      %v2431 = vshll.u32 %v2134, 16
      %v2433 = vrot.slane %v2431, 5
      %v2434 = vsel %vm339, %v2429, %v2433
      %v2436 = vshrl.u32 %v2135, 16
      %v2438 = vrot.slane %v2436, 4
      %v2439 = vshll.u32 %v2135, 16
      %v2441 = vrot.slane %v2439, 5
      %v2442 = vor.u32 %v2438, %v2441
      %v2443 = vrot.slane %v2442, 4
      %v2445 = vshll.u32 %v2136, 16
      %v2447 = vrot.slane %v2445, 5
      %v2448 = vsel %vm339, %v2443, %v2447
      %v2449 = vshrl.u32 %v2136, 16
      %v2451 = vrot.slane %v2449, 4
      %v2452 = vor.u32 %v2451, %v2447
      %v2453 = vrot.slane %v2452, 4
      %v2455 = vshll.u32 %v2137, 16
      %v2457 = vrot.slane %v2455, 5
      %v2458 = vsel %vm339, %v2453, %v2457
      %v2460 = vshrl.u32 %v2138, 16
      %v2462 = vrot.slane %v2460, 4
      %v2463 = vshll.u32 %v2138, 16
      %v2465 = vrot.slane %v2463, 5
      %v2466 = vor.u32 %v2462, %v2465
      %v2467 = vrot.slane %v2466, 4
      %v2469 = vshll.u32 %v2139, 16
      %v2471 = vrot.slane %v2469, 5
      %v2472 = vsel %vm339, %v2467, %v2471
      %v2473 = vshrl.u32 %v2139, 16
      %v2475 = vrot.slane %v2473, 4
      %v2476 = vor.u32 %v2475, %v2471
      %v2477 = vrot.slane %v2476, 4
      %v2479 = vshll.u32 %v2140, 16
      %v2481 = vrot.slane %v2479, 5
      %v2482 = vsel %vm339, %v2477, %v2481
      %v2484 = vshrl.u32 %v2141, 16
      %v2486 = vrot.slane %v2484, 4
      %v2487 = vshll.u32 %v2141, 16
      %v2489 = vrot.slane %v2487, 5
      %v2490 = vor.u32 %v2486, %v2489
      %v2491 = vrot.slane %v2490, 4
      %v2493 = vshll.u32 %v2142, 16
      %v2495 = vrot.slane %v2493, 5
      %v2496 = vsel %vm339, %v2491, %v2495
      %v2497 = vshrl.u32 %v2142, 16
      %v2499 = vrot.slane %v2497, 4
      %v2500 = vor.u32 %v2499, %v2495
      %v2501 = vrot.slane %v2500, 4
      %v2503 = vshll.u32 %v2143, 16
      %v2505 = vrot.slane %v2503, 5
      %v2506 = vsel %vm339, %v2501, %v2505
      %v2508 = vshrl.u32 %v2144, 16
      %v2510 = vrot.slane %v2508, 4
      %v2511 = vshll.u32 %v2144, 16
      %v2513 = vrot.slane %v2511, 5
      %v2514 = vor.u32 %v2510, %v2513
      %v2515 = vrot.slane %v2514, 4
      %v2517 = vshll.u32 %v2145, 16
      %v2519 = vrot.slane %v2517, 5
      %v2520 = vsel %vm339, %v2515, %v2519
      %v2521 = vshrl.u32 %v2145, 16
      %v2523 = vrot.slane %v2521, 4
      %v2524 = vor.u32 %v2523, %v2519
      %v2525 = vrot.slane %v2524, 4
      %v2527 = vshll.u32 %v2146, 16
      %v2529 = vrot.slane %v2527, 5
      %v2530 = vsel %vm339, %v2525, %v2529
      %s2531 = scalar_lea.vmem %s262, 8
      %v2532 = vld [vmem:[%s2531] sm:$0x3]
      %v2533 = vunpack.c.l.b16 %v2160
      %v2534 = vunpack.c.l.b16 %v2170
      %v2535 = vunpack.c.l.b16 %v2184
      %v2536 = vunpack.c.l.b16 %v2194
      %v2537 = vunpack.c.l.b16 %v2208
      %v2538 = vunpack.c.l.b16 %v2218
      %v2539 = vunpack.c.l.b16 %v2232
      %v2540 = vunpack.c.l.b16 %v2242
      %v2541 = vunpack.c.l.b16 %v2256
      %v2542 = vunpack.c.l.b16 %v2266
      %v2543 = vunpack.c.l.b16 %v2280
      %v2544 = vunpack.c.l.b16 %v2290
      %v2545 = vunpack.c.l.b16 %v2304
      %v2546 = vunpack.c.l.b16 %v2314
      %v2547 = vunpack.c.l.b16 %v2328
      %v2548 = vunpack.c.l.b16 %v2338
      %v2549 = vunpack.c.l.b16 %v2352
      %v2550 = vunpack.c.l.b16 %v2362
      %v2551 = vunpack.c.l.b16 %v2376
      %v2552 = vunpack.c.l.b16 %v2386
      %v2553 = vunpack.c.l.b16 %v2400
      %v2554 = vunpack.c.l.b16 %v2410
      %v2555 = vunpack.c.l.b16 %v2424
      %v2556 = vunpack.c.l.b16 %v2434
      %v2557 = vunpack.c.l.b16 %v2448
      %v2558 = vunpack.c.l.b16 %v2458
      %v2559 = vunpack.c.l.b16 %v2472
      %v2560 = vunpack.c.l.b16 %v2482
      %v2561 = vunpack.c.l.b16 %v2496
      %v2562 = vunpack.c.l.b16 %v2506
      %v2563 = vunpack.c.l.b16 %v2520
      %v2564 = vunpack.c.l.b16 %v2530
      %v2565 = vpack.c.b16 %v2534, %v2533
      %v2566 = vpack.c.b16 %v2536, %v2535
      %v2567 = vpack.c.b16 %v2538, %v2537
      %v2568 = vpack.c.b16 %v2540, %v2539
      %v2569 = vpack.c.b16 %v2542, %v2541
      %v2570 = vpack.c.b16 %v2544, %v2543
      %v2571 = vpack.c.b16 %v2546, %v2545
      %v2572 = vpack.c.b16 %v2548, %v2547
      %v2573 = vpack.c.b16 %v2550, %v2549
      %v2574 = vpack.c.b16 %v2552, %v2551
      %v2575 = vpack.c.b16 %v2554, %v2553
      %v2576 = vpack.c.b16 %v2556, %v2555
      %v2577 = vpack.c.b16 %v2558, %v2557
      %v2578 = vpack.c.b16 %v2560, %v2559
      %v2579 = vpack.c.b16 %v2562, %v2561
      %v2580 = vpack.c.b16 %v2564, %v2563
      %v2582 = vsel %vm774, %v2565, 0
      %v2585 = vsel %vm774, %v2566, 0
      %v2588 = vsel %vm774, %v2567, 0
      %v2591 = vsel %vm774, %v2568, 0
      %v2594 = vsel %vm774, %v2569, 0
      %v2597 = vsel %vm774, %v2570, 0
      %v2600 = vsel %vm774, %v2571, 0
      %v2603 = vsel %vm774, %v2572, 0
      %v2606 = vsel %vm774, %v2573, 0
      %v2609 = vsel %vm774, %v2574, 0
      %v2612 = vsel %vm774, %v2575, 0
      %v2615 = vsel %vm774, %v2576, 0
      %v2618 = vsel %vm774, %v2577, 0
      %v2621 = vsel %vm774, %v2578, 0
      %v2624 = vsel %vm774, %v2579, 0
      %v2627 = vsel %vm774, %v2580, 0
      %v2630 = vsel %vm823, %v2532, 0
      %2632 = vmatprep.subr.bf16.mxu0 0
      %2633 = vmatpush1.bf16.msra.mxu0 %v2630
      %2634 = vmatprep.subr.bf16.mxu0 0
      %2635 = vmatpush1.bf16.msra.mxu0 0
      %2636 = vmatprep.subr.bf16.mxu0 0
      %2637 = vmatpush1.bf16.msra.mxu0 0
      %2638 = vmatprep.subr.bf16.mxu0 0
      %2639 = vmatpush1.bf16.msra.mxu0 0
      %2640 = vmatprep.subr.bf16.mxu0 0
      %2641 = vmatpush1.bf16.msra.mxu0 0
      %2642 = vmatprep.subr.bf16.mxu0 0
      %2643 = vmatpush1.bf16.msra.mxu0 0
      %2644 = vmatprep.subr.bf16.mxu0 0
      %2645 = vmatpush1.bf16.msra.mxu0 0
      %2646 = vmatprep.subr.bf16.mxu0 0
      %2647 = vmatpush1.bf16.msra.mxu0 0
      %2648 = vmatprep.subr.bf16.mxu0 0
      %2649 = vmatpush1.bf16.msra.mxu0 0
      %2650 = vmatprep.subr.bf16.mxu0 0
      %2651 = vmatpush1.bf16.msra.mxu0 0
      %2652 = vmatprep.subr.bf16.mxu0 0
      %2653 = vmatpush1.bf16.msra.mxu0 0
      %2654 = vmatprep.subr.bf16.mxu0 0
      %2655 = vmatpush1.bf16.msra.mxu0 0
      %2656 = vmatprep.subr.bf16.mxu0 0
      %2657 = vmatpush1.bf16.msra.mxu0 0
      %2658 = vmatprep.subr.bf16.mxu0 0
      %2659 = vmatpush1.bf16.msra.mxu0 0
      %2660 = vmatprep.subr.bf16.mxu0 0
      %2661 = vmatpush1.bf16.msra.mxu0 0
      %2662 = vmatprep.subr.bf16.mxu0 0
      %2663 = vmatpush1.bf16.msra.mxu0 0
      %2664 = vmatprep.mubr.bf16.mxu0 0
      %2665 = vmatmul.mubr.bf16.gmra.mrb[0].mxu0 %v2582
      %v2666 = vpop.f32.mrb[0].mxu0
      %v2667 = vadd.f32 0.0, %v2666
      %v2668 = vpop.f32.mrb[0].mxu0
      %v2669 = vpop.f32.mrb[0].mxu0
      %v2670 = vadd.f32 0.0, %v2669
      %v2671 = vpop.f32.mrb[0].mxu0
      %2672 = vmatprep.mubr.bf16.mxu0 0
      %2673 = vmatmul.mubr.bf16.gmra.mrb[0].mxu0 %v2585
      %v2674 = vpop.f32.mrb[0].mxu0
      %v2675 = vadd.f32 0.0, %v2674
      %v2676 = vpop.f32.mrb[0].mxu0
      %v2677 = vpop.f32.mrb[0].mxu0
      %v2678 = vadd.f32 0.0, %v2677
      %v2679 = vpop.f32.mrb[0].mxu0
      %2680 = vmatprep.mubr.bf16.mxu0 0
      %2681 = vmatmul.mubr.bf16.gmra.mrb[0].mxu0 %v2588
      %v2682 = vpop.f32.mrb[0].mxu0
      %v2683 = vadd.f32 0.0, %v2682
      %v2684 = vpop.f32.mrb[0].mxu0
      %v2685 = vpop.f32.mrb[0].mxu0
      %v2686 = vadd.f32 0.0, %v2685
      %v2687 = vpop.f32.mrb[0].mxu0
      %2688 = vmatprep.mubr.bf16.mxu0 0
      %2689 = vmatmul.mubr.bf16.gmra.mrb[0].mxu0 %v2591
      %v2690 = vpop.f32.mrb[0].mxu0
      %v2691 = vadd.f32 0.0, %v2690
      %v2692 = vpop.f32.mrb[0].mxu0
      %v2693 = vpop.f32.mrb[0].mxu0
      %v2694 = vadd.f32 0.0, %v2693
      %v2695 = vpop.f32.mrb[0].mxu0
      %2696 = vmatprep.mubr.bf16.mxu0 0
      %2697 = vmatmul.mubr.bf16.gmra.mrb[0].mxu0 %v2594
      %v2698 = vpop.f32.mrb[0].mxu0
      %v2699 = vadd.f32 0.0, %v2698
      %v2700 = vpop.f32.mrb[0].mxu0
      %v2701 = vpop.f32.mrb[0].mxu0
      %v2702 = vadd.f32 0.0, %v2701
      %v2703 = vpop.f32.mrb[0].mxu0
      %2704 = vmatprep.mubr.bf16.mxu0 0
      %2705 = vmatmul.mubr.bf16.gmra.mrb[0].mxu0 %v2597
      %v2706 = vpop.f32.mrb[0].mxu0
      %v2707 = vadd.f32 0.0, %v2706
      %v2708 = vpop.f32.mrb[0].mxu0
      %v2709 = vpop.f32.mrb[0].mxu0
      %v2710 = vadd.f32 0.0, %v2709
      %v2711 = vpop.f32.mrb[0].mxu0
      %2712 = vmatprep.mubr.bf16.mxu0 0
      %2713 = vmatmul.mubr.bf16.gmra.mrb[0].mxu0 %v2600
      %v2714 = vpop.f32.mrb[0].mxu0
      %v2715 = vadd.f32 0.0, %v2714
      %v2716 = vpop.f32.mrb[0].mxu0
      %v2717 = vpop.f32.mrb[0].mxu0
      %v2718 = vadd.f32 0.0, %v2717
      %v2719 = vpop.f32.mrb[0].mxu0
      %2720 = vmatprep.mubr.bf16.mxu0 0
      %2721 = vmatmul.mubr.bf16.gmra.mrb[0].mxu0 %v2603
      %v2722 = vpop.f32.mrb[0].mxu0
      %v2723 = vadd.f32 0.0, %v2722
      %v2724 = vpop.f32.mrb[0].mxu0
      %v2725 = vpop.f32.mrb[0].mxu0
      %v2726 = vadd.f32 0.0, %v2725
      %v2727 = vpop.f32.mrb[0].mxu0
      %2728 = vmatprep.mubr.bf16.mxu0 0
      %2729 = vmatmul.mubr.bf16.gmra.mrb[0].mxu0 %v2606
      %v2730 = vpop.f32.mrb[0].mxu0
      %v2731 = vadd.f32 0.0, %v2730
      %v2732 = vpop.f32.mrb[0].mxu0
      %v2733 = vpop.f32.mrb[0].mxu0
      %v2734 = vadd.f32 0.0, %v2733
      %v2735 = vpop.f32.mrb[0].mxu0
      %2736 = vmatprep.mubr.bf16.mxu0 0
      %2737 = vmatmul.mubr.bf16.gmra.mrb[0].mxu0 %v2609
      %v2738 = vpop.f32.mrb[0].mxu0
      %v2739 = vadd.f32 0.0, %v2738
      %v2740 = vpop.f32.mrb[0].mxu0
      %v2741 = vpop.f32.mrb[0].mxu0
      %v2742 = vadd.f32 0.0, %v2741
      %v2743 = vpop.f32.mrb[0].mxu0
      %2744 = vmatprep.mubr.bf16.mxu0 0
      %2745 = vmatmul.mubr.bf16.gmra.mrb[0].mxu0 %v2612
      %v2746 = vpop.f32.mrb[0].mxu0
      %v2747 = vadd.f32 0.0, %v2746
      %v2748 = vpop.f32.mrb[0].mxu0
      %v2749 = vpop.f32.mrb[0].mxu0
      %v2750 = vadd.f32 0.0, %v2749
      %v2751 = vpop.f32.mrb[0].mxu0
      %2752 = vmatprep.mubr.bf16.mxu0 0
      %2753 = vmatmul.mubr.bf16.gmra.mrb[0].mxu0 %v2615
      %v2754 = vpop.f32.mrb[0].mxu0
      %v2755 = vadd.f32 0.0, %v2754
      %v2756 = vpop.f32.mrb[0].mxu0
      %v2757 = vpop.f32.mrb[0].mxu0
      %v2758 = vadd.f32 0.0, %v2757
      %v2759 = vpop.f32.mrb[0].mxu0
      %2760 = vmatprep.mubr.bf16.mxu0 0
      %2761 = vmatmul.mubr.bf16.gmra.mrb[0].mxu0 %v2618
      %v2762 = vpop.f32.mrb[0].mxu0
      %v2763 = vadd.f32 0.0, %v2762
      %v2764 = vpop.f32.mrb[0].mxu0
      %v2765 = vpop.f32.mrb[0].mxu0
      %v2766 = vadd.f32 0.0, %v2765
      %v2767 = vpop.f32.mrb[0].mxu0
      %2768 = vmatprep.mubr.bf16.mxu0 0
      %2769 = vmatmul.mubr.bf16.gmra.mrb[0].mxu0 %v2621
      %v2770 = vpop.f32.mrb[0].mxu0
      %v2771 = vadd.f32 0.0, %v2770
      %v2772 = vpop.f32.mrb[0].mxu0
      %v2773 = vpop.f32.mrb[0].mxu0
      %v2774 = vadd.f32 0.0, %v2773
      %v2775 = vpop.f32.mrb[0].mxu0
      %2776 = vmatprep.mubr.bf16.mxu0 0
      %2777 = vmatmul.mubr.bf16.gmra.mrb[0].mxu0 %v2624
      %v2778 = vpop.f32.mrb[0].mxu0
      %v2779 = vadd.f32 0.0, %v2778
      %v2780 = vpop.f32.mrb[0].mxu0
      %v2781 = vpop.f32.mrb[0].mxu0
      %v2782 = vadd.f32 0.0, %v2781
      %v2783 = vpop.f32.mrb[0].mxu0
      %2784 = vmatprep.mubr.bf16.mxu0 0
      %2785 = vmatmul.mubr.bf16.gmra.mrb[0].mxu0 %v2627
      %v2786 = vpop.f32.mrb[0].mxu0
      %v2787 = vadd.f32 0.0, %v2786
      %v2788 = vpop.f32.mrb[0].mxu0
      %v2789 = vpop.f32.mrb[0].mxu0
      %v2790 = vadd.f32 0.0, %v2789
      %v2791 = vpop.f32.mrb[0].mxu0
      %2792 = vdwg.mxu0
      %v2793 = vadd.f32 %v2067, %v2667
      %v2794 = vadd.f32 %v2068, %v2670
      %v2795 = vadd.f32 %v2069, %v2675
      %v2796 = vadd.f32 %v2070, %v2678
      %v2797 = vadd.f32 %v2071, %v2683
      %v2798 = vadd.f32 %v2072, %v2686
      %v2799 = vadd.f32 %v2073, %v2691
      %v2800 = vadd.f32 %v2074, %v2694
      %v2801 = vadd.f32 %v2075, %v2699
      %v2802 = vadd.f32 %v2076, %v2702
      %v2803 = vadd.f32 %v2077, %v2707
      %v2804 = vadd.f32 %v2078, %v2710
      %v2805 = vadd.f32 %v2079, %v2715
      %v2806 = vadd.f32 %v2080, %v2718
      %v2807 = vadd.f32 %v2081, %v2723
      %v2808 = vadd.f32 %v2082, %v2726
      %v2809 = vadd.f32 %v2083, %v2731
      %v2810 = vadd.f32 %v2084, %v2734
      %v2811 = vadd.f32 %v2085, %v2739
      %v2812 = vadd.f32 %v2086, %v2742
      %v2813 = vadd.f32 %v2087, %v2747
      %v2814 = vadd.f32 %v2088, %v2750
      %v2815 = vadd.f32 %v2089, %v2755
      %v2816 = vadd.f32 %v2090, %v2758
      %v2817 = vadd.f32 %v2091, %v2763
      %v2818 = vadd.f32 %v2092, %v2766
      %v2819 = vadd.f32 %v2093, %v2771
      %v2820 = vadd.f32 %v2094, %v2774
      %v2821 = vadd.f32 %v2095, %v2779
      %v2822 = vadd.f32 %v2096, %v2782
      %v2823 = vadd.f32 %v2097, %v2787
      %v2824 = vadd.f32 %v2098, %v2790
      %v2825 = vld [vmem:[%s1740] sm:$0xe]
      %v2826 = vld [vmem:[%s1740 + $0xc] sm:$0xe]
      %v2827 = vld [vmem:[%s1740 + $0x18] sm:$0xe]
      %v2828 = vld [vmem:[%s1740 + $0x24] sm:$0xe]
      %v2829 = vld [vmem:[%s1740 + $0x30] sm:$0xe]
      %v2830 = vld [vmem:[%s1740 + $0x3c] sm:$0xe]
      %v2831 = vld [vmem:[%s1740 + $0x48] sm:$0xe]
      %v2832 = vld [vmem:[%s1740 + $0x54] sm:$0xe]
      %v2833 = vld [vmem:[%s1740 + $0x60] sm:$0xe]
      %v2834 = vld [vmem:[%s1740 + $0x6c] sm:$0xe]
      %v2835 = vld [vmem:[%s1740 + $0x78] sm:$0xe]
      %v2836 = vld [vmem:[%s1740 + $0x84] sm:$0xe]
      %v2837 = vld [vmem:[%s1740 + $0x90] sm:$0xe]
      %v2838 = vld [vmem:[%s1740 + $0x9c] sm:$0xe]
      %v2839 = vld [vmem:[%s1740 + $0xa8] sm:$0xe]
      %v2840 = vld [vmem:[%s1740 + $0xb4] sm:$0xe]
      %v2889 = vrot.slane %v2825, 5
      %v2890 = vrot.slane %v2889, 4
      %v2891 = vrot.slane %v2100, 5
      %v2892 = vsel %vm1330, %v2890, %v2891
      %v2893 = vrot.slane %v2891, 4
      %v2894 = vrot.slane %v2101, 5
      %v2895 = vsel %vm1330, %v2893, %v2894
      %v2896 = vrot.slane %v2826, 5
      %v2897 = vrot.slane %v2896, 4
      %v2898 = vrot.slane %v2103, 5
      %v2899 = vsel %vm1330, %v2897, %v2898
      %v2900 = vrot.slane %v2898, 4
      %v2901 = vrot.slane %v2104, 5
      %v2902 = vsel %vm1330, %v2900, %v2901
      %v2903 = vrot.slane %v2827, 5
      %v2904 = vrot.slane %v2903, 4
      %v2905 = vrot.slane %v2106, 5
      %v2906 = vsel %vm1330, %v2904, %v2905
      %v2907 = vrot.slane %v2905, 4
      %v2908 = vrot.slane %v2107, 5
      %v2909 = vsel %vm1330, %v2907, %v2908
      %v2910 = vrot.slane %v2828, 5
      %v2911 = vrot.slane %v2910, 4
      %v2912 = vrot.slane %v2109, 5
      %v2913 = vsel %vm1330, %v2911, %v2912
      %v2914 = vrot.slane %v2912, 4
      %v2915 = vrot.slane %v2110, 5
      %v2916 = vsel %vm1330, %v2914, %v2915
      %v2917 = vrot.slane %v2829, 5
      %v2918 = vrot.slane %v2917, 4
      %v2919 = vrot.slane %v2112, 5
      %v2920 = vsel %vm1330, %v2918, %v2919
      %v2921 = vrot.slane %v2919, 4
      %v2922 = vrot.slane %v2113, 5
      %v2923 = vsel %vm1330, %v2921, %v2922
      %v2924 = vrot.slane %v2830, 5
      %v2925 = vrot.slane %v2924, 4
      %v2926 = vrot.slane %v2115, 5
      %v2927 = vsel %vm1330, %v2925, %v2926
      %v2928 = vrot.slane %v2926, 4
      %v2929 = vrot.slane %v2116, 5
      %v2930 = vsel %vm1330, %v2928, %v2929
      %v2931 = vrot.slane %v2831, 5
      %v2932 = vrot.slane %v2931, 4
      %v2933 = vrot.slane %v2118, 5
      %v2934 = vsel %vm1330, %v2932, %v2933
      %v2935 = vrot.slane %v2933, 4
      %v2936 = vrot.slane %v2119, 5
      %v2937 = vsel %vm1330, %v2935, %v2936
      %v2938 = vrot.slane %v2832, 5
      %v2939 = vrot.slane %v2938, 4
      %v2940 = vrot.slane %v2121, 5
      %v2941 = vsel %vm1330, %v2939, %v2940
      %v2942 = vrot.slane %v2940, 4
      %v2943 = vrot.slane %v2122, 5
      %v2944 = vsel %vm1330, %v2942, %v2943
      %v2945 = vrot.slane %v2833, 5
      %v2946 = vrot.slane %v2945, 4
      %v2947 = vrot.slane %v2124, 5
      %v2948 = vsel %vm1330, %v2946, %v2947
      %v2949 = vrot.slane %v2947, 4
      %v2950 = vrot.slane %v2125, 5
      %v2951 = vsel %vm1330, %v2949, %v2950
      %v2952 = vrot.slane %v2834, 5
      %v2953 = vrot.slane %v2952, 4
      %v2954 = vrot.slane %v2127, 5
      %v2955 = vsel %vm1330, %v2953, %v2954
      %v2956 = vrot.slane %v2954, 4
      %v2957 = vrot.slane %v2128, 5
      %v2958 = vsel %vm1330, %v2956, %v2957
      %v2959 = vrot.slane %v2835, 5
      %v2960 = vrot.slane %v2959, 4
      %v2961 = vrot.slane %v2130, 5
      %v2962 = vsel %vm1330, %v2960, %v2961
      %v2963 = vrot.slane %v2961, 4
      %v2964 = vrot.slane %v2131, 5
      %v2965 = vsel %vm1330, %v2963, %v2964
      %v2966 = vrot.slane %v2836, 5
      %v2967 = vrot.slane %v2966, 4
      %v2968 = vrot.slane %v2133, 5
      %v2969 = vsel %vm1330, %v2967, %v2968
      %v2970 = vrot.slane %v2968, 4
      %v2971 = vrot.slane %v2134, 5
      %v2972 = vsel %vm1330, %v2970, %v2971
      %v2973 = vrot.slane %v2837, 5
      %v2974 = vrot.slane %v2973, 4
      %v2975 = vrot.slane %v2136, 5
      %v2976 = vsel %vm1330, %v2974, %v2975
      %v2977 = vrot.slane %v2975, 4
      %v2978 = vrot.slane %v2137, 5
      %v2979 = vsel %vm1330, %v2977, %v2978
      %v2980 = vrot.slane %v2838, 5
      %v2981 = vrot.slane %v2980, 4
      %v2982 = vrot.slane %v2139, 5
      %v2983 = vsel %vm1330, %v2981, %v2982
      %v2984 = vrot.slane %v2982, 4
      %v2985 = vrot.slane %v2140, 5
      %v2986 = vsel %vm1330, %v2984, %v2985
      %v2987 = vrot.slane %v2839, 5
      %v2988 = vrot.slane %v2987, 4
      %v2989 = vrot.slane %v2142, 5
      %v2990 = vsel %vm1330, %v2988, %v2989
      %v2991 = vrot.slane %v2989, 4
      %v2992 = vrot.slane %v2143, 5
      %v2993 = vsel %vm1330, %v2991, %v2992
      %v2994 = vrot.slane %v2840, 5
      %v2995 = vrot.slane %v2994, 4
      %v2996 = vrot.slane %v2145, 5
      %v2997 = vsel %vm1330, %v2995, %v2996
      %v2998 = vrot.slane %v2996, 4
      %v2999 = vrot.slane %v2146, 5
      %v3000 = vsel %vm1330, %v2998, %v2999
      %s3001 = scalar_lea.vmem %s262, 10
      %v3002 = vld [vmem:[%s3001] sm:$0x3]
      %v3003 = vunpack.c.l.b16 %v2892
      %v3004 = vunpack.c.l.b16 %v2895
      %v3005 = vunpack.c.l.b16 %v2899
      %v3006 = vunpack.c.l.b16 %v2902
      %v3007 = vunpack.c.l.b16 %v2906
      %v3008 = vunpack.c.l.b16 %v2909
      %v3009 = vunpack.c.l.b16 %v2913
      %v3010 = vunpack.c.l.b16 %v2916
      %v3011 = vunpack.c.l.b16 %v2920
      %v3012 = vunpack.c.l.b16 %v2923
      %v3013 = vunpack.c.l.b16 %v2927
      %v3014 = vunpack.c.l.b16 %v2930
      %v3015 = vunpack.c.l.b16 %v2934
      %v3016 = vunpack.c.l.b16 %v2937
      %v3017 = vunpack.c.l.b16 %v2941
      %v3018 = vunpack.c.l.b16 %v2944
      %v3019 = vunpack.c.l.b16 %v2948
      %v3020 = vunpack.c.l.b16 %v2951
      %v3021 = vunpack.c.l.b16 %v2955
      %v3022 = vunpack.c.l.b16 %v2958
      %v3023 = vunpack.c.l.b16 %v2962
      %v3024 = vunpack.c.l.b16 %v2965
      %v3025 = vunpack.c.l.b16 %v2969
      %v3026 = vunpack.c.l.b16 %v2972
      %v3027 = vunpack.c.l.b16 %v2976
      %v3028 = vunpack.c.l.b16 %v2979
      %v3029 = vunpack.c.l.b16 %v2983
      %v3030 = vunpack.c.l.b16 %v2986
      %v3031 = vunpack.c.l.b16 %v2990
      %v3032 = vunpack.c.l.b16 %v2993
      %v3033 = vunpack.c.l.b16 %v2997
      %v3034 = vunpack.c.l.b16 %v3000
      %v3035 = vpack.c.b16 %v3004, %v3003
      %v3036 = vpack.c.b16 %v3006, %v3005
      %v3037 = vpack.c.b16 %v3008, %v3007
      %v3038 = vpack.c.b16 %v3010, %v3009
      %v3039 = vpack.c.b16 %v3012, %v3011
      %v3040 = vpack.c.b16 %v3014, %v3013
      %v3041 = vpack.c.b16 %v3016, %v3015
      %v3042 = vpack.c.b16 %v3018, %v3017
      %v3043 = vpack.c.b16 %v3020, %v3019
      %v3044 = vpack.c.b16 %v3022, %v3021
      %v3045 = vpack.c.b16 %v3024, %v3023
      %v3046 = vpack.c.b16 %v3026, %v3025
      %v3047 = vpack.c.b16 %v3028, %v3027
      %v3048 = vpack.c.b16 %v3030, %v3029
      %v3049 = vpack.c.b16 %v3032, %v3031
      %v3050 = vpack.c.b16 %v3034, %v3033
      %v3052 = vsel %vm774, %v3035, 0
      %v3055 = vsel %vm774, %v3036, 0
      %v3058 = vsel %vm774, %v3037, 0
      %v3061 = vsel %vm774, %v3038, 0
      %v3064 = vsel %vm774, %v3039, 0
      %v3067 = vsel %vm774, %v3040, 0
      %v3070 = vsel %vm774, %v3041, 0
      %v3073 = vsel %vm774, %v3042, 0
      %v3076 = vsel %vm774, %v3043, 0
      %v3079 = vsel %vm774, %v3044, 0
      %v3082 = vsel %vm774, %v3045, 0
      %v3085 = vsel %vm774, %v3046, 0
      %v3088 = vsel %vm774, %v3047, 0
      %v3091 = vsel %vm774, %v3048, 0
      %v3094 = vsel %vm774, %v3049, 0
      %v3097 = vsel %vm774, %v3050, 0
      %v3100 = vsel %vm823, %v3002, 0
      %3102 = vmatprep.subr.bf16.mxu0 0
      %3103 = vmatpush1.bf16.msra.mxu0 %v3100
      %3104 = vmatprep.subr.bf16.mxu0 0
      %3105 = vmatpush1.bf16.msra.mxu0 0
      %3106 = vmatprep.subr.bf16.mxu0 0
      %3107 = vmatpush1.bf16.msra.mxu0 0
      %3108 = vmatprep.subr.bf16.mxu0 0
      %3109 = vmatpush1.bf16.msra.mxu0 0
      %3110 = vmatprep.subr.bf16.mxu0 0
      %3111 = vmatpush1.bf16.msra.mxu0 0
      %3112 = vmatprep.subr.bf16.mxu0 0
      %3113 = vmatpush1.bf16.msra.mxu0 0
      %3114 = vmatprep.subr.bf16.mxu0 0
      %3115 = vmatpush1.bf16.msra.mxu0 0
      %3116 = vmatprep.subr.bf16.mxu0 0
      %3117 = vmatpush1.bf16.msra.mxu0 0
      %3118 = vmatprep.subr.bf16.mxu0 0
      %3119 = vmatpush1.bf16.msra.mxu0 0
      %3120 = vmatprep.subr.bf16.mxu0 0
      %3121 = vmatpush1.bf16.msra.mxu0 0
      %3122 = vmatprep.subr.bf16.mxu0 0
      %3123 = vmatpush1.bf16.msra.mxu0 0
      %3124 = vmatprep.subr.bf16.mxu0 0
      %3125 = vmatpush1.bf16.msra.mxu0 0
      %3126 = vmatprep.subr.bf16.mxu0 0
      %3127 = vmatpush1.bf16.msra.mxu0 0
      %3128 = vmatprep.subr.bf16.mxu0 0
      %3129 = vmatpush1.bf16.msra.mxu0 0
      %3130 = vmatprep.subr.bf16.mxu0 0
      %3131 = vmatpush1.bf16.msra.mxu0 0
      %3132 = vmatprep.subr.bf16.mxu0 0
      %3133 = vmatpush1.bf16.msra.mxu0 0
      %3134 = vmatprep.mubr.bf16.mxu0 0
      %3135 = vmatmul.mubr.bf16.gmra.mrb[0].mxu0 %v3052
      %v3136 = vpop.f32.mrb[0].mxu0
      %v3137 = vadd.f32 0.0, %v3136
      %v3138 = vpop.f32.mrb[0].mxu0
      %v3139 = vpop.f32.mrb[0].mxu0
      %v3140 = vadd.f32 0.0, %v3139
      %v3141 = vpop.f32.mrb[0].mxu0
      %3142 = vmatprep.mubr.bf16.mxu0 0
      %3143 = vmatmul.mubr.bf16.gmra.mrb[0].mxu0 %v3055
      %v3144 = vpop.f32.mrb[0].mxu0
      %v3145 = vadd.f32 0.0, %v3144
      %v3146 = vpop.f32.mrb[0].mxu0
      %v3147 = vpop.f32.mrb[0].mxu0
      %v3148 = vadd.f32 0.0, %v3147
      %v3149 = vpop.f32.mrb[0].mxu0
      %3150 = vmatprep.mubr.bf16.mxu0 0
      %3151 = vmatmul.mubr.bf16.gmra.mrb[0].mxu0 %v3058
      %v3152 = vpop.f32.mrb[0].mxu0
      %v3153 = vadd.f32 0.0, %v3152
      %v3154 = vpop.f32.mrb[0].mxu0
      %v3155 = vpop.f32.mrb[0].mxu0
      %v3156 = vadd.f32 0.0, %v3155
      %v3157 = vpop.f32.mrb[0].mxu0
      %3158 = vmatprep.mubr.bf16.mxu0 0
      %3159 = vmatmul.mubr.bf16.gmra.mrb[0].mxu0 %v3061
      %v3160 = vpop.f32.mrb[0].mxu0
      %v3161 = vadd.f32 0.0, %v3160
      %v3162 = vpop.f32.mrb[0].mxu0
      %v3163 = vpop.f32.mrb[0].mxu0
      %v3164 = vadd.f32 0.0, %v3163
      %v3165 = vpop.f32.mrb[0].mxu0
      %3166 = vmatprep.mubr.bf16.mxu0 0
      %3167 = vmatmul.mubr.bf16.gmra.mrb[0].mxu0 %v3064
      %v3168 = vpop.f32.mrb[0].mxu0
      %v3169 = vadd.f32 0.0, %v3168
      %v3170 = vpop.f32.mrb[0].mxu0
      %v3171 = vpop.f32.mrb[0].mxu0
      %v3172 = vadd.f32 0.0, %v3171
      %v3173 = vpop.f32.mrb[0].mxu0
      %3174 = vmatprep.mubr.bf16.mxu0 0
      %3175 = vmatmul.mubr.bf16.gmra.mrb[0].mxu0 %v3067
      %v3176 = vpop.f32.mrb[0].mxu0
      %v3177 = vadd.f32 0.0, %v3176
      %v3178 = vpop.f32.mrb[0].mxu0
      %v3179 = vpop.f32.mrb[0].mxu0
      %v3180 = vadd.f32 0.0, %v3179
      %v3181 = vpop.f32.mrb[0].mxu0
      %3182 = vmatprep.mubr.bf16.mxu0 0
      %3183 = vmatmul.mubr.bf16.gmra.mrb[0].mxu0 %v3070
      %v3184 = vpop.f32.mrb[0].mxu0
      %v3185 = vadd.f32 0.0, %v3184
      %v3186 = vpop.f32.mrb[0].mxu0
      %v3187 = vpop.f32.mrb[0].mxu0
      %v3188 = vadd.f32 0.0, %v3187
      %v3189 = vpop.f32.mrb[0].mxu0
      %3190 = vmatprep.mubr.bf16.mxu0 0
      %3191 = vmatmul.mubr.bf16.gmra.mrb[0].mxu0 %v3073
      %v3192 = vpop.f32.mrb[0].mxu0
      %v3193 = vadd.f32 0.0, %v3192
      %v3194 = vpop.f32.mrb[0].mxu0
      %v3195 = vpop.f32.mrb[0].mxu0
      %v3196 = vadd.f32 0.0, %v3195
      %v3197 = vpop.f32.mrb[0].mxu0
      %3198 = vmatprep.mubr.bf16.mxu0 0
      %3199 = vmatmul.mubr.bf16.gmra.mrb[0].mxu0 %v3076
      %v3200 = vpop.f32.mrb[0].mxu0
      %v3201 = vadd.f32 0.0, %v3200
      %v3202 = vpop.f32.mrb[0].mxu0
      %v3203 = vpop.f32.mrb[0].mxu0
      %v3204 = vadd.f32 0.0, %v3203
      %v3205 = vpop.f32.mrb[0].mxu0
      %3206 = vmatprep.mubr.bf16.mxu0 0
      %3207 = vmatmul.mubr.bf16.gmra.mrb[0].mxu0 %v3079
      %v3208 = vpop.f32.mrb[0].mxu0
      %v3209 = vadd.f32 0.0, %v3208
      %v3210 = vpop.f32.mrb[0].mxu0
      %v3211 = vpop.f32.mrb[0].mxu0
      %v3212 = vadd.f32 0.0, %v3211
      %v3213 = vpop.f32.mrb[0].mxu0
      %3214 = vmatprep.mubr.bf16.mxu0 0
      %3215 = vmatmul.mubr.bf16.gmra.mrb[0].mxu0 %v3082
      %v3216 = vpop.f32.mrb[0].mxu0
      %v3217 = vadd.f32 0.0, %v3216
      %v3218 = vpop.f32.mrb[0].mxu0
      %v3219 = vpop.f32.mrb[0].mxu0
      %v3220 = vadd.f32 0.0, %v3219
      %v3221 = vpop.f32.mrb[0].mxu0
      %3222 = vmatprep.mubr.bf16.mxu0 0
      %3223 = vmatmul.mubr.bf16.gmra.mrb[0].mxu0 %v3085
      %v3224 = vpop.f32.mrb[0].mxu0
      %v3225 = vadd.f32 0.0, %v3224
      %v3226 = vpop.f32.mrb[0].mxu0
      %v3227 = vpop.f32.mrb[0].mxu0
      %v3228 = vadd.f32 0.0, %v3227
      %v3229 = vpop.f32.mrb[0].mxu0
      %3230 = vmatprep.mubr.bf16.mxu0 0
      %3231 = vmatmul.mubr.bf16.gmra.mrb[0].mxu0 %v3088
      %v3232 = vpop.f32.mrb[0].mxu0
      %v3233 = vadd.f32 0.0, %v3232
      %v3234 = vpop.f32.mrb[0].mxu0
      %v3235 = vpop.f32.mrb[0].mxu0
      %v3236 = vadd.f32 0.0, %v3235
      %v3237 = vpop.f32.mrb[0].mxu0
      %3238 = vmatprep.mubr.bf16.mxu0 0
      %3239 = vmatmul.mubr.bf16.gmra.mrb[0].mxu0 %v3091
      %v3240 = vpop.f32.mrb[0].mxu0
      %v3241 = vadd.f32 0.0, %v3240
      %v3242 = vpop.f32.mrb[0].mxu0
      %v3243 = vpop.f32.mrb[0].mxu0
      %v3244 = vadd.f32 0.0, %v3243
      %v3245 = vpop.f32.mrb[0].mxu0
      %3246 = vmatprep.mubr.bf16.mxu0 0
      %3247 = vmatmul.mubr.bf16.gmra.mrb[0].mxu0 %v3094
      %v3248 = vpop.f32.mrb[0].mxu0
      %v3249 = vadd.f32 0.0, %v3248
      %v3250 = vpop.f32.mrb[0].mxu0
      %v3251 = vpop.f32.mrb[0].mxu0
      %v3252 = vadd.f32 0.0, %v3251
      %v3253 = vpop.f32.mrb[0].mxu0
      %3254 = vmatprep.mubr.bf16.mxu0 0
      %3255 = vmatmul.mubr.bf16.gmra.mrb[0].mxu0 %v3097
      %v3256 = vpop.f32.mrb[0].mxu0
      %v3257 = vadd.f32 0.0, %v3256
      %v3258 = vpop.f32.mrb[0].mxu0
      %v3259 = vpop.f32.mrb[0].mxu0
      %v3260 = vadd.f32 0.0, %v3259
      %v3261 = vpop.f32.mrb[0].mxu0
      %3262 = vdwg.mxu0
      %v3263 = vadd.f32 %v2793, %v3137
      %v3264 = vadd.f32 %v2794, %v3140
      %v3265 = vadd.f32 %v2795, %v3145
      %v3266 = vadd.f32 %v2796, %v3148
      %v3267 = vadd.f32 %v2797, %v3153
      %v3268 = vadd.f32 %v2798, %v3156
      %v3269 = vadd.f32 %v2799, %v3161
      %v3270 = vadd.f32 %v2800, %v3164
      %v3271 = vadd.f32 %v2801, %v3169
      %v3272 = vadd.f32 %v2802, %v3172
      %v3273 = vadd.f32 %v2803, %v3177
      %v3274 = vadd.f32 %v2804, %v3180
      %v3275 = vadd.f32 %v2805, %v3185
      %v3276 = vadd.f32 %v2806, %v3188
      %v3277 = vadd.f32 %v2807, %v3193
      %v3278 = vadd.f32 %v2808, %v3196
      %v3279 = vadd.f32 %v2809, %v3201
      %v3280 = vadd.f32 %v2810, %v3204
      %v3281 = vadd.f32 %v2811, %v3209
      %v3282 = vadd.f32 %v2812, %v3212
      %v3283 = vadd.f32 %v2813, %v3217
      %v3284 = vadd.f32 %v2814, %v3220
      %v3285 = vadd.f32 %v2815, %v3225
      %v3286 = vadd.f32 %v2816, %v3228
      %v3287 = vadd.f32 %v2817, %v3233
      %v3288 = vadd.f32 %v2818, %v3236
      %v3289 = vadd.f32 %v2819, %v3241
      %v3290 = vadd.f32 %v2820, %v3244
      %v3291 = vadd.f32 %v2821, %v3249
      %v3292 = vadd.f32 %v2822, %v3252
      %v3293 = vadd.f32 %v2823, %v3257
      %v3294 = vadd.f32 %v2824, %v3260
      %s3295 = sadd.s32 %s284, 2
      %s3296 = smul.u32 %s3295, 3
      %s3297 = smul.addr %s3296, 4
      %s3298 = scalar_lea.vmem %s258, %s3297
      %v3299 = vld [vmem:[%s3298] sm:$0xf]
      %v3300 = vld [vmem:[%s3298 + $0x4] sm:$0xf]
      %v3301 = vld [vmem:[%s3298 + $0xc] sm:$0xf]
      %v3302 = vld [vmem:[%s3298 + $0x10] sm:$0xf]
      %v3303 = vld [vmem:[%s3298 + $0x18] sm:$0xf]
      %v3304 = vld [vmem:[%s3298 + $0x1c] sm:$0xf]
      %v3305 = vld [vmem:[%s3298 + $0x24] sm:$0xf]
      %v3306 = vld [vmem:[%s3298 + $0x28] sm:$0xf]
      %v3307 = vld [vmem:[%s3298 + $0x30] sm:$0xf]
      %v3308 = vld [vmem:[%s3298 + $0x34] sm:$0xf]
      %v3309 = vld [vmem:[%s3298 + $0x3c] sm:$0xf]
      %v3310 = vld [vmem:[%s3298 + $0x40] sm:$0xf]
      %v3311 = vld [vmem:[%s3298 + $0x48] sm:$0xf]
      %v3312 = vld [vmem:[%s3298 + $0x4c] sm:$0xf]
      %v3313 = vld [vmem:[%s3298 + $0x54] sm:$0xf]
      %v3314 = vld [vmem:[%s3298 + $0x58] sm:$0xf]
      %v3315 = vld [vmem:[%s3298 + $0x60] sm:$0xf]
      %v3316 = vld [vmem:[%s3298 + $0x64] sm:$0xf]
      %v3317 = vld [vmem:[%s3298 + $0x6c] sm:$0xf]
      %v3318 = vld [vmem:[%s3298 + $0x70] sm:$0xf]
      %v3319 = vld [vmem:[%s3298 + $0x78] sm:$0xf]
      %v3320 = vld [vmem:[%s3298 + $0x7c] sm:$0xf]
      %v3321 = vld [vmem:[%s3298 + $0x84] sm:$0xf]
      %v3322 = vld [vmem:[%s3298 + $0x88] sm:$0xf]
      %v3323 = vld [vmem:[%s3298 + $0x90] sm:$0xf]
      %v3324 = vld [vmem:[%s3298 + $0x94] sm:$0xf]
      %v3325 = vld [vmem:[%s3298 + $0x9c] sm:$0xf]
      %v3326 = vld [vmem:[%s3298 + $0xa0] sm:$0xf]
      %v3327 = vld [vmem:[%s3298 + $0xa8] sm:$0xf]
      %v3328 = vld [vmem:[%s3298 + $0xac] sm:$0xf]
      %v3329 = vld [vmem:[%s3298 + $0xb4] sm:$0xf]
      %v3330 = vld [vmem:[%s3298 + $0xb8] sm:$0xf]
      %s3331 = scalar_lea.vmem %s262, 12
      %v3332 = vld [vmem:[%s3331] sm:$0x3]
      %v3365 = vunpack.c.l.b16 %v3299
      %v3366 = vunpack.c.l.b16 %v3300
      %v3367 = vunpack.c.l.b16 %v3301
      %v3368 = vunpack.c.l.b16 %v3302
      %v3369 = vunpack.c.l.b16 %v3303
      %v3370 = vunpack.c.l.b16 %v3304
      %v3371 = vunpack.c.l.b16 %v3305
      %v3372 = vunpack.c.l.b16 %v3306
      %v3373 = vunpack.c.l.b16 %v3307
      %v3374 = vunpack.c.l.b16 %v3308
      %v3375 = vunpack.c.l.b16 %v3309
      %v3376 = vunpack.c.l.b16 %v3310
      %v3377 = vunpack.c.l.b16 %v3311
      %v3378 = vunpack.c.l.b16 %v3312
      %v3379 = vunpack.c.l.b16 %v3313
      %v3380 = vunpack.c.l.b16 %v3314
      %v3381 = vunpack.c.l.b16 %v3315
      %v3382 = vunpack.c.l.b16 %v3316
      %v3383 = vunpack.c.l.b16 %v3317
      %v3384 = vunpack.c.l.b16 %v3318
      %v3385 = vunpack.c.l.b16 %v3319
      %v3386 = vunpack.c.l.b16 %v3320
      %v3387 = vunpack.c.l.b16 %v3321
      %v3388 = vunpack.c.l.b16 %v3322
      %v3389 = vunpack.c.l.b16 %v3323
      %v3390 = vunpack.c.l.b16 %v3324
      %v3391 = vunpack.c.l.b16 %v3325
      %v3392 = vunpack.c.l.b16 %v3326
      %v3393 = vunpack.c.l.b16 %v3327
      %v3394 = vunpack.c.l.b16 %v3328
      %v3395 = vunpack.c.l.b16 %v3329
      %v3396 = vunpack.c.l.b16 %v3330
      %v3397 = vpack.c.b16 %v3366, %v3365
      %v3398 = vpack.c.b16 %v3368, %v3367
      %v3399 = vpack.c.b16 %v3370, %v3369
      %v3400 = vpack.c.b16 %v3372, %v3371
      %v3401 = vpack.c.b16 %v3374, %v3373
      %v3402 = vpack.c.b16 %v3376, %v3375
      %v3403 = vpack.c.b16 %v3378, %v3377
      %v3404 = vpack.c.b16 %v3380, %v3379
      %v3405 = vpack.c.b16 %v3382, %v3381
      %v3406 = vpack.c.b16 %v3384, %v3383
      %v3407 = vpack.c.b16 %v3386, %v3385
      %v3408 = vpack.c.b16 %v3388, %v3387
      %v3409 = vpack.c.b16 %v3390, %v3389
      %v3410 = vpack.c.b16 %v3392, %v3391
      %v3411 = vpack.c.b16 %v3394, %v3393
      %v3412 = vpack.c.b16 %v3396, %v3395
      %v3414 = vsel %vm774, %v3397, 0
      %v3417 = vsel %vm774, %v3398, 0
      %v3420 = vsel %vm774, %v3399, 0
      %v3423 = vsel %vm774, %v3400, 0
      %v3426 = vsel %vm774, %v3401, 0
      %v3429 = vsel %vm774, %v3402, 0
      %v3432 = vsel %vm774, %v3403, 0
      %v3435 = vsel %vm774, %v3404, 0
      %v3438 = vsel %vm774, %v3405, 0
      %v3441 = vsel %vm774, %v3406, 0
      %v3444 = vsel %vm774, %v3407, 0
      %v3447 = vsel %vm774, %v3408, 0
      %v3450 = vsel %vm774, %v3409, 0
      %v3453 = vsel %vm774, %v3410, 0
      %v3456 = vsel %vm774, %v3411, 0
      %v3459 = vsel %vm774, %v3412, 0
      %v3462 = vsel %vm823, %v3332, 0
      %3464 = vmatprep.subr.bf16.mxu0 0
      %3465 = vmatpush1.bf16.msra.mxu0 %v3462
      %3466 = vmatprep.subr.bf16.mxu0 0
      %3467 = vmatpush1.bf16.msra.mxu0 0
      %3468 = vmatprep.subr.bf16.mxu0 0
      %3469 = vmatpush1.bf16.msra.mxu0 0
      %3470 = vmatprep.subr.bf16.mxu0 0
      %3471 = vmatpush1.bf16.msra.mxu0 0
      %3472 = vmatprep.subr.bf16.mxu0 0
      %3473 = vmatpush1.bf16.msra.mxu0 0
      %3474 = vmatprep.subr.bf16.mxu0 0
      %3475 = vmatpush1.bf16.msra.mxu0 0
      %3476 = vmatprep.subr.bf16.mxu0 0
      %3477 = vmatpush1.bf16.msra.mxu0 0
      %3478 = vmatprep.subr.bf16.mxu0 0
      %3479 = vmatpush1.bf16.msra.mxu0 0
      %3480 = vmatprep.subr.bf16.mxu0 0
      %3481 = vmatpush1.bf16.msra.mxu0 0
      %3482 = vmatprep.subr.bf16.mxu0 0
      %3483 = vmatpush1.bf16.msra.mxu0 0
      %3484 = vmatprep.subr.bf16.mxu0 0
      %3485 = vmatpush1.bf16.msra.mxu0 0
      %3486 = vmatprep.subr.bf16.mxu0 0
      %3487 = vmatpush1.bf16.msra.mxu0 0
      %3488 = vmatprep.subr.bf16.mxu0 0
      %3489 = vmatpush1.bf16.msra.mxu0 0
      %3490 = vmatprep.subr.bf16.mxu0 0
      %3491 = vmatpush1.bf16.msra.mxu0 0
      %3492 = vmatprep.subr.bf16.mxu0 0
      %3493 = vmatpush1.bf16.msra.mxu0 0
      %3494 = vmatprep.subr.bf16.mxu0 0
      %3495 = vmatpush1.bf16.msra.mxu0 0
      %3496 = vmatprep.mubr.bf16.mxu0 0
      %3497 = vmatmul.mubr.bf16.gmra.mrb[0].mxu0 %v3414
      %v3498 = vpop.f32.mrb[0].mxu0
      %v3499 = vadd.f32 0.0, %v3498
      %v3500 = vpop.f32.mrb[0].mxu0
      %v3501 = vpop.f32.mrb[0].mxu0
      %v3502 = vadd.f32 0.0, %v3501
      %v3503 = vpop.f32.mrb[0].mxu0
      %3504 = vmatprep.mubr.bf16.mxu0 0
      %3505 = vmatmul.mubr.bf16.gmra.mrb[0].mxu0 %v3417
      %v3506 = vpop.f32.mrb[0].mxu0
      %v3507 = vadd.f32 0.0, %v3506
      %v3508 = vpop.f32.mrb[0].mxu0
      %v3509 = vpop.f32.mrb[0].mxu0
      %v3510 = vadd.f32 0.0, %v3509
      %v3511 = vpop.f32.mrb[0].mxu0
      %3512 = vmatprep.mubr.bf16.mxu0 0
      %3513 = vmatmul.mubr.bf16.gmra.mrb[0].mxu0 %v3420
      %v3514 = vpop.f32.mrb[0].mxu0
      %v3515 = vadd.f32 0.0, %v3514
      %v3516 = vpop.f32.mrb[0].mxu0
      %v3517 = vpop.f32.mrb[0].mxu0
      %v3518 = vadd.f32 0.0, %v3517
      %v3519 = vpop.f32.mrb[0].mxu0
      %3520 = vmatprep.mubr.bf16.mxu0 0
      %3521 = vmatmul.mubr.bf16.gmra.mrb[0].mxu0 %v3423
      %v3522 = vpop.f32.mrb[0].mxu0
      %v3523 = vadd.f32 0.0, %v3522
      %v3524 = vpop.f32.mrb[0].mxu0
      %v3525 = vpop.f32.mrb[0].mxu0
      %v3526 = vadd.f32 0.0, %v3525
      %v3527 = vpop.f32.mrb[0].mxu0
      %3528 = vmatprep.mubr.bf16.mxu0 0
      %3529 = vmatmul.mubr.bf16.gmra.mrb[0].mxu0 %v3426
      %v3530 = vpop.f32.mrb[0].mxu0
      %v3531 = vadd.f32 0.0, %v3530
      %v3532 = vpop.f32.mrb[0].mxu0
      %v3533 = vpop.f32.mrb[0].mxu0
      %v3534 = vadd.f32 0.0, %v3533
      %v3535 = vpop.f32.mrb[0].mxu0
      %3536 = vmatprep.mubr.bf16.mxu0 0
      %3537 = vmatmul.mubr.bf16.gmra.mrb[0].mxu0 %v3429
      %v3538 = vpop.f32.mrb[0].mxu0
      %v3539 = vadd.f32 0.0, %v3538
      %v3540 = vpop.f32.mrb[0].mxu0
      %v3541 = vpop.f32.mrb[0].mxu0
      %v3542 = vadd.f32 0.0, %v3541
      %v3543 = vpop.f32.mrb[0].mxu0
      %3544 = vmatprep.mubr.bf16.mxu0 0
      %3545 = vmatmul.mubr.bf16.gmra.mrb[0].mxu0 %v3432
      %v3546 = vpop.f32.mrb[0].mxu0
      %v3547 = vadd.f32 0.0, %v3546
      %v3548 = vpop.f32.mrb[0].mxu0
      %v3549 = vpop.f32.mrb[0].mxu0
      %v3550 = vadd.f32 0.0, %v3549
      %v3551 = vpop.f32.mrb[0].mxu0
      %3552 = vmatprep.mubr.bf16.mxu0 0
      %3553 = vmatmul.mubr.bf16.gmra.mrb[0].mxu0 %v3435
      %v3554 = vpop.f32.mrb[0].mxu0
      %v3555 = vadd.f32 0.0, %v3554
      %v3556 = vpop.f32.mrb[0].mxu0
      %v3557 = vpop.f32.mrb[0].mxu0
      %v3558 = vadd.f32 0.0, %v3557
      %v3559 = vpop.f32.mrb[0].mxu0
      %3560 = vmatprep.mubr.bf16.mxu0 0
      %3561 = vmatmul.mubr.bf16.gmra.mrb[0].mxu0 %v3438
      %v3562 = vpop.f32.mrb[0].mxu0
      %v3563 = vadd.f32 0.0, %v3562
      %v3564 = vpop.f32.mrb[0].mxu0
      %v3565 = vpop.f32.mrb[0].mxu0
      %v3566 = vadd.f32 0.0, %v3565
      %v3567 = vpop.f32.mrb[0].mxu0
      %3568 = vmatprep.mubr.bf16.mxu0 0
      %3569 = vmatmul.mubr.bf16.gmra.mrb[0].mxu0 %v3441
      %v3570 = vpop.f32.mrb[0].mxu0
      %v3571 = vadd.f32 0.0, %v3570
      %v3572 = vpop.f32.mrb[0].mxu0
      %v3573 = vpop.f32.mrb[0].mxu0
      %v3574 = vadd.f32 0.0, %v3573
      %v3575 = vpop.f32.mrb[0].mxu0
      %3576 = vmatprep.mubr.bf16.mxu0 0
      %3577 = vmatmul.mubr.bf16.gmra.mrb[0].mxu0 %v3444
      %v3578 = vpop.f32.mrb[0].mxu0
      %v3579 = vadd.f32 0.0, %v3578
      %v3580 = vpop.f32.mrb[0].mxu0
      %v3581 = vpop.f32.mrb[0].mxu0
      %v3582 = vadd.f32 0.0, %v3581
      %v3583 = vpop.f32.mrb[0].mxu0
      %3584 = vmatprep.mubr.bf16.mxu0 0
      %3585 = vmatmul.mubr.bf16.gmra.mrb[0].mxu0 %v3447
      %v3586 = vpop.f32.mrb[0].mxu0
      %v3587 = vadd.f32 0.0, %v3586
      %v3588 = vpop.f32.mrb[0].mxu0
      %v3589 = vpop.f32.mrb[0].mxu0
      %v3590 = vadd.f32 0.0, %v3589
      %v3591 = vpop.f32.mrb[0].mxu0
      %3592 = vmatprep.mubr.bf16.mxu0 0
      %3593 = vmatmul.mubr.bf16.gmra.mrb[0].mxu0 %v3450
      %v3594 = vpop.f32.mrb[0].mxu0
      %v3595 = vadd.f32 0.0, %v3594
      %v3596 = vpop.f32.mrb[0].mxu0
      %v3597 = vpop.f32.mrb[0].mxu0
      %v3598 = vadd.f32 0.0, %v3597
      %v3599 = vpop.f32.mrb[0].mxu0
      %3600 = vmatprep.mubr.bf16.mxu0 0
      %3601 = vmatmul.mubr.bf16.gmra.mrb[0].mxu0 %v3453
      %v3602 = vpop.f32.mrb[0].mxu0
      %v3603 = vadd.f32 0.0, %v3602
      %v3604 = vpop.f32.mrb[0].mxu0
      %v3605 = vpop.f32.mrb[0].mxu0
      %v3606 = vadd.f32 0.0, %v3605
      %v3607 = vpop.f32.mrb[0].mxu0
      %3608 = vmatprep.mubr.bf16.mxu0 0
      %3609 = vmatmul.mubr.bf16.gmra.mrb[0].mxu0 %v3456
      %v3610 = vpop.f32.mrb[0].mxu0
      %v3611 = vadd.f32 0.0, %v3610
      %v3612 = vpop.f32.mrb[0].mxu0
      %v3613 = vpop.f32.mrb[0].mxu0
      %v3614 = vadd.f32 0.0, %v3613
      %v3615 = vpop.f32.mrb[0].mxu0
      %3616 = vmatprep.mubr.bf16.mxu0 0
      %3617 = vmatmul.mubr.bf16.gmra.mrb[0].mxu0 %v3459
      %v3618 = vpop.f32.mrb[0].mxu0
      %v3619 = vadd.f32 0.0, %v3618
      %v3620 = vpop.f32.mrb[0].mxu0
      %v3621 = vpop.f32.mrb[0].mxu0
      %v3622 = vadd.f32 0.0, %v3621
      %v3623 = vpop.f32.mrb[0].mxu0
      %3624 = vdwg.mxu0
      %v3625 = vadd.f32 %v3263, %v3499
      %v3626 = vadd.f32 %v3264, %v3502
      %v3627 = vadd.f32 %v3265, %v3507
      %v3628 = vadd.f32 %v3266, %v3510
      %v3629 = vadd.f32 %v3267, %v3515
      %v3630 = vadd.f32 %v3268, %v3518
      %v3631 = vadd.f32 %v3269, %v3523
      %v3632 = vadd.f32 %v3270, %v3526
      %v3633 = vadd.f32 %v3271, %v3531
      %v3634 = vadd.f32 %v3272, %v3534
      %v3635 = vadd.f32 %v3273, %v3539
      %v3636 = vadd.f32 %v3274, %v3542
      %v3637 = vadd.f32 %v3275, %v3547
      %v3638 = vadd.f32 %v3276, %v3550
      %v3639 = vadd.f32 %v3277, %v3555
      %v3640 = vadd.f32 %v3278, %v3558
      %v3641 = vadd.f32 %v3279, %v3563
      %v3642 = vadd.f32 %v3280, %v3566
      %v3643 = vadd.f32 %v3281, %v3571
      %v3644 = vadd.f32 %v3282, %v3574
      %v3645 = vadd.f32 %v3283, %v3579
      %v3646 = vadd.f32 %v3284, %v3582
      %v3647 = vadd.f32 %v3285, %v3587
      %v3648 = vadd.f32 %v3286, %v3590
      %v3649 = vadd.f32 %v3287, %v3595
      %v3650 = vadd.f32 %v3288, %v3598
      %v3651 = vadd.f32 %v3289, %v3603
      %v3652 = vadd.f32 %v3290, %v3606
      %v3653 = vadd.f32 %v3291, %v3611
      %v3654 = vadd.f32 %v3292, %v3614
      %v3655 = vadd.f32 %v3293, %v3619
      %v3656 = vadd.f32 %v3294, %v3622
      %v3657 = vld [vmem:[%s3298] sm:$0xf]
      %v3658 = vld [vmem:[%s3298 + $0x4] sm:$0xf]
      %v3659 = vld [vmem:[%s3298 + $0x8] sm:$0x1]
      %v3660 = vld [vmem:[%s3298 + $0xc] sm:$0xf]
      %v3661 = vld [vmem:[%s3298 + $0x10] sm:$0xf]
      %v3662 = vld [vmem:[%s3298 + $0x14] sm:$0x1]
      %v3663 = vld [vmem:[%s3298 + $0x18] sm:$0xf]
      %v3664 = vld [vmem:[%s3298 + $0x1c] sm:$0xf]
      %v3665 = vld [vmem:[%s3298 + $0x20] sm:$0x1]
      %v3666 = vld [vmem:[%s3298 + $0x24] sm:$0xf]
      %v3667 = vld [vmem:[%s3298 + $0x28] sm:$0xf]
      %v3668 = vld [vmem:[%s3298 + $0x2c] sm:$0x1]
      %v3669 = vld [vmem:[%s3298 + $0x30] sm:$0xf]
      %v3670 = vld [vmem:[%s3298 + $0x34] sm:$0xf]
      %v3671 = vld [vmem:[%s3298 + $0x38] sm:$0x1]
      %v3672 = vld [vmem:[%s3298 + $0x3c] sm:$0xf]
      %v3673 = vld [vmem:[%s3298 + $0x40] sm:$0xf]
      %v3674 = vld [vmem:[%s3298 + $0x44] sm:$0x1]
      %v3675 = vld [vmem:[%s3298 + $0x48] sm:$0xf]
      %v3676 = vld [vmem:[%s3298 + $0x4c] sm:$0xf]
      %v3677 = vld [vmem:[%s3298 + $0x50] sm:$0x1]
      %v3678 = vld [vmem:[%s3298 + $0x54] sm:$0xf]
      %v3679 = vld [vmem:[%s3298 + $0x58] sm:$0xf]
      %v3680 = vld [vmem:[%s3298 + $0x5c] sm:$0x1]
      %v3681 = vld [vmem:[%s3298 + $0x60] sm:$0xf]
      %v3682 = vld [vmem:[%s3298 + $0x64] sm:$0xf]
      %v3683 = vld [vmem:[%s3298 + $0x68] sm:$0x1]
      %v3684 = vld [vmem:[%s3298 + $0x6c] sm:$0xf]
      %v3685 = vld [vmem:[%s3298 + $0x70] sm:$0xf]
      %v3686 = vld [vmem:[%s3298 + $0x74] sm:$0x1]
      %v3687 = vld [vmem:[%s3298 + $0x78] sm:$0xf]
      %v3688 = vld [vmem:[%s3298 + $0x7c] sm:$0xf]
      %v3689 = vld [vmem:[%s3298 + $0x80] sm:$0x1]
      %v3690 = vld [vmem:[%s3298 + $0x84] sm:$0xf]
      %v3691 = vld [vmem:[%s3298 + $0x88] sm:$0xf]
      %v3692 = vld [vmem:[%s3298 + $0x8c] sm:$0x1]
      %v3693 = vld [vmem:[%s3298 + $0x90] sm:$0xf]
      %v3694 = vld [vmem:[%s3298 + $0x94] sm:$0xf]
      %v3695 = vld [vmem:[%s3298 + $0x98] sm:$0x1]
      %v3696 = vld [vmem:[%s3298 + $0x9c] sm:$0xf]
      %v3697 = vld [vmem:[%s3298 + $0xa0] sm:$0xf]
      %v3698 = vld [vmem:[%s3298 + $0xa4] sm:$0x1]
      %v3699 = vld [vmem:[%s3298 + $0xa8] sm:$0xf]
      %v3700 = vld [vmem:[%s3298 + $0xac] sm:$0xf]
      %v3701 = vld [vmem:[%s3298 + $0xb0] sm:$0x1]
      %v3702 = vld [vmem:[%s3298 + $0xb4] sm:$0xf]
      %v3703 = vld [vmem:[%s3298 + $0xb8] sm:$0xf]
      %v3704 = vld [vmem:[%s3298 + $0xbc] sm:$0x1]
      %v3706 = vshrl.u32 %v3657, 16
      %v3708 = vrot.slane %v3706, 4
      %v3709 = vshll.u32 %v3657, 16
      %v3711 = vrot.slane %v3709, 5
      %v3712 = vor.u32 %v3708, %v3711
      %v3713 = vrot.slane %v3712, 4
      %v3715 = vshll.u32 %v3658, 16
      %v3717 = vrot.slane %v3715, 5
      %v3718 = vsel %vm339, %v3713, %v3717
      %v3719 = vshrl.u32 %v3658, 16
      %v3721 = vrot.slane %v3719, 4
      %v3722 = vor.u32 %v3721, %v3717
      %v3723 = vrot.slane %v3722, 4
      %v3725 = vshll.u32 %v3659, 16
      %v3727 = vrot.slane %v3725, 5
      %v3728 = vsel %vm339, %v3723, %v3727
      %v3730 = vshrl.u32 %v3660, 16
      %v3732 = vrot.slane %v3730, 4
      %v3733 = vshll.u32 %v3660, 16
      %v3735 = vrot.slane %v3733, 5
      %v3736 = vor.u32 %v3732, %v3735
      %v3737 = vrot.slane %v3736, 4
      %v3739 = vshll.u32 %v3661, 16
      %v3741 = vrot.slane %v3739, 5
      %v3742 = vsel %vm339, %v3737, %v3741
      %v3743 = vshrl.u32 %v3661, 16
      %v3745 = vrot.slane %v3743, 4
      %v3746 = vor.u32 %v3745, %v3741
      %v3747 = vrot.slane %v3746, 4
      %v3749 = vshll.u32 %v3662, 16
      %v3751 = vrot.slane %v3749, 5
      %v3752 = vsel %vm339, %v3747, %v3751
      %v3754 = vshrl.u32 %v3663, 16
      %v3756 = vrot.slane %v3754, 4
      %v3757 = vshll.u32 %v3663, 16
      %v3759 = vrot.slane %v3757, 5
      %v3760 = vor.u32 %v3756, %v3759
      %v3761 = vrot.slane %v3760, 4
      %v3763 = vshll.u32 %v3664, 16
      %v3765 = vrot.slane %v3763, 5
      %v3766 = vsel %vm339, %v3761, %v3765
      %v3767 = vshrl.u32 %v3664, 16
      %v3769 = vrot.slane %v3767, 4
      %v3770 = vor.u32 %v3769, %v3765
      %v3771 = vrot.slane %v3770, 4
      %v3773 = vshll.u32 %v3665, 16
      %v3775 = vrot.slane %v3773, 5
      %v3776 = vsel %vm339, %v3771, %v3775
      %v3778 = vshrl.u32 %v3666, 16
      %v3780 = vrot.slane %v3778, 4
      %v3781 = vshll.u32 %v3666, 16
      %v3783 = vrot.slane %v3781, 5
      %v3784 = vor.u32 %v3780, %v3783
      %v3785 = vrot.slane %v3784, 4
      %v3787 = vshll.u32 %v3667, 16
      %v3789 = vrot.slane %v3787, 5
      %v3790 = vsel %vm339, %v3785, %v3789
      %v3791 = vshrl.u32 %v3667, 16
      %v3793 = vrot.slane %v3791, 4
      %v3794 = vor.u32 %v3793, %v3789
      %v3795 = vrot.slane %v3794, 4
      %v3797 = vshll.u32 %v3668, 16
      %v3799 = vrot.slane %v3797, 5
      %v3800 = vsel %vm339, %v3795, %v3799
      %v3802 = vshrl.u32 %v3669, 16
      %v3804 = vrot.slane %v3802, 4
      %v3805 = vshll.u32 %v3669, 16
      %v3807 = vrot.slane %v3805, 5
      %v3808 = vor.u32 %v3804, %v3807
      %v3809 = vrot.slane %v3808, 4
      %v3811 = vshll.u32 %v3670, 16
      %v3813 = vrot.slane %v3811, 5
      %v3814 = vsel %vm339, %v3809, %v3813
      %v3815 = vshrl.u32 %v3670, 16
      %v3817 = vrot.slane %v3815, 4
      %v3818 = vor.u32 %v3817, %v3813
      %v3819 = vrot.slane %v3818, 4
      %v3821 = vshll.u32 %v3671, 16
      %v3823 = vrot.slane %v3821, 5
      %v3824 = vsel %vm339, %v3819, %v3823
      %v3826 = vshrl.u32 %v3672, 16
      %v3828 = vrot.slane %v3826, 4
      %v3829 = vshll.u32 %v3672, 16
      %v3831 = vrot.slane %v3829, 5
      %v3832 = vor.u32 %v3828, %v3831
      %v3833 = vrot.slane %v3832, 4
      %v3835 = vshll.u32 %v3673, 16
      %v3837 = vrot.slane %v3835, 5
      %v3838 = vsel %vm339, %v3833, %v3837
      %v3839 = vshrl.u32 %v3673, 16
      %v3841 = vrot.slane %v3839, 4
      %v3842 = vor.u32 %v3841, %v3837
      %v3843 = vrot.slane %v3842, 4
      %v3845 = vshll.u32 %v3674, 16
      %v3847 = vrot.slane %v3845, 5
      %v3848 = vsel %vm339, %v3843, %v3847
      %v3850 = vshrl.u32 %v3675, 16
      %v3852 = vrot.slane %v3850, 4
      %v3853 = vshll.u32 %v3675, 16
      %v3855 = vrot.slane %v3853, 5
      %v3856 = vor.u32 %v3852, %v3855
      %v3857 = vrot.slane %v3856, 4
      %v3859 = vshll.u32 %v3676, 16
      %v3861 = vrot.slane %v3859, 5
      %v3862 = vsel %vm339, %v3857, %v3861
      %v3863 = vshrl.u32 %v3676, 16
      %v3865 = vrot.slane %v3863, 4
      %v3866 = vor.u32 %v3865, %v3861
      %v3867 = vrot.slane %v3866, 4
      %v3869 = vshll.u32 %v3677, 16
      %v3871 = vrot.slane %v3869, 5
      %v3872 = vsel %vm339, %v3867, %v3871
      %v3874 = vshrl.u32 %v3678, 16
      %v3876 = vrot.slane %v3874, 4
      %v3877 = vshll.u32 %v3678, 16
      %v3879 = vrot.slane %v3877, 5
      %v3880 = vor.u32 %v3876, %v3879
      %v3881 = vrot.slane %v3880, 4
      %v3883 = vshll.u32 %v3679, 16
      %v3885 = vrot.slane %v3883, 5
      %v3886 = vsel %vm339, %v3881, %v3885
      %v3887 = vshrl.u32 %v3679, 16
      %v3889 = vrot.slane %v3887, 4
      %v3890 = vor.u32 %v3889, %v3885
      %v3891 = vrot.slane %v3890, 4
      %v3893 = vshll.u32 %v3680, 16
      %v3895 = vrot.slane %v3893, 5
      %v3896 = vsel %vm339, %v3891, %v3895
      %v3898 = vshrl.u32 %v3681, 16
      %v3900 = vrot.slane %v3898, 4
      %v3901 = vshll.u32 %v3681, 16
      %v3903 = vrot.slane %v3901, 5
      %v3904 = vor.u32 %v3900, %v3903
      %v3905 = vrot.slane %v3904, 4
      %v3907 = vshll.u32 %v3682, 16
      %v3909 = vrot.slane %v3907, 5
      %v3910 = vsel %vm339, %v3905, %v3909
      %v3911 = vshrl.u32 %v3682, 16
      %v3913 = vrot.slane %v3911, 4
      %v3914 = vor.u32 %v3913, %v3909
      %v3915 = vrot.slane %v3914, 4
      %v3917 = vshll.u32 %v3683, 16
      %v3919 = vrot.slane %v3917, 5
      %v3920 = vsel %vm339, %v3915, %v3919
      %v3922 = vshrl.u32 %v3684, 16
      %v3924 = vrot.slane %v3922, 4
      %v3925 = vshll.u32 %v3684, 16
      %v3927 = vrot.slane %v3925, 5
      %v3928 = vor.u32 %v3924, %v3927
      %v3929 = vrot.slane %v3928, 4
      %v3931 = vshll.u32 %v3685, 16
      %v3933 = vrot.slane %v3931, 5
      %v3934 = vsel %vm339, %v3929, %v3933
      %v3935 = vshrl.u32 %v3685, 16
      %v3937 = vrot.slane %v3935, 4
      %v3938 = vor.u32 %v3937, %v3933
      %v3939 = vrot.slane %v3938, 4
      %v3941 = vshll.u32 %v3686, 16
      %v3943 = vrot.slane %v3941, 5
      %v3944 = vsel %vm339, %v3939, %v3943
      %v3946 = vshrl.u32 %v3687, 16
      %v3948 = vrot.slane %v3946, 4
      %v3949 = vshll.u32 %v3687, 16
      %v3951 = vrot.slane %v3949, 5
      %v3952 = vor.u32 %v3948, %v3951
      %v3953 = vrot.slane %v3952, 4
      %v3955 = vshll.u32 %v3688, 16
      %v3957 = vrot.slane %v3955, 5
      %v3958 = vsel %vm339, %v3953, %v3957
      %v3959 = vshrl.u32 %v3688, 16
      %v3961 = vrot.slane %v3959, 4
      %v3962 = vor.u32 %v3961, %v3957
      %v3963 = vrot.slane %v3962, 4
      %v3965 = vshll.u32 %v3689, 16
      %v3967 = vrot.slane %v3965, 5
      %v3968 = vsel %vm339, %v3963, %v3967
      %v3970 = vshrl.u32 %v3690, 16
      %v3972 = vrot.slane %v3970, 4
      %v3973 = vshll.u32 %v3690, 16
      %v3975 = vrot.slane %v3973, 5
      %v3976 = vor.u32 %v3972, %v3975
      %v3977 = vrot.slane %v3976, 4
      %v3979 = vshll.u32 %v3691, 16
      %v3981 = vrot.slane %v3979, 5
      %v3982 = vsel %vm339, %v3977, %v3981
      %v3983 = vshrl.u32 %v3691, 16
      %v3985 = vrot.slane %v3983, 4
      %v3986 = vor.u32 %v3985, %v3981
      %v3987 = vrot.slane %v3986, 4
      %v3989 = vshll.u32 %v3692, 16
      %v3991 = vrot.slane %v3989, 5
      %v3992 = vsel %vm339, %v3987, %v3991
      %v3994 = vshrl.u32 %v3693, 16
      %v3996 = vrot.slane %v3994, 4
      %v3997 = vshll.u32 %v3693, 16
      %v3999 = vrot.slane %v3997, 5
      %v4000 = vor.u32 %v3996, %v3999
      %v4001 = vrot.slane %v4000, 4
      %v4003 = vshll.u32 %v3694, 16
      %v4005 = vrot.slane %v4003, 5
      %v4006 = vsel %vm339, %v4001, %v4005
      %v4007 = vshrl.u32 %v3694, 16
      %v4009 = vrot.slane %v4007, 4
      %v4010 = vor.u32 %v4009, %v4005
      %v4011 = vrot.slane %v4010, 4
      %v4013 = vshll.u32 %v3695, 16
      %v4015 = vrot.slane %v4013, 5
      %v4016 = vsel %vm339, %v4011, %v4015
      %v4018 = vshrl.u32 %v3696, 16
      %v4020 = vrot.slane %v4018, 4
      %v4021 = vshll.u32 %v3696, 16
      %v4023 = vrot.slane %v4021, 5
      %v4024 = vor.u32 %v4020, %v4023
      %v4025 = vrot.slane %v4024, 4
      %v4027 = vshll.u32 %v3697, 16
      %v4029 = vrot.slane %v4027, 5
      %v4030 = vsel %vm339, %v4025, %v4029
      %v4031 = vshrl.u32 %v3697, 16
      %v4033 = vrot.slane %v4031, 4
      %v4034 = vor.u32 %v4033, %v4029
      %v4035 = vrot.slane %v4034, 4
      %v4037 = vshll.u32 %v3698, 16
      %v4039 = vrot.slane %v4037, 5
      %v4040 = vsel %vm339, %v4035, %v4039
      %v4042 = vshrl.u32 %v3699, 16
      %v4044 = vrot.slane %v4042, 4
      %v4045 = vshll.u32 %v3699, 16
      %v4047 = vrot.slane %v4045, 5
      %v4048 = vor.u32 %v4044, %v4047
      %v4049 = vrot.slane %v4048, 4
      %v4051 = vshll.u32 %v3700, 16
      %v4053 = vrot.slane %v4051, 5
      %v4054 = vsel %vm339, %v4049, %v4053
      %v4055 = vshrl.u32 %v3700, 16
      %v4057 = vrot.slane %v4055, 4
      %v4058 = vor.u32 %v4057, %v4053
      %v4059 = vrot.slane %v4058, 4
      %v4061 = vshll.u32 %v3701, 16
      %v4063 = vrot.slane %v4061, 5
      %v4064 = vsel %vm339, %v4059, %v4063
      %v4066 = vshrl.u32 %v3702, 16
      %v4068 = vrot.slane %v4066, 4
      %v4069 = vshll.u32 %v3702, 16
      %v4071 = vrot.slane %v4069, 5
      %v4072 = vor.u32 %v4068, %v4071
      %v4073 = vrot.slane %v4072, 4
      %v4075 = vshll.u32 %v3703, 16
      %v4077 = vrot.slane %v4075, 5
      %v4078 = vsel %vm339, %v4073, %v4077
      %v4079 = vshrl.u32 %v3703, 16
      %v4081 = vrot.slane %v4079, 4
      %v4082 = vor.u32 %v4081, %v4077
      %v4083 = vrot.slane %v4082, 4
      %v4085 = vshll.u32 %v3704, 16
      %v4087 = vrot.slane %v4085, 5
      %v4088 = vsel %vm339, %v4083, %v4087
      %s4089 = scalar_lea.vmem %s262, 14
      %v4090 = vld [vmem:[%s4089] sm:$0x3]
      %v4091 = vunpack.c.l.b16 %v3718
      %v4092 = vunpack.c.l.b16 %v3728
      %v4093 = vunpack.c.l.b16 %v3742
      %v4094 = vunpack.c.l.b16 %v3752
      %v4095 = vunpack.c.l.b16 %v3766
      %v4096 = vunpack.c.l.b16 %v3776
      %v4097 = vunpack.c.l.b16 %v3790
      %v4098 = vunpack.c.l.b16 %v3800
      %v4099 = vunpack.c.l.b16 %v3814
      %v4100 = vunpack.c.l.b16 %v3824
      %v4101 = vunpack.c.l.b16 %v3838
      %v4102 = vunpack.c.l.b16 %v3848
      %v4103 = vunpack.c.l.b16 %v3862
      %v4104 = vunpack.c.l.b16 %v3872
      %v4105 = vunpack.c.l.b16 %v3886
      %v4106 = vunpack.c.l.b16 %v3896
      %v4107 = vunpack.c.l.b16 %v3910
      %v4108 = vunpack.c.l.b16 %v3920
      %v4109 = vunpack.c.l.b16 %v3934
      %v4110 = vunpack.c.l.b16 %v3944
      %v4111 = vunpack.c.l.b16 %v3958
      %v4112 = vunpack.c.l.b16 %v3968
      %v4113 = vunpack.c.l.b16 %v3982
      %v4114 = vunpack.c.l.b16 %v3992
      %v4115 = vunpack.c.l.b16 %v4006
      %v4116 = vunpack.c.l.b16 %v4016
      %v4117 = vunpack.c.l.b16 %v4030
      %v4118 = vunpack.c.l.b16 %v4040
      %v4119 = vunpack.c.l.b16 %v4054
      %v4120 = vunpack.c.l.b16 %v4064
      %v4121 = vunpack.c.l.b16 %v4078
      %v4122 = vunpack.c.l.b16 %v4088
      %v4123 = vpack.c.b16 %v4092, %v4091
      %v4124 = vpack.c.b16 %v4094, %v4093
      %v4125 = vpack.c.b16 %v4096, %v4095
      %v4126 = vpack.c.b16 %v4098, %v4097
      %v4127 = vpack.c.b16 %v4100, %v4099
      %v4128 = vpack.c.b16 %v4102, %v4101
      %v4129 = vpack.c.b16 %v4104, %v4103
      %v4130 = vpack.c.b16 %v4106, %v4105
      %v4131 = vpack.c.b16 %v4108, %v4107
      %v4132 = vpack.c.b16 %v4110, %v4109
      %v4133 = vpack.c.b16 %v4112, %v4111
      %v4134 = vpack.c.b16 %v4114, %v4113
      %v4135 = vpack.c.b16 %v4116, %v4115
      %v4136 = vpack.c.b16 %v4118, %v4117
      %v4137 = vpack.c.b16 %v4120, %v4119
      %v4138 = vpack.c.b16 %v4122, %v4121
      %v4140 = vsel %vm774, %v4123, 0
      %v4143 = vsel %vm774, %v4124, 0
      %v4146 = vsel %vm774, %v4125, 0
      %v4149 = vsel %vm774, %v4126, 0
      %v4152 = vsel %vm774, %v4127, 0
      %v4155 = vsel %vm774, %v4128, 0
      %v4158 = vsel %vm774, %v4129, 0
      %v4161 = vsel %vm774, %v4130, 0
      %v4164 = vsel %vm774, %v4131, 0
      %v4167 = vsel %vm774, %v4132, 0
      %v4170 = vsel %vm774, %v4133, 0
      %v4173 = vsel %vm774, %v4134, 0
      %v4176 = vsel %vm774, %v4135, 0
      %v4179 = vsel %vm774, %v4136, 0
      %v4182 = vsel %vm774, %v4137, 0
      %v4185 = vsel %vm774, %v4138, 0
      %v4188 = vsel %vm823, %v4090, 0
      %4190 = vmatprep.subr.bf16.mxu0 0
      %4191 = vmatpush1.bf16.msra.mxu0 %v4188
      %4192 = vmatprep.subr.bf16.mxu0 0
      %4193 = vmatpush1.bf16.msra.mxu0 0
      %4194 = vmatprep.subr.bf16.mxu0 0
      %4195 = vmatpush1.bf16.msra.mxu0 0
      %4196 = vmatprep.subr.bf16.mxu0 0
      %4197 = vmatpush1.bf16.msra.mxu0 0
      %4198 = vmatprep.subr.bf16.mxu0 0
      %4199 = vmatpush1.bf16.msra.mxu0 0
      %4200 = vmatprep.subr.bf16.mxu0 0
      %4201 = vmatpush1.bf16.msra.mxu0 0
      %4202 = vmatprep.subr.bf16.mxu0 0
      %4203 = vmatpush1.bf16.msra.mxu0 0
      %4204 = vmatprep.subr.bf16.mxu0 0
      %4205 = vmatpush1.bf16.msra.mxu0 0
      %4206 = vmatprep.subr.bf16.mxu0 0
      %4207 = vmatpush1.bf16.msra.mxu0 0
      %4208 = vmatprep.subr.bf16.mxu0 0
      %4209 = vmatpush1.bf16.msra.mxu0 0
      %4210 = vmatprep.subr.bf16.mxu0 0
      %4211 = vmatpush1.bf16.msra.mxu0 0
      %4212 = vmatprep.subr.bf16.mxu0 0
      %4213 = vmatpush1.bf16.msra.mxu0 0
      %4214 = vmatprep.subr.bf16.mxu0 0
      %4215 = vmatpush1.bf16.msra.mxu0 0
      %4216 = vmatprep.subr.bf16.mxu0 0
      %4217 = vmatpush1.bf16.msra.mxu0 0
      %4218 = vmatprep.subr.bf16.mxu0 0
      %4219 = vmatpush1.bf16.msra.mxu0 0
      %4220 = vmatprep.subr.bf16.mxu0 0
      %4221 = vmatpush1.bf16.msra.mxu0 0
      %4222 = vmatprep.mubr.bf16.mxu0 0
      %4223 = vmatmul.mubr.bf16.gmra.mrb[0].mxu0 %v4140
      %v4224 = vpop.f32.mrb[0].mxu0
      %v4225 = vadd.f32 0.0, %v4224
      %v4226 = vpop.f32.mrb[0].mxu0
      %v4227 = vpop.f32.mrb[0].mxu0
      %v4228 = vadd.f32 0.0, %v4227
      %v4229 = vpop.f32.mrb[0].mxu0
      %4230 = vmatprep.mubr.bf16.mxu0 0
      %4231 = vmatmul.mubr.bf16.gmra.mrb[0].mxu0 %v4143
      %v4232 = vpop.f32.mrb[0].mxu0
      %v4233 = vadd.f32 0.0, %v4232
      %v4234 = vpop.f32.mrb[0].mxu0
      %v4235 = vpop.f32.mrb[0].mxu0
      %v4236 = vadd.f32 0.0, %v4235
      %v4237 = vpop.f32.mrb[0].mxu0
      %4238 = vmatprep.mubr.bf16.mxu0 0
      %4239 = vmatmul.mubr.bf16.gmra.mrb[0].mxu0 %v4146
      %v4240 = vpop.f32.mrb[0].mxu0
      %v4241 = vadd.f32 0.0, %v4240
      %v4242 = vpop.f32.mrb[0].mxu0
      %v4243 = vpop.f32.mrb[0].mxu0
      %v4244 = vadd.f32 0.0, %v4243
      %v4245 = vpop.f32.mrb[0].mxu0
      %4246 = vmatprep.mubr.bf16.mxu0 0
      %4247 = vmatmul.mubr.bf16.gmra.mrb[0].mxu0 %v4149
      %v4248 = vpop.f32.mrb[0].mxu0
      %v4249 = vadd.f32 0.0, %v4248
      %v4250 = vpop.f32.mrb[0].mxu0
      %v4251 = vpop.f32.mrb[0].mxu0
      %v4252 = vadd.f32 0.0, %v4251
      %v4253 = vpop.f32.mrb[0].mxu0
      %4254 = vmatprep.mubr.bf16.mxu0 0
      %4255 = vmatmul.mubr.bf16.gmra.mrb[0].mxu0 %v4152
      %v4256 = vpop.f32.mrb[0].mxu0
      %v4257 = vadd.f32 0.0, %v4256
      %v4258 = vpop.f32.mrb[0].mxu0
      %v4259 = vpop.f32.mrb[0].mxu0
      %v4260 = vadd.f32 0.0, %v4259
      %v4261 = vpop.f32.mrb[0].mxu0
      %4262 = vmatprep.mubr.bf16.mxu0 0
      %4263 = vmatmul.mubr.bf16.gmra.mrb[0].mxu0 %v4155
      %v4264 = vpop.f32.mrb[0].mxu0
      %v4265 = vadd.f32 0.0, %v4264
      %v4266 = vpop.f32.mrb[0].mxu0
      %v4267 = vpop.f32.mrb[0].mxu0
      %v4268 = vadd.f32 0.0, %v4267
      %v4269 = vpop.f32.mrb[0].mxu0
      %4270 = vmatprep.mubr.bf16.mxu0 0
      %4271 = vmatmul.mubr.bf16.gmra.mrb[0].mxu0 %v4158
      %v4272 = vpop.f32.mrb[0].mxu0
      %v4273 = vadd.f32 0.0, %v4272
      %v4274 = vpop.f32.mrb[0].mxu0
      %v4275 = vpop.f32.mrb[0].mxu0
      %v4276 = vadd.f32 0.0, %v4275
      %v4277 = vpop.f32.mrb[0].mxu0
      %4278 = vmatprep.mubr.bf16.mxu0 0
      %4279 = vmatmul.mubr.bf16.gmra.mrb[0].mxu0 %v4161
      %v4280 = vpop.f32.mrb[0].mxu0
      %v4281 = vadd.f32 0.0, %v4280
      %v4282 = vpop.f32.mrb[0].mxu0
      %v4283 = vpop.f32.mrb[0].mxu0
      %v4284 = vadd.f32 0.0, %v4283
      %v4285 = vpop.f32.mrb[0].mxu0
      %4286 = vmatprep.mubr.bf16.mxu0 0
      %4287 = vmatmul.mubr.bf16.gmra.mrb[0].mxu0 %v4164
      %v4288 = vpop.f32.mrb[0].mxu0
      %v4289 = vadd.f32 0.0, %v4288
      %v4290 = vpop.f32.mrb[0].mxu0
      %v4291 = vpop.f32.mrb[0].mxu0
      %v4292 = vadd.f32 0.0, %v4291
      %v4293 = vpop.f32.mrb[0].mxu0
      %4294 = vmatprep.mubr.bf16.mxu0 0
      %4295 = vmatmul.mubr.bf16.gmra.mrb[0].mxu0 %v4167
      %v4296 = vpop.f32.mrb[0].mxu0
      %v4297 = vadd.f32 0.0, %v4296
      %v4298 = vpop.f32.mrb[0].mxu0
      %v4299 = vpop.f32.mrb[0].mxu0
      %v4300 = vadd.f32 0.0, %v4299
      %v4301 = vpop.f32.mrb[0].mxu0
      %4302 = vmatprep.mubr.bf16.mxu0 0
      %4303 = vmatmul.mubr.bf16.gmra.mrb[0].mxu0 %v4170
      %v4304 = vpop.f32.mrb[0].mxu0
      %v4305 = vadd.f32 0.0, %v4304
      %v4306 = vpop.f32.mrb[0].mxu0
      %v4307 = vpop.f32.mrb[0].mxu0
      %v4308 = vadd.f32 0.0, %v4307
      %v4309 = vpop.f32.mrb[0].mxu0
      %4310 = vmatprep.mubr.bf16.mxu0 0
      %4311 = vmatmul.mubr.bf16.gmra.mrb[0].mxu0 %v4173
      %v4312 = vpop.f32.mrb[0].mxu0
      %v4313 = vadd.f32 0.0, %v4312
      %v4314 = vpop.f32.mrb[0].mxu0
      %v4315 = vpop.f32.mrb[0].mxu0
      %v4316 = vadd.f32 0.0, %v4315
      %v4317 = vpop.f32.mrb[0].mxu0
      %4318 = vmatprep.mubr.bf16.mxu0 0
      %4319 = vmatmul.mubr.bf16.gmra.mrb[0].mxu0 %v4176
      %v4320 = vpop.f32.mrb[0].mxu0
      %v4321 = vadd.f32 0.0, %v4320
      %v4322 = vpop.f32.mrb[0].mxu0
      %v4323 = vpop.f32.mrb[0].mxu0
      %v4324 = vadd.f32 0.0, %v4323
      %v4325 = vpop.f32.mrb[0].mxu0
      %4326 = vmatprep.mubr.bf16.mxu0 0
      %4327 = vmatmul.mubr.bf16.gmra.mrb[0].mxu0 %v4179
      %v4328 = vpop.f32.mrb[0].mxu0
      %v4329 = vadd.f32 0.0, %v4328
      %v4330 = vpop.f32.mrb[0].mxu0
      %v4331 = vpop.f32.mrb[0].mxu0
      %v4332 = vadd.f32 0.0, %v4331
      %v4333 = vpop.f32.mrb[0].mxu0
      %4334 = vmatprep.mubr.bf16.mxu0 0
      %4335 = vmatmul.mubr.bf16.gmra.mrb[0].mxu0 %v4182
      %v4336 = vpop.f32.mrb[0].mxu0
      %v4337 = vadd.f32 0.0, %v4336
      %v4338 = vpop.f32.mrb[0].mxu0
      %v4339 = vpop.f32.mrb[0].mxu0
      %v4340 = vadd.f32 0.0, %v4339
      %v4341 = vpop.f32.mrb[0].mxu0
      %4342 = vmatprep.mubr.bf16.mxu0 0
      %4343 = vmatmul.mubr.bf16.gmra.mrb[0].mxu0 %v4185
      %v4344 = vpop.f32.mrb[0].mxu0
      %v4345 = vadd.f32 0.0, %v4344
      %v4346 = vpop.f32.mrb[0].mxu0
      %v4347 = vpop.f32.mrb[0].mxu0
      %v4348 = vadd.f32 0.0, %v4347
      %v4349 = vpop.f32.mrb[0].mxu0
      %4350 = vdwg.mxu0
      %v4351 = vadd.f32 %v3625, %v4225
      %v4352 = vadd.f32 %v3626, %v4228
      %v4353 = vadd.f32 %v3627, %v4233
      %v4354 = vadd.f32 %v3628, %v4236
      %v4355 = vadd.f32 %v3629, %v4241
      %v4356 = vadd.f32 %v3630, %v4244
      %v4357 = vadd.f32 %v3631, %v4249
      %v4358 = vadd.f32 %v3632, %v4252
      %v4359 = vadd.f32 %v3633, %v4257
      %v4360 = vadd.f32 %v3634, %v4260
      %v4361 = vadd.f32 %v3635, %v4265
      %v4362 = vadd.f32 %v3636, %v4268
      %v4363 = vadd.f32 %v3637, %v4273
      %v4364 = vadd.f32 %v3638, %v4276
      %v4365 = vadd.f32 %v3639, %v4281
      %v4366 = vadd.f32 %v3640, %v4284
      %v4367 = vadd.f32 %v3641, %v4289
      %v4368 = vadd.f32 %v3642, %v4292
      %v4369 = vadd.f32 %v3643, %v4297
      %v4370 = vadd.f32 %v3644, %v4300
      %v4371 = vadd.f32 %v3645, %v4305
      %v4372 = vadd.f32 %v3646, %v4308
      %v4373 = vadd.f32 %v3647, %v4313
      %v4374 = vadd.f32 %v3648, %v4316
      %v4375 = vadd.f32 %v3649, %v4321
      %v4376 = vadd.f32 %v3650, %v4324
      %v4377 = vadd.f32 %v3651, %v4329
      %v4378 = vadd.f32 %v3652, %v4332
      %v4379 = vadd.f32 %v3653, %v4337
      %v4380 = vadd.f32 %v3654, %v4340
      %v4381 = vadd.f32 %v3655, %v4345
      %v4382 = vadd.f32 %v3656, %v4348
      %v4383 = vld [vmem:[%s3298] sm:$0xe]
      %v4384 = vld [vmem:[%s3298 + $0xc] sm:$0xe]
      %v4385 = vld [vmem:[%s3298 + $0x18] sm:$0xe]
      %v4386 = vld [vmem:[%s3298 + $0x24] sm:$0xe]
      %v4387 = vld [vmem:[%s3298 + $0x30] sm:$0xe]
      %v4388 = vld [vmem:[%s3298 + $0x3c] sm:$0xe]
      %v4389 = vld [vmem:[%s3298 + $0x48] sm:$0xe]
      %v4390 = vld [vmem:[%s3298 + $0x54] sm:$0xe]
      %v4391 = vld [vmem:[%s3298 + $0x60] sm:$0xe]
      %v4392 = vld [vmem:[%s3298 + $0x6c] sm:$0xe]
      %v4393 = vld [vmem:[%s3298 + $0x78] sm:$0xe]
      %v4394 = vld [vmem:[%s3298 + $0x84] sm:$0xe]
      %v4395 = vld [vmem:[%s3298 + $0x90] sm:$0xe]
      %v4396 = vld [vmem:[%s3298 + $0x9c] sm:$0xe]
      %v4397 = vld [vmem:[%s3298 + $0xa8] sm:$0xe]
      %v4398 = vld [vmem:[%s3298 + $0xb4] sm:$0xe]
      %v4447 = vrot.slane %v4383, 5
      %v4448 = vrot.slane %v4447, 4
      %v4449 = vrot.slane %v3658, 5
      %v4450 = vsel %vm1330, %v4448, %v4449
      %v4451 = vrot.slane %v4449, 4
      %v4452 = vrot.slane %v3659, 5
      %v4453 = vsel %vm1330, %v4451, %v4452
      %v4454 = vrot.slane %v4384, 5
      %v4455 = vrot.slane %v4454, 4
      %v4456 = vrot.slane %v3661, 5
      %v4457 = vsel %vm1330, %v4455, %v4456
      %v4458 = vrot.slane %v4456, 4
      %v4459 = vrot.slane %v3662, 5
      %v4460 = vsel %vm1330, %v4458, %v4459
      %v4461 = vrot.slane %v4385, 5
      %v4462 = vrot.slane %v4461, 4
      %v4463 = vrot.slane %v3664, 5
      %v4464 = vsel %vm1330, %v4462, %v4463
      %v4465 = vrot.slane %v4463, 4
      %v4466 = vrot.slane %v3665, 5
      %v4467 = vsel %vm1330, %v4465, %v4466
      %v4468 = vrot.slane %v4386, 5
      %v4469 = vrot.slane %v4468, 4
      %v4470 = vrot.slane %v3667, 5
      %v4471 = vsel %vm1330, %v4469, %v4470
      %v4472 = vrot.slane %v4470, 4
      %v4473 = vrot.slane %v3668, 5
      %v4474 = vsel %vm1330, %v4472, %v4473
      %v4475 = vrot.slane %v4387, 5
      %v4476 = vrot.slane %v4475, 4
      %v4477 = vrot.slane %v3670, 5
      %v4478 = vsel %vm1330, %v4476, %v4477
      %v4479 = vrot.slane %v4477, 4
      %v4480 = vrot.slane %v3671, 5
      %v4481 = vsel %vm1330, %v4479, %v4480
      %v4482 = vrot.slane %v4388, 5
      %v4483 = vrot.slane %v4482, 4
      %v4484 = vrot.slane %v3673, 5
      %v4485 = vsel %vm1330, %v4483, %v4484
      %v4486 = vrot.slane %v4484, 4
      %v4487 = vrot.slane %v3674, 5
      %v4488 = vsel %vm1330, %v4486, %v4487
      %v4489 = vrot.slane %v4389, 5
      %v4490 = vrot.slane %v4489, 4
      %v4491 = vrot.slane %v3676, 5
      %v4492 = vsel %vm1330, %v4490, %v4491
      %v4493 = vrot.slane %v4491, 4
      %v4494 = vrot.slane %v3677, 5
      %v4495 = vsel %vm1330, %v4493, %v4494
      %v4496 = vrot.slane %v4390, 5
      %v4497 = vrot.slane %v4496, 4
      %v4498 = vrot.slane %v3679, 5
      %v4499 = vsel %vm1330, %v4497, %v4498
      %v4500 = vrot.slane %v4498, 4
      %v4501 = vrot.slane %v3680, 5
      %v4502 = vsel %vm1330, %v4500, %v4501
      %v4503 = vrot.slane %v4391, 5
      %v4504 = vrot.slane %v4503, 4
      %v4505 = vrot.slane %v3682, 5
      %v4506 = vsel %vm1330, %v4504, %v4505
      %v4507 = vrot.slane %v4505, 4
      %v4508 = vrot.slane %v3683, 5
      %v4509 = vsel %vm1330, %v4507, %v4508
      %v4510 = vrot.slane %v4392, 5
      %v4511 = vrot.slane %v4510, 4
      %v4512 = vrot.slane %v3685, 5
      %v4513 = vsel %vm1330, %v4511, %v4512
      %v4514 = vrot.slane %v4512, 4
      %v4515 = vrot.slane %v3686, 5
      %v4516 = vsel %vm1330, %v4514, %v4515
      %v4517 = vrot.slane %v4393, 5
      %v4518 = vrot.slane %v4517, 4
      %v4519 = vrot.slane %v3688, 5
      %v4520 = vsel %vm1330, %v4518, %v4519
      %v4521 = vrot.slane %v4519, 4
      %v4522 = vrot.slane %v3689, 5
      %v4523 = vsel %vm1330, %v4521, %v4522
      %v4524 = vrot.slane %v4394, 5
      %v4525 = vrot.slane %v4524, 4
      %v4526 = vrot.slane %v3691, 5
      %v4527 = vsel %vm1330, %v4525, %v4526
      %v4528 = vrot.slane %v4526, 4
      %v4529 = vrot.slane %v3692, 5
      %v4530 = vsel %vm1330, %v4528, %v4529
      %v4531 = vrot.slane %v4395, 5
      %v4532 = vrot.slane %v4531, 4
      %v4533 = vrot.slane %v3694, 5
      %v4534 = vsel %vm1330, %v4532, %v4533
      %v4535 = vrot.slane %v4533, 4
      %v4536 = vrot.slane %v3695, 5
      %v4537 = vsel %vm1330, %v4535, %v4536
      %v4538 = vrot.slane %v4396, 5
      %v4539 = vrot.slane %v4538, 4
      %v4540 = vrot.slane %v3697, 5
      %v4541 = vsel %vm1330, %v4539, %v4540
      %v4542 = vrot.slane %v4540, 4
      %v4543 = vrot.slane %v3698, 5
      %v4544 = vsel %vm1330, %v4542, %v4543
      %v4545 = vrot.slane %v4397, 5
      %v4546 = vrot.slane %v4545, 4
      %v4547 = vrot.slane %v3700, 5
      %v4548 = vsel %vm1330, %v4546, %v4547
      %v4549 = vrot.slane %v4547, 4
      %v4550 = vrot.slane %v3701, 5
      %v4551 = vsel %vm1330, %v4549, %v4550
      %v4552 = vrot.slane %v4398, 5
      %v4553 = vrot.slane %v4552, 4
      %v4554 = vrot.slane %v3703, 5
      %v4555 = vsel %vm1330, %v4553, %v4554
      %v4556 = vrot.slane %v4554, 4
      %v4557 = vrot.slane %v3704, 5
      %v4558 = vsel %vm1330, %v4556, %v4557
      %s4559 = scalar_lea.vmem %s262, 16
      %v4560 = vld [vmem:[%s4559] sm:$0x3]
      %v4561 = vunpack.c.l.b16 %v4450
      %v4562 = vunpack.c.l.b16 %v4453
      %v4563 = vunpack.c.l.b16 %v4457
      %v4564 = vunpack.c.l.b16 %v4460
      %v4565 = vunpack.c.l.b16 %v4464
      %v4566 = vunpack.c.l.b16 %v4467
      %v4567 = vunpack.c.l.b16 %v4471
      %v4568 = vunpack.c.l.b16 %v4474
      %v4569 = vunpack.c.l.b16 %v4478
      %v4570 = vunpack.c.l.b16 %v4481
      %v4571 = vunpack.c.l.b16 %v4485
      %v4572 = vunpack.c.l.b16 %v4488
      %v4573 = vunpack.c.l.b16 %v4492
      %v4574 = vunpack.c.l.b16 %v4495
      %v4575 = vunpack.c.l.b16 %v4499
      %v4576 = vunpack.c.l.b16 %v4502
      %v4577 = vunpack.c.l.b16 %v4506
      %v4578 = vunpack.c.l.b16 %v4509
      %v4579 = vunpack.c.l.b16 %v4513
      %v4580 = vunpack.c.l.b16 %v4516
      %v4581 = vunpack.c.l.b16 %v4520
      %v4582 = vunpack.c.l.b16 %v4523
      %v4583 = vunpack.c.l.b16 %v4527
      %v4584 = vunpack.c.l.b16 %v4530
      %v4585 = vunpack.c.l.b16 %v4534
      %v4586 = vunpack.c.l.b16 %v4537
      %v4587 = vunpack.c.l.b16 %v4541
      %v4588 = vunpack.c.l.b16 %v4544
      %v4589 = vunpack.c.l.b16 %v4548
      %v4590 = vunpack.c.l.b16 %v4551
      %v4591 = vunpack.c.l.b16 %v4555
      %v4592 = vunpack.c.l.b16 %v4558
      %v4593 = vpack.c.b16 %v4562, %v4561
      %v4594 = vpack.c.b16 %v4564, %v4563
      %v4595 = vpack.c.b16 %v4566, %v4565
      %v4596 = vpack.c.b16 %v4568, %v4567
      %v4597 = vpack.c.b16 %v4570, %v4569
      %v4598 = vpack.c.b16 %v4572, %v4571
      %v4599 = vpack.c.b16 %v4574, %v4573
      %v4600 = vpack.c.b16 %v4576, %v4575
      %v4601 = vpack.c.b16 %v4578, %v4577
      %v4602 = vpack.c.b16 %v4580, %v4579
      %v4603 = vpack.c.b16 %v4582, %v4581
      %v4604 = vpack.c.b16 %v4584, %v4583
      %v4605 = vpack.c.b16 %v4586, %v4585
      %v4606 = vpack.c.b16 %v4588, %v4587
      %v4607 = vpack.c.b16 %v4590, %v4589
      %v4608 = vpack.c.b16 %v4592, %v4591
      %v4610 = vsel %vm774, %v4593, 0
      %v4613 = vsel %vm774, %v4594, 0
      %v4616 = vsel %vm774, %v4595, 0
      %v4619 = vsel %vm774, %v4596, 0
      %v4622 = vsel %vm774, %v4597, 0
      %v4625 = vsel %vm774, %v4598, 0
      %v4628 = vsel %vm774, %v4599, 0
      %v4631 = vsel %vm774, %v4600, 0
      %v4634 = vsel %vm774, %v4601, 0
      %v4637 = vsel %vm774, %v4602, 0
      %v4640 = vsel %vm774, %v4603, 0
      %v4643 = vsel %vm774, %v4604, 0
      %v4646 = vsel %vm774, %v4605, 0
      %v4649 = vsel %vm774, %v4606, 0
      %v4652 = vsel %vm774, %v4607, 0
      %v4655 = vsel %vm774, %v4608, 0
      %v4658 = vsel %vm823, %v4560, 0
      %4660 = vmatprep.subr.bf16.mxu0 0
      %4661 = vmatpush1.bf16.msra.mxu0 %v4658
      %4662 = vmatprep.subr.bf16.mxu0 0
      %4663 = vmatpush1.bf16.msra.mxu0 0
      %4664 = vmatprep.subr.bf16.mxu0 0
      %4665 = vmatpush1.bf16.msra.mxu0 0
      %4666 = vmatprep.subr.bf16.mxu0 0
      %4667 = vmatpush1.bf16.msra.mxu0 0
      %4668 = vmatprep.subr.bf16.mxu0 0
      %4669 = vmatpush1.bf16.msra.mxu0 0
      %4670 = vmatprep.subr.bf16.mxu0 0
      %4671 = vmatpush1.bf16.msra.mxu0 0
      %4672 = vmatprep.subr.bf16.mxu0 0
      %4673 = vmatpush1.bf16.msra.mxu0 0
      %4674 = vmatprep.subr.bf16.mxu0 0
      %4675 = vmatpush1.bf16.msra.mxu0 0
      %4676 = vmatprep.subr.bf16.mxu0 0
      %4677 = vmatpush1.bf16.msra.mxu0 0
      %4678 = vmatprep.subr.bf16.mxu0 0
      %4679 = vmatpush1.bf16.msra.mxu0 0
      %4680 = vmatprep.subr.bf16.mxu0 0
      %4681 = vmatpush1.bf16.msra.mxu0 0
      %4682 = vmatprep.subr.bf16.mxu0 0
      %4683 = vmatpush1.bf16.msra.mxu0 0
      %4684 = vmatprep.subr.bf16.mxu0 0
      %4685 = vmatpush1.bf16.msra.mxu0 0
      %4686 = vmatprep.subr.bf16.mxu0 0
      %4687 = vmatpush1.bf16.msra.mxu0 0
      %4688 = vmatprep.subr.bf16.mxu0 0
      %4689 = vmatpush1.bf16.msra.mxu0 0
      %4690 = vmatprep.subr.bf16.mxu0 0
      %4691 = vmatpush1.bf16.msra.mxu0 0
      %4692 = vmatprep.mubr.bf16.mxu0 0
      %4693 = vmatmul.mubr.bf16.gmra.mrb[0].mxu0 %v4610
      %v4694 = vpop.f32.mrb[0].mxu0
      %v4695 = vadd.f32 0.0, %v4694
      %v4696 = vpop.f32.mrb[0].mxu0
      %v4697 = vpop.f32.mrb[0].mxu0
      %v4698 = vadd.f32 0.0, %v4697
      %v4699 = vpop.f32.mrb[0].mxu0
      %4700 = vmatprep.mubr.bf16.mxu0 0
      %4701 = vmatmul.mubr.bf16.gmra.mrb[0].mxu0 %v4613
      %v4702 = vpop.f32.mrb[0].mxu0
      %v4703 = vadd.f32 0.0, %v4702
      %v4704 = vpop.f32.mrb[0].mxu0
      %v4705 = vpop.f32.mrb[0].mxu0
      %v4706 = vadd.f32 0.0, %v4705
      %v4707 = vpop.f32.mrb[0].mxu0
      %4708 = vmatprep.mubr.bf16.mxu0 0
      %4709 = vmatmul.mubr.bf16.gmra.mrb[0].mxu0 %v4616
      %v4710 = vpop.f32.mrb[0].mxu0
      %v4711 = vadd.f32 0.0, %v4710
      %v4712 = vpop.f32.mrb[0].mxu0
      %v4713 = vpop.f32.mrb[0].mxu0
      %v4714 = vadd.f32 0.0, %v4713
      %v4715 = vpop.f32.mrb[0].mxu0
      %4716 = vmatprep.mubr.bf16.mxu0 0
      %4717 = vmatmul.mubr.bf16.gmra.mrb[0].mxu0 %v4619
      %v4718 = vpop.f32.mrb[0].mxu0
      %v4719 = vadd.f32 0.0, %v4718
      %v4720 = vpop.f32.mrb[0].mxu0
      %v4721 = vpop.f32.mrb[0].mxu0
      %v4722 = vadd.f32 0.0, %v4721
      %v4723 = vpop.f32.mrb[0].mxu0
      %4724 = vmatprep.mubr.bf16.mxu0 0
      %4725 = vmatmul.mubr.bf16.gmra.mrb[0].mxu0 %v4622
      %v4726 = vpop.f32.mrb[0].mxu0
      %v4727 = vadd.f32 0.0, %v4726
      %v4728 = vpop.f32.mrb[0].mxu0
      %v4729 = vpop.f32.mrb[0].mxu0
      %v4730 = vadd.f32 0.0, %v4729
      %v4731 = vpop.f32.mrb[0].mxu0
      %4732 = vmatprep.mubr.bf16.mxu0 0
      %4733 = vmatmul.mubr.bf16.gmra.mrb[0].mxu0 %v4625
      %v4734 = vpop.f32.mrb[0].mxu0
      %v4735 = vadd.f32 0.0, %v4734
      %v4736 = vpop.f32.mrb[0].mxu0
      %v4737 = vpop.f32.mrb[0].mxu0
      %v4738 = vadd.f32 0.0, %v4737
      %v4739 = vpop.f32.mrb[0].mxu0
      %4740 = vmatprep.mubr.bf16.mxu0 0
      %4741 = vmatmul.mubr.bf16.gmra.mrb[0].mxu0 %v4628
      %v4742 = vpop.f32.mrb[0].mxu0
      %v4743 = vadd.f32 0.0, %v4742
      %v4744 = vpop.f32.mrb[0].mxu0
      %v4745 = vpop.f32.mrb[0].mxu0
      %v4746 = vadd.f32 0.0, %v4745
      %v4747 = vpop.f32.mrb[0].mxu0
      %4748 = vmatprep.mubr.bf16.mxu0 0
      %4749 = vmatmul.mubr.bf16.gmra.mrb[0].mxu0 %v4631
      %v4750 = vpop.f32.mrb[0].mxu0
      %v4751 = vadd.f32 0.0, %v4750
      %v4752 = vpop.f32.mrb[0].mxu0
      %v4753 = vpop.f32.mrb[0].mxu0
      %v4754 = vadd.f32 0.0, %v4753
      %v4755 = vpop.f32.mrb[0].mxu0
      %4756 = vmatprep.mubr.bf16.mxu0 0
      %4757 = vmatmul.mubr.bf16.gmra.mrb[0].mxu0 %v4634
      %v4758 = vpop.f32.mrb[0].mxu0
      %v4759 = vadd.f32 0.0, %v4758
      %v4760 = vpop.f32.mrb[0].mxu0
      %v4761 = vpop.f32.mrb[0].mxu0
      %v4762 = vadd.f32 0.0, %v4761
      %v4763 = vpop.f32.mrb[0].mxu0
      %4764 = vmatprep.mubr.bf16.mxu0 0
      %4765 = vmatmul.mubr.bf16.gmra.mrb[0].mxu0 %v4637
      %v4766 = vpop.f32.mrb[0].mxu0
      %v4767 = vadd.f32 0.0, %v4766
      %v4768 = vpop.f32.mrb[0].mxu0
      %v4769 = vpop.f32.mrb[0].mxu0
      %v4770 = vadd.f32 0.0, %v4769
      %v4771 = vpop.f32.mrb[0].mxu0
      %4772 = vmatprep.mubr.bf16.mxu0 0
      %4773 = vmatmul.mubr.bf16.gmra.mrb[0].mxu0 %v4640
      %v4774 = vpop.f32.mrb[0].mxu0
      %v4775 = vadd.f32 0.0, %v4774
      %v4776 = vpop.f32.mrb[0].mxu0
      %v4777 = vpop.f32.mrb[0].mxu0
      %v4778 = vadd.f32 0.0, %v4777
      %v4779 = vpop.f32.mrb[0].mxu0
      %4780 = vmatprep.mubr.bf16.mxu0 0
      %4781 = vmatmul.mubr.bf16.gmra.mrb[0].mxu0 %v4643
      %v4782 = vpop.f32.mrb[0].mxu0
      %v4783 = vadd.f32 0.0, %v4782
      %v4784 = vpop.f32.mrb[0].mxu0
      %v4785 = vpop.f32.mrb[0].mxu0
      %v4786 = vadd.f32 0.0, %v4785
      %v4787 = vpop.f32.mrb[0].mxu0
      %4788 = vmatprep.mubr.bf16.mxu0 0
      %4789 = vmatmul.mubr.bf16.gmra.mrb[0].mxu0 %v4646
      %v4790 = vpop.f32.mrb[0].mxu0
      %v4791 = vadd.f32 0.0, %v4790
      %v4792 = vpop.f32.mrb[0].mxu0
      %v4793 = vpop.f32.mrb[0].mxu0
      %v4794 = vadd.f32 0.0, %v4793
      %v4795 = vpop.f32.mrb[0].mxu0
      %4796 = vmatprep.mubr.bf16.mxu0 0
      %4797 = vmatmul.mubr.bf16.gmra.mrb[0].mxu0 %v4649
      %v4798 = vpop.f32.mrb[0].mxu0
      %v4799 = vadd.f32 0.0, %v4798
      %v4800 = vpop.f32.mrb[0].mxu0
      %v4801 = vpop.f32.mrb[0].mxu0
      %v4802 = vadd.f32 0.0, %v4801
      %v4803 = vpop.f32.mrb[0].mxu0
      %4804 = vmatprep.mubr.bf16.mxu0 0
      %4805 = vmatmul.mubr.bf16.gmra.mrb[0].mxu0 %v4652
      %v4806 = vpop.f32.mrb[0].mxu0
      %v4807 = vadd.f32 0.0, %v4806
      %v4808 = vpop.f32.mrb[0].mxu0
      %v4809 = vpop.f32.mrb[0].mxu0
      %v4810 = vadd.f32 0.0, %v4809
      %v4811 = vpop.f32.mrb[0].mxu0
      %4812 = vmatprep.mubr.bf16.mxu0 0
      %4813 = vmatmul.mubr.bf16.gmra.mrb[0].mxu0 %v4655
      %v4814 = vpop.f32.mrb[0].mxu0
      %v4815 = vadd.f32 0.0, %v4814
      %v4816 = vpop.f32.mrb[0].mxu0
      %v4817 = vpop.f32.mrb[0].mxu0
      %v4818 = vadd.f32 0.0, %v4817
      %v4819 = vpop.f32.mrb[0].mxu0
      %4820 = vdwg.mxu0
      %v4821 = vadd.f32 %v4351, %v4695
      %v4822 = vadd.f32 %v4352, %v4698
      %v4823 = vadd.f32 %v4353, %v4703
      %v4824 = vadd.f32 %v4354, %v4706
      %v4825 = vadd.f32 %v4355, %v4711
      %v4826 = vadd.f32 %v4356, %v4714
      %v4827 = vadd.f32 %v4357, %v4719
      %v4828 = vadd.f32 %v4358, %v4722
      %v4829 = vadd.f32 %v4359, %v4727
      %v4830 = vadd.f32 %v4360, %v4730
      %v4831 = vadd.f32 %v4361, %v4735
      %v4832 = vadd.f32 %v4362, %v4738
      %v4833 = vadd.f32 %v4363, %v4743
      %v4834 = vadd.f32 %v4364, %v4746
      %v4835 = vadd.f32 %v4365, %v4751
      %v4836 = vadd.f32 %v4366, %v4754
      %v4837 = vadd.f32 %v4367, %v4759
      %v4838 = vadd.f32 %v4368, %v4762
      %v4839 = vadd.f32 %v4369, %v4767
      %v4840 = vadd.f32 %v4370, %v4770
      %v4841 = vadd.f32 %v4371, %v4775
      %v4842 = vadd.f32 %v4372, %v4778
      %v4843 = vadd.f32 %v4373, %v4783
      %v4844 = vadd.f32 %v4374, %v4786
      %v4845 = vadd.f32 %v4375, %v4791
      %v4846 = vadd.f32 %v4376, %v4794
      %v4847 = vadd.f32 %v4377, %v4799
      %v4848 = vadd.f32 %v4378, %v4802
      %v4849 = vadd.f32 %v4379, %v4807
      %v4850 = vadd.f32 %v4380, %v4810
      %v4851 = vadd.f32 %v4381, %v4815
      %v4852 = vadd.f32 %v4382, %v4818
      %v4853 = vld [vmem:[%s265] sm:$0x1]
      %v4855 = vlaneseq
      %v4856 = vshrl.u32 %v4855, 7
      %v4857 = vsub.s32 0, %v4856
      %v4858 = vrot.slane %v4853, %v4857
      %v4860 = vmul.f32 %v4821, %v4858
      %v4861 = vmul.f32 %v4822, %v4858
      %v4862 = vmul.f32 %v4823, %v4858
      %v4863 = vmul.f32 %v4824, %v4858
      %v4864 = vmul.f32 %v4825, %v4858
      %v4865 = vmul.f32 %v4826, %v4858
      %v4866 = vmul.f32 %v4827, %v4858
      %v4867 = vmul.f32 %v4828, %v4858
      %v4868 = vmul.f32 %v4829, %v4858
      %v4869 = vmul.f32 %v4830, %v4858
      %v4870 = vmul.f32 %v4831, %v4858
      %v4871 = vmul.f32 %v4832, %v4858
      %v4872 = vmul.f32 %v4833, %v4858
      %v4873 = vmul.f32 %v4834, %v4858
      %v4874 = vmul.f32 %v4835, %v4858
      %v4875 = vmul.f32 %v4836, %v4858
      %v4876 = vmul.f32 %v4837, %v4858
      %v4877 = vmul.f32 %v4838, %v4858
      %v4878 = vmul.f32 %v4839, %v4858
      %v4879 = vmul.f32 %v4840, %v4858
      %v4880 = vmul.f32 %v4841, %v4858
      %v4881 = vmul.f32 %v4842, %v4858
      %v4882 = vmul.f32 %v4843, %v4858
      %v4883 = vmul.f32 %v4844, %v4858
      %v4884 = vmul.f32 %v4845, %v4858
      %v4885 = vmul.f32 %v4846, %v4858
      %v4886 = vmul.f32 %v4847, %v4858
      %v4887 = vmul.f32 %v4848, %v4858
      %v4888 = vmul.f32 %v4849, %v4858
      %v4889 = vmul.f32 %v4850, %v4858
      %v4890 = vmul.f32 %v4851, %v4858
      %v4891 = vmul.f32 %v4852, %v4858
      %v4892 = vld [vmem:[%s268] sm:$0x1]
      %v4894 = vlaneseq
      %v4895 = vshrl.u32 %v4894, 7
      %v4896 = vsub.s32 0, %v4895
      %v4897 = vrot.slane %v4892, %v4896
      %v4899 = vadd.f32 %v4860, %v4897
      %v4900 = vadd.f32 %v4861, %v4897
      %v4901 = vadd.f32 %v4862, %v4897
      %v4902 = vadd.f32 %v4863, %v4897
      %v4903 = vadd.f32 %v4864, %v4897
      %v4904 = vadd.f32 %v4865, %v4897
      %v4905 = vadd.f32 %v4866, %v4897
      %v4906 = vadd.f32 %v4867, %v4897
      %v4907 = vadd.f32 %v4868, %v4897
      %v4908 = vadd.f32 %v4869, %v4897
      %v4909 = vadd.f32 %v4870, %v4897
      %v4910 = vadd.f32 %v4871, %v4897
      %v4911 = vadd.f32 %v4872, %v4897
      %v4912 = vadd.f32 %v4873, %v4897
      %v4913 = vadd.f32 %v4874, %v4897
      %v4914 = vadd.f32 %v4875, %v4897
      %v4915 = vadd.f32 %v4876, %v4897
      %v4916 = vadd.f32 %v4877, %v4897
      %v4917 = vadd.f32 %v4878, %v4897
      %v4918 = vadd.f32 %v4879, %v4897
      %v4919 = vadd.f32 %v4880, %v4897
      %v4920 = vadd.f32 %v4881, %v4897
      %v4921 = vadd.f32 %v4882, %v4897
      %v4922 = vadd.f32 %v4883, %v4897
      %v4923 = vadd.f32 %v4884, %v4897
      %v4924 = vadd.f32 %v4885, %v4897
      %v4925 = vadd.f32 %v4886, %v4897
      %v4926 = vadd.f32 %v4887, %v4897
      %v4927 = vadd.f32 %v4888, %v4897
      %v4928 = vadd.f32 %v4889, %v4897
      %v4929 = vadd.f32 %v4890, %v4897
      %v4930 = vadd.f32 %v4891, %v4897
      %v4931 = vmax.f32 %v4899, 0.0
      %v4932 = vmax.f32 %v4900, 0.0
      %v4933 = vmax.f32 %v4901, 0.0
      %v4934 = vmax.f32 %v4902, 0.0
      %v4935 = vmax.f32 %v4903, 0.0
      %v4936 = vmax.f32 %v4904, 0.0
      %v4937 = vmax.f32 %v4905, 0.0
      %v4938 = vmax.f32 %v4906, 0.0
      %v4939 = vmax.f32 %v4907, 0.0
      %v4940 = vmax.f32 %v4908, 0.0
      %v4941 = vmax.f32 %v4909, 0.0
      %v4942 = vmax.f32 %v4910, 0.0
      %v4943 = vmax.f32 %v4911, 0.0
      %v4944 = vmax.f32 %v4912, 0.0
      %v4945 = vmax.f32 %v4913, 0.0
      %v4946 = vmax.f32 %v4914, 0.0
      %v4947 = vmax.f32 %v4915, 0.0
      %v4948 = vmax.f32 %v4916, 0.0
      %v4949 = vmax.f32 %v4917, 0.0
      %v4950 = vmax.f32 %v4918, 0.0
      %v4951 = vmax.f32 %v4919, 0.0
      %v4952 = vmax.f32 %v4920, 0.0
      %v4953 = vmax.f32 %v4921, 0.0
      %v4954 = vmax.f32 %v4922, 0.0
      %v4955 = vmax.f32 %v4923, 0.0
      %v4956 = vmax.f32 %v4924, 0.0
      %v4957 = vmax.f32 %v4925, 0.0
      %v4958 = vmax.f32 %v4926, 0.0
      %v4959 = vmax.f32 %v4927, 0.0
      %v4960 = vmax.f32 %v4928, 0.0
      %v4961 = vmax.f32 %v4929, 0.0
      %v4962 = vmax.f32 %v4930, 0.0
      %v4963 = vmin.f32 %v4931, 6.0
      %v4964 = vmin.f32 %v4932, 6.0
      %v4965 = vmin.f32 %v4933, 6.0
      %v4966 = vmin.f32 %v4934, 6.0
      %v4967 = vmin.f32 %v4935, 6.0
      %v4968 = vmin.f32 %v4936, 6.0
      %v4969 = vmin.f32 %v4937, 6.0
      %v4970 = vmin.f32 %v4938, 6.0
      %v4971 = vmin.f32 %v4939, 6.0
      %v4972 = vmin.f32 %v4940, 6.0
      %v4973 = vmin.f32 %v4941, 6.0
      %v4974 = vmin.f32 %v4942, 6.0
      %v4975 = vmin.f32 %v4943, 6.0
      %v4976 = vmin.f32 %v4944, 6.0
      %v4977 = vmin.f32 %v4945, 6.0
      %v4978 = vmin.f32 %v4946, 6.0
      %v4979 = vmin.f32 %v4947, 6.0
      %v4980 = vmin.f32 %v4948, 6.0
      %v4981 = vmin.f32 %v4949, 6.0
      %v4982 = vmin.f32 %v4950, 6.0
      %v4983 = vmin.f32 %v4951, 6.0
      %v4984 = vmin.f32 %v4952, 6.0
      %v4985 = vmin.f32 %v4953, 6.0
      %v4986 = vmin.f32 %v4954, 6.0
      %v4987 = vmin.f32 %v4955, 6.0
      %v4988 = vmin.f32 %v4956, 6.0
      %v4989 = vmin.f32 %v4957, 6.0
      %v4990 = vmin.f32 %v4958, 6.0
      %v4991 = vmin.f32 %v4959, 6.0
      %v4992 = vmin.f32 %v4960, 6.0
      %v4993 = vmin.f32 %v4961, 6.0
      %v4994 = vmin.f32 %v4962, 6.0
      %4995 = vst [vmem:[%s281] sm:$0xff] %v4963
      %4996 = vst [vmem:[%s281 + $0x8] sm:$0xff] %v4964
      %4997 = vst [vmem:[%s281 + $0x10] sm:$0xff] %v4965
      %4998 = vst [vmem:[%s281 + $0x18] sm:$0xff] %v4966
      %4999 = vst [vmem:[%s281 + $0x20] sm:$0xff] %v4967
      %5000 = vst [vmem:[%s281 + $0x28] sm:$0xff] %v4968
      %5001 = vst [vmem:[%s281 + $0x30] sm:$0xff] %v4969
      %5002 = vst [vmem:[%s281 + $0x38] sm:$0xff] %v4970
      %5003 = vst [vmem:[%s281 + $0x40] sm:$0xff] %v4971
      %5004 = vst [vmem:[%s281 + $0x48] sm:$0xff] %v4972
      %5005 = vst [vmem:[%s281 + $0x50] sm:$0xff] %v4973
      %5006 = vst [vmem:[%s281 + $0x58] sm:$0xff] %v4974
      %5007 = vst [vmem:[%s281 + $0x60] sm:$0xff] %v4975
      %5008 = vst [vmem:[%s281 + $0x68] sm:$0xff] %v4976
      %5009 = vst [vmem:[%s281 + $0x70] sm:$0xff] %v4977
      %5010 = vst [vmem:[%s281 + $0x78] sm:$0xff] %v4978
      %5011 = vst [vmem:[%s281 + $0x80] sm:$0xff] %v4979
      %5012 = vst [vmem:[%s281 + $0x88] sm:$0xff] %v4980
      %5013 = vst [vmem:[%s281 + $0x90] sm:$0xff] %v4981
      %5014 = vst [vmem:[%s281 + $0x98] sm:$0xff] %v4982
      %5015 = vst [vmem:[%s281 + $0xa0] sm:$0xff] %v4983
      %5016 = vst [vmem:[%s281 + $0xa8] sm:$0xff] %v4984
      %5017 = vst [vmem:[%s281 + $0xb0] sm:$0xff] %v4985
      %5018 = vst [vmem:[%s281 + $0xb8] sm:$0xff] %v4986
      %5019 = vst [vmem:[%s281 + $0xc0] sm:$0xff] %v4987
      %5020 = vst [vmem:[%s281 + $0xc8] sm:$0xff] %v4988
      %5021 = vst [vmem:[%s281 + $0xd0] sm:$0xff] %v4989
      %5022 = vst [vmem:[%s281 + $0xd8] sm:$0xff] %v4990
      %5023 = vst [vmem:[%s281 + $0xe0] sm:$0xff] %v4991
      %5024 = vst [vmem:[%s281 + $0xe8] sm:$0xff] %v4992
      %5025 = vst [vmem:[%s281 + $0xf0] sm:$0xff] %v4993
      %5026 = vst [vmem:[%s281 + $0xf8] sm:$0xff] %v4994
      %s5027 = smul.u32 16, %s22
      %p5028 = scmp.lt.s32.totalorder %s20, 1
      %s5029 = scalar_select %p5028, %s20, 1
      %p5030 = scmp.lt.s32.totalorder %s5027, 15
      %s5031 = scalar_select %p5030, %s5027, 15
      %p5032 = scmp.lt.s32.totalorder %s21, 0
      %s5033 = scalar_select %p5032, %s21, 0
      %s5034 = smul.addr %s5031, 2
      %s5035 = sadd.s32 %s5033, %s5034
      %s5036 = smul.addr %s5029, 32
      %s5037 = sadd.s32 %s5035, %s5036
      %s5038 = smul.addr %s5037, 8
      %s5039 = scalar_lea.vmem %s4, %s5038
      // Predicated region
      $region37: #{conv2d_norm_activation.1} parent=35 // pred_check
        %p5040 = pneg %p160
      $region38: #{conv2d_norm_activation.1} parent=35 // pred_check_branch
        %5042 = sbr.rel (%p5040) target = $region40
      $region39: #{conv2d_norm_activation.1} parent=35 // pred_region
        %s5043 = smul.u32 16, %s22
      $region40: #{conv2d_norm_activation.1} parent=35 // pred_fallthru
        _
    $region36: #{conv2d_norm_activation.1} parent=5 // pred_fallthru
      _
    %p5044 = scmp.le.s32.totalorder 2, %s10
    // Predicated region
    $region41: #{conv2d_norm_activation.1} parent=5 // pred_check
      %p5045 = pneg %p5044
    $region42: #{conv2d_norm_activation.1} parent=5 // pred_check_branch
      %5047 = sbr.rel (%p5045) target = $region44
    $region43: #{conv2d_norm_activation.1} parent=5 // pred_region
      %s5048 = ssub.s32 %s10, 2
      // Predicated region
      $region45: #{conv2d_norm_activation.1} parent=43 // pred_check
        %p5049 = pneg %p166
      $region46: #{conv2d_norm_activation.1} parent=43 // pred_check_branch
        %5051 = sbr.rel (%p5049) target = $region48
      $region47: #{conv2d_norm_activation.1} parent=43 // pred_region
        %s5052 = smul.u32 16, %s25
        %p5053 = scmp.lt.s32.totalorder %s23, 1
        %s5054 = scalar_select %p5053, %s23, 1
        %p5055 = scmp.lt.s32.totalorder %s5052, 15
        %s5056 = scalar_select %p5055, %s5052, 15
        %p5057 = scmp.lt.s32.totalorder %s24, 0
        %s5058 = scalar_select %p5057, %s24, 0
        %s5059 = smul.addr %s5056, 2
        %s5060 = sadd.s32 %s5058, %s5059
        %s5061 = smul.addr %s5054, 32
        %s5062 = sadd.s32 %s5060, %s5061
        %s5063 = smul.addr %s5062, 8
        %s5064 = scalar_lea.vmem %s4, %s5063
      $region48: #{conv2d_norm_activation.1} parent=43 // pred_fallthru
        _
    $region44: #{conv2d_norm_activation.1} parent=5 // pred_fallthru
      _
  $region6: #{conv2d_norm_activation.1} parent=0 // loop_footer
    %s14 = sadd.s32 1, %s10
  $region7: #{conv2d_norm_activation.1} parent=0 // loop_footer_branch
    %9 = sbr.rel target = $region3
  $region8: #{conv2d_norm_activation.1} parent=0 // loop_exit
    _

</llo_original>
